<compile_context>
chip_gen: v5e
topology: v5e:2x2
jax: 0.10.0
libtpu: 0.0.40
codegen_flags: <defaults>
</compile_context>

<pallas_src>
import math

import jax
import jax.numpy as jnp
from jax.experimental import pallas as pl
from jax.experimental.pallas import tpu as pltpu

LANE = 128
NEG_INF = -1e30                    # masks padded vocab lanes in the log_softmax
VMEM_LIMIT = 32 * 1024 * 1024      # scoped VMEM request (>= default on v5e, == default v6e/v7x)


def _round_up(x, m):
    return ((x + m - 1) // m) * m


def _pick_tile(total, prefer=(2048, 1024, 512, 256, 128)):
    for t in prefer:
        if t <= total and total % t == 0:
            return t
    return total


# ---------------------------------------------------------------------------
# Phase 1: serial GRU recurrence.  One grid step = CHUNK unrolled GRU steps.
# Critical path per step: a single (1, Hp) x (Hp, 3Hp) f32 matmul + gate math.
# ---------------------------------------------------------------------------
def _make_gru_kernel(chunk, Hp, t_real, t_pad):
    mask_tail = t_pad != t_real      # emit the tail guard only when padding exists

    def kernel(g_ref,        # (chunk, 3Hp) f32: G[tok[t]] rows (input proj, biases folded)
               h0_ref,       # (1, Hp)      f32: initial hidden          (resident)
               w_h_ref,      # (Hp, 3Hp)    f32: [W_hr | W_hz | W_hn]    (resident)
               b_hn_ref,     # (1, Hp)      f32: n-gate hidden bias      (resident)
               h_seq_ref,    # out (chunk, Hp) f32: h_t for every step of the chunk
               h_last_ref):  # out (1, Hp)  f32: running / final hidden  (resident)
        c = pl.program_id(0)

        @pl.when(c == 0)
        def _():
            h_last_ref[...] = h0_ref[...]

        w_h = w_h_ref[...]
        b_hn = b_hn_ref[...]

        def step(i, h):
            gi = g_ref[pl.ds(i, 1), :]                                  # (1, 3Hp)
            gh = jnp.dot(h, w_h, preferred_element_type=jnp.float32)    # (1, 3Hp)
            r = jax.nn.sigmoid(gi[:, 0:Hp] + gh[:, 0:Hp])               # b_ir+b_hr in G
            z = jax.nn.sigmoid(gi[:, Hp:2 * Hp] + gh[:, Hp:2 * Hp])     # b_iz+b_hz in G
            n = jnp.tanh(gi[:, 2 * Hp:] + r * (gh[:, 2 * Hp:] + b_hn))
            h_new = (1.0 - z) * n + z * h                               # all-f32 recurrence
            if mask_tail:                                               # padded steps keep h
                h_new = jnp.where(c * chunk + i < t_real, h_new, h)
            h_seq_ref[pl.ds(i, 1), :] = h_new
            return h_new

        h_fin = jax.lax.fori_loop(0, chunk, step, h_last_ref[...], unroll=True)
        h_last_ref[...] = h_fin

    return kernel


def _phase1_recurrence(g_seq, h0, w_h, b_hn, t_real, t_pad, Hp, chunk, single_buffer):
    def resident(shape):
        imap = lambda c: tuple(0 for _ in shape)
        if single_buffer:
            # Constant-index weights: double-buffering them wastes VMEM for zero benefit.
            return pl.BlockSpec(shape, imap, pipeline_mode=pl.Buffered(1))
        return pl.BlockSpec(shape, imap)

    grid_spec = pltpu.PrefetchScalarGridSpec(
        num_scalar_prefetch=0,
        grid=(t_pad // chunk,),
        in_specs=[
            pl.BlockSpec((chunk, 3 * Hp), lambda c: (c, 0)),     # streamed per chunk
            resident((1, Hp)),                                   # h0
            resident((Hp, 3 * Hp)),                              # W_h fused
            resident((1, Hp)),                                   # b_hn
        ],
        out_specs=(
            pl.BlockSpec((chunk, Hp), lambda c: (c, 0)),         # h_t per step
            pl.BlockSpec((1, Hp), lambda c: (0, 0)),             # resident hidden carry
        ),
    )
    return pl.pallas_call(
        _make_gru_kernel(chunk, Hp, t_real, t_pad),
        out_shape=(jax.ShapeDtypeStruct((t_pad, Hp), jnp.float32),
                   jax.ShapeDtypeStruct((1, Hp), jnp.float32)),
        grid_spec=grid_spec,
        compiler_params=pltpu.CompilerParams(
            dimension_semantics=("arbitrary",),                  # sequential recurrence
            vmem_limit_bytes=VMEM_LIMIT),
    )(g_seq, h0, w_h, b_hn)


# ---------------------------------------------------------------------------
# Phase 2: batched vocab projection + log_softmax over all T steps at once.
# W_out is streamed in (Hp, tv) vocab tiles (never fully resident -> v7x-safe);
# an online logsumexp over the vocab tiles feeds a tiny normalize pass.
# ---------------------------------------------------------------------------
def _logits_kernel(h_ref, w_ref, b_ref, logits_ref, lse_ref, m_acc, l_acc):
    v = pl.program_id(1)

    @pl.when(v == 0)
    def _():
        m_acc[...] = jnp.full_like(m_acc, -jnp.inf)
        l_acc[...] = jnp.zeros_like(l_acc)

    logits = jnp.dot(h_ref[...].astype(w_ref.dtype), w_ref[...],
                     preferred_element_type=jnp.float32) + b_ref[...]
    logits_ref[...] = logits

    m_new = jnp.maximum(m_acc[...], jnp.max(logits, axis=-1, keepdims=True))
    l_acc[...] = (l_acc[...] * jnp.exp(m_acc[...] - m_new)
                  + jnp.sum(jnp.exp(logits - m_new), axis=-1, keepdims=True))
    m_acc[...] = m_new

    @pl.when(v == pl.num_programs(1) - 1)
    def _():
        lse_ref[...] = m_acc[...] + jnp.log(l_acc[...])


def _normalize_kernel(logits_ref, lse_ref, logp_ref):
    logp_ref[...] = logits_ref[...] - lse_ref[...]


def _phase2_projection(h_seq, w_out, b_out, t_pad, Hp, Vp, tm, tv):
    nt, nv = t_pad // tm, Vp // tv

    logits, lse = pl.pallas_call(
        _logits_kernel,
        out_shape=(jax.ShapeDtypeStruct((t_pad, Vp), jnp.float32),
                   jax.ShapeDtypeStruct((t_pad, 1), jnp.float32)),
        grid_spec=pltpu.PrefetchScalarGridSpec(
            num_scalar_prefetch=0,
            grid=(nt, nv),                                       # vocab tiles innermost
            in_specs=[
                pl.BlockSpec((tm, Hp), lambda t, v: (t, 0)),     # hidden rows (batched M)
                pl.BlockSpec((Hp, tv), lambda t, v: (0, v)),     # W_out streamed per tile
                pl.BlockSpec((1, tv), lambda t, v: (0, v)),      # b_out tile (pad = -1e30)
            ],
            out_specs=(
                pl.BlockSpec((tm, tv), lambda t, v: (t, v)),     # raw logits
                pl.BlockSpec((tm, 1), lambda t, v: (t, 0)),      # per-row logsumexp
            ),
            scratch_shapes=[pltpu.VMEM((tm, 1), jnp.float32),    # running max
                            pltpu.VMEM((tm, 1), jnp.float32)]),  # running sum-exp
        compiler_params=pltpu.CompilerParams(
            dimension_semantics=("parallel", "arbitrary"),       # T-blocks shard on v7x
            vmem_limit_bytes=VMEM_LIMIT),
    )(h_seq, w_out, b_out)

    return pl.pallas_call(
        _normalize_kernel,
        out_shape=jax.ShapeDtypeStruct((t_pad, Vp), jnp.float32),
        grid_spec=pltpu.PrefetchScalarGridSpec(
            num_scalar_prefetch=0,
            grid=(nt, nv),
            in_specs=[
                pl.BlockSpec((tm, tv), lambda t, v: (t, v)),
                pl.BlockSpec((tm, 1), lambda t, v: (t, 0)),
            ],
            out_specs=pl.BlockSpec((tm, tv), lambda t, v: (t, v))),
        compiler_params=pltpu.CompilerParams(
            dimension_semantics=("parallel", "parallel"),
            vmem_limit_bytes=VMEM_LIMIT),
    )(logits, lse)


# ---------------------------------------------------------------------------
# Parameter packing / wrapper
# ---------------------------------------------------------------------------
def pack_params(p, weight_dtype=jnp.bfloat16):
    """Fuse + lane-pad the logical parameters into the kernel layout."""
    H = p["w_ir_t"].shape[0]
    V = p["w_out_t"].shape[1]
    Hp = _round_up(H, LANE)
    Vp = _round_up(V, LANE)

    def fuse_w(ws):                                   # 3 x (H, H) -> (Hp, 3Hp) f32
        w = jnp.zeros((Hp, 3 * Hp), jnp.float32)
        for g, wg in enumerate(ws):
            w = w.at[:H, g * Hp:g * Hp + H].set(wg)
        return w

    def fuse_b(bs):                                   # 3 x (1, H) -> (1, 3Hp) f32
        b = jnp.zeros((1, 3 * Hp), jnp.float32)
        for g, bg in enumerate(bs):
            b = b.at[:, g * Hp:g * Hp + H].set(bg)
        return b

    emb = jnp.zeros((Vp, Hp), jnp.float32).at[:V, :H].set(p["embedding"])
    w_i = fuse_w([p["w_ir_t"], p["w_iz_t"], p["w_in_t"]])
    # r/z hidden biases are pre-summed into the table; only b_hn must stay separate
    # because of the r * (gh_n + b_hn) term.
    b_tab = fuse_b([p["b_ir"] + p["b_hr"], p["b_iz"] + p["b_hz"], p["b_in"]])
    # Precomputed input projection table: relu(emb) @ [W_ir|W_iz|W_in] + biases.
    g_table = jnp.maximum(emb, 0.0) @ w_i + b_tab                       # (Vp, 3Hp) f32

    # Recurrence weights stay f32 so rounding does not compound over long decodes.
    w_h = fuse_w([p["w_hr_t"], p["w_hz_t"], p["w_hn_t"]])
    b_hn = jnp.zeros((1, Hp), jnp.float32).at[:, :H].set(p["b_hn"])

    w_out = jnp.zeros((Hp, Vp), jnp.float32).at[:H, :V].set(p["w_out_t"]).astype(weight_dtype)
    b_out = jnp.full((1, Vp), NEG_INF, jnp.float32).at[:, :V].set(p["b_out"][0])

    # Padded hidden lanes stay exactly 0 through the recurrence ONLY because the padded
    # lanes of g_table / w_h / b_hn are exactly 0 (never reuse NEG_INF padding here).
    for g in range(3):
        pad = slice(g * Hp + H, (g + 1) * Hp)
        assert not bool(jnp.any(g_table[:, pad] != 0.0))
        assert not bool(jnp.any(w_h[:, pad] != 0.0))
    assert not bool(jnp.any(w_h[H:, :] != 0.0))
    assert not bool(jnp.any(b_hn[:, H:] != 0.0))

    return dict(H=H, V=V, Hp=Hp, Vp=Vp, g_table=g_table, w_h=w_h, b_hn=b_hn,
                w_out=w_out, b_out=b_out)


def decoder_rnn_forward(tokens, hidden, packed, *, chunk=8, tm=8, tv=None):
    """tokens: int32 (T,); hidden: f32 (1, 1, H).

    Runs T decoder steps (T=1 reproduces the PyTorch module's forward exactly).
    Returns (log_probs (T, V), new_hidden (1, 1, H)).
    chunk: GRU steps per grid step (8-32 sensible).  tm: row-block of the batched
    output projection (raise to 256 on v6e/v7x for real workloads).
    """
    H, V, Hp, Vp = packed["H"], packed["V"], packed["Hp"], packed["Vp"]
    T = int(tokens.shape[0])
    t_pad = _round_up(T, math.lcm(chunk, tm))
    if tv is None:
        tv = _pick_tile(Vp)

    tok_pad = jnp.zeros((t_pad,), jnp.int32).at[:T].set(tokens.astype(jnp.int32))
    # Pre-gather per-step fused input projections G[tok]: (t_pad, 3Hp).
    g_seq = jnp.take(packed["g_table"], tok_pad, axis=0)
    h0 = jnp.zeros((1, Hp), jnp.float32).at[:, :H].set(hidden.reshape(1, H))

    try:
        h_seq, h_last = _phase1_recurrence(
            g_seq, h0, packed["w_h"], packed["b_hn"], T, t_pad, Hp, chunk,
            single_buffer=True)
    except Exception:
        # pl.Buffered(1) not supported by this Pallas build -> default double-buffering.
        h_seq, h_last = _phase1_recurrence(
            g_seq, h0, packed["w_h"], packed["b_hn"], T, t_pad, Hp, chunk,
            single_buffer=False)

    logp_pad = _phase2_projection(h_seq, packed["w_out"], packed["b_out"],
                                  t_pad, Hp, Vp, tm, tv)
    return logp_pad[:T, :V], h_last[:, :H].reshape(1, 1, H)


# ---------------------------------------------------------------------------
# Parameter init + pure-JAX reference
# ---------------------------------------------------------------------------
def init_params(key, hidden_size, output_size):
    H, V = hidden_size, output_size
    ks = jax.random.split(key, 16)
    s = 0.1

    def mat(k, shape):
        return (s * jax.random.normal(k, shape)).astype(jnp.float32)

    return {
        "embedding": mat(ks[0], (V, H)),
        # GRU input-to-hidden weights, stored transposed (in, out).
        "w_ir_t": mat(ks[1], (H, H)), "w_iz_t": mat(ks[2], (H, H)), "w_in_t": mat(ks[3], (H, H)),
        # GRU hidden-to-hidden weights, transposed.
        "w_hr_t": mat(ks[4], (H, H)), "w_hz_t": mat(ks[5], (H, H)), "w_hn_t": mat(ks[6], (H, H)),
        "b_ir": mat(ks[7], (1, H)), "b_iz": mat(ks[8], (1, H)), "b_in": mat(ks[9], (1, H)),
        "b_hr": mat(ks[10], (1, H)), "b_hz": mat(ks[11], (1, H)), "b_hn": mat(ks[12], (1, H)),
        # Output Linear, transposed to (H, V).
        "w_out_t": mat(ks[13], (H, V)), "b_out": mat(ks[14], (1, V)),
    }


def reference_forward(token, hidden, p):
    """Pure-JAX float32 reference mirroring one PyTorch DecoderRNN.forward call."""
    H = p["w_hr_t"].shape[0]
    x = jnp.maximum(p["embedding"][token].reshape(1, H), 0.0)
    h = hidden.reshape(1, H)
    r = jax.nn.sigmoid(x @ p["w_ir_t"] + p["b_ir"] + h @ p["w_hr_t"] + p["b_hr"])
    z = jax.nn.sigmoid(x @ p["w_iz_t"] + p["b_iz"] + h @ p["w_hz_t"] + p["b_hz"])
    n = jnp.tanh(x @ p["w_in_t"] + p["b_in"] + r * (h @ p["w_hn_t"] + p["b_hn"]))
    h_new = (1.0 - z) * n + z * h
    logits = h_new @ p["w_out_t"] + p["b_out"]
    return jax.nn.log_softmax(logits, axis=1), h_new.reshape(1, 1, H)


if __name__ == "__main__":
    hidden_size = 32
    output_size = 64
    T = 16                     # decode steps handled by one forward call (2 chunks of 8)

    key = jax.random.PRNGKey(0)
    k_param, k_hidden, k_tok = jax.random.split(key, 3)

    params = init_params(k_param, hidden_size, output_size)
    packed = pack_params(params, weight_dtype=jnp.bfloat16)

    tokens = jax.random.randint(k_tok, (T,), 0, output_size, dtype=jnp.int32)
    hidden = (0.1 * jax.random.normal(k_hidden, (1, 1, hidden_size))).astype(jnp.float32)

    logp, h_new = decoder_rnn_forward(tokens, hidden, packed, chunk=8, tm=8)
    jax.block_until_ready((logp, h_new))

    # Reference: step the f32 PyTorch-equivalent forward T times.
    h_ref = hidden
    logp_rows = []
    for t in range(T):
        lp, h_ref = reference_forward(tokens[t], h_ref, params)
        logp_rows.append(lp)
    logp_ref = jnp.concatenate(logp_rows, axis=0)

    assert logp.shape == (T, output_size) and h_new.shape == (1, 1, hidden_size)
    # Output projection uses bf16 weights (f32 accumulation); recurrence is pure f32.
    assert jnp.allclose(logp, logp_ref, atol=2e-2), "log_softmax output mismatch"
    assert jnp.allclose(h_new, h_ref, atol=2e-2), "hidden state mismatch"

    print("KERNEL_OK")
</pallas_src>

<mosaic_0001>
module attributes {stable_mosaic.version = 11 : i64} {
  func.func @kernel(%arg0: i32, %arg1: memref<8x384xf32, #tpu.memory_space<vmem>>, %arg2: memref<1x128xf32, #tpu.memory_space<vmem>>, %arg3: memref<128x384xf32, #tpu.memory_space<vmem>>, %arg4: memref<1x128xf32, #tpu.memory_space<vmem>>, %arg5: memref<8x128xf32, #tpu.memory_space<vmem>>, %arg6: memref<1x128xf32, #tpu.memory_space<vmem>>) attributes {dimension_semantics = [#tpu.dimension_semantics<arbitrary>], iteration_bounds = array<i64: 2>, scalar_prefetch = 0 : i64, scratch_operands = 0 : i64, tpu.core_type = #tpu.core_type<tc>, window_params = [{transform_indices = @transform_0, window_bounds = array<i64: 8, 384>}, {pipeline_mode = #tpu.pipeline_mode<synchronous>, transform_indices = @transform_1, window_bounds = array<i64: 1, 128>}, {pipeline_mode = #tpu.pipeline_mode<synchronous>, transform_indices = @transform_2, window_bounds = array<i64: 128, 384>}, {pipeline_mode = #tpu.pipeline_mode<synchronous>, transform_indices = @transform_3, window_bounds = array<i64: 1, 128>}, {transform_indices = @transform_4, window_bounds = array<i64: 8, 128>}, {pipeline_mode = #tpu.pipeline_mode<synchronous>, transform_indices = @transform_5, window_bounds = array<i64: 1, 128>}]} {
    %c0_i32 = arith.constant 0 : i32
    %0 = arith.cmpi eq, %arg0, %c0_i32 : i32
    %1 = arith.extui %0 : i1 to i32
    %c0_i32_0 = arith.constant 0 : i32
    %2 = arith.cmpi ne, %1, %c0_i32_0 : i32
    scf.if %2 {
      %c0_56 = arith.constant 0 : index
      %c0_57 = arith.constant 0 : index
      %263 = vector.load %arg2[%c0_56, %c0_57] : memref<1x128xf32, #tpu.memory_space<vmem>>, vector<1x128xf32>
      %c0_58 = arith.constant 0 : index
      %c0_59 = arith.constant 0 : index
      %264 = vector.load %arg6[%c0_58, %c0_59] : memref<1x128xf32, #tpu.memory_space<vmem>>, vector<1x128xf32>
      tpu.vector_store %arg6[%c0_58, %c0_59], %263 {strides = array<i32>} : memref<1x128xf32, #tpu.memory_space<vmem>>, vector<1x128xf32>,
    } else {
    }
    %c0 = arith.constant 0 : index
    %c0_1 = arith.constant 0 : index
    %3 = vector.load %arg3[%c0, %c0_1] : memref<128x384xf32, #tpu.memory_space<vmem>>, vector<128x384xf32>
    %c0_2 = arith.constant 0 : index
    %c0_3 = arith.constant 0 : index
    %4 = vector.load %arg4[%c0_2, %c0_3] : memref<1x128xf32, #tpu.memory_space<vmem>>, vector<1x128xf32>
    %c0_4 = arith.constant 0 : index
    %c0_5 = arith.constant 0 : index
    %5 = vector.load %arg6[%c0_4, %c0_5] : memref<1x128xf32, #tpu.memory_space<vmem>>, vector<1x128xf32>
    %c0_i32_6 = arith.constant 0 : i32
    %6 = arith.index_cast %c0_i32_6 : i32 to index
    %c0_7 = arith.constant 0 : index
    %7 = vector.load %arg1[%6, %c0_7] : memref<8x384xf32, #tpu.memory_space<vmem>>, vector<1x384xf32>
    %cst = arith.constant dense<0.000000e+00> : vector<1x384xf32>
    %8 = tpu.matmul %5, %3, %cst {dimension_numbers = #tpu.dot_dimension_numbers<[1], [0], [0], [1], [0, 0, 1, 1], [], []>} : vector<1x128xf32>, vector<128x384xf32>, vector<1x384xf32> -> vector<1x384xf32>
    %9 = vector.extract_strided_slice %7 {offsets = [0, 0], sizes = [1, 128], strides = [1, 1]} : vector<1x384xf32> to vector<1x128xf32>
    %10 = vector.extract_strided_slice %8 {offsets = [0, 0], sizes = [1, 128], strides = [1, 1]} : vector<1x384xf32> to vector<1x128xf32>
    %11 = arith.addf %9, %10 : vector<1x128xf32>
    %12 = arith.negf %11 : vector<1x128xf32>
    %13 = math.exp %12 : vector<1x128xf32>
    %cst_8 = arith.constant 1.000000e+00 : f32
    %14 = vector.broadcast %cst_8 : f32 to vector<1x128xf32>
    %15 = arith.addf %14, %13 : vector<1x128xf32>
    %16 = arith.divf %14, %15 : vector<1x128xf32>
    %17 = vector.extract_strided_slice %7 {offsets = [0, 128], sizes = [1, 128], strides = [1, 1]} : vector<1x384xf32> to vector<1x128xf32>
    %18 = vector.extract_strided_slice %8 {offsets = [0, 128], sizes = [1, 128], strides = [1, 1]} : vector<1x384xf32> to vector<1x128xf32>
    %19 = arith.addf %17, %18 : vector<1x128xf32>
    %20 = arith.negf %19 : vector<1x128xf32>
    %21 = math.exp %20 : vector<1x128xf32>
    %cst_9 = arith.constant 1.000000e+00 : f32
    %22 = vector.broadcast %cst_9 : f32 to vector<1x128xf32>
    %23 = arith.addf %22, %21 : vector<1x128xf32>
    %24 = arith.divf %22, %23 : vector<1x128xf32>
    %25 = vector.extract_strided_slice %7 {offsets = [0, 256], sizes = [1, 128], strides = [1, 1]} : vector<1x384xf32> to vector<1x128xf32>
    %26 = vector.extract_strided_slice %8 {offsets = [0, 256], sizes = [1, 128], strides = [1, 1]} : vector<1x384xf32> to vector<1x128xf32>
    %27 = arith.addf %26, %4 : vector<1x128xf32>
    %28 = arith.mulf %16, %27 : vector<1x128xf32>
    %29 = arith.addf %25, %28 : vector<1x128xf32>
    %30 = math.tanh %29 : vector<1x128xf32>
    %cst_10 = arith.constant 1.000000e+00 : f32
    %31 = vector.broadcast %cst_10 : f32 to vector<1x128xf32>
    %32 = arith.subf %31, %24 : vector<1x128xf32>
    %33 = arith.mulf %32, %30 : vector<1x128xf32>
    %34 = arith.mulf %24, %5 : vector<1x128xf32>
    %35 = arith.addf %33, %34 : vector<1x128xf32>
    %36 = arith.index_cast %c0_i32_6 : i32 to index
    %c0_11 = arith.constant 0 : index
    %37 = vector.load %arg5[%36, %c0_11] : memref<8x128xf32, #tpu.memory_space<vmem>>, vector<1x128xf32>
    tpu.vector_store %arg5[%36, %c0_11], %35 {strides = array<i32>} : memref<8x128xf32, #tpu.memory_space<vmem>>, vector<1x128xf32>,
    %c1_i32 = arith.constant 1 : i32
    %38 = arith.index_cast %c1_i32 : i32 to index
    %c0_12 = arith.constant 0 : index
    %39 = vector.load %arg1[%38, %c0_12] : memref<8x384xf32, #tpu.memory_space<vmem>>, vector<1x384xf32>
    %cst_13 = arith.constant dense<0.000000e+00> : vector<1x384xf32>
    %40 = tpu.matmul %35, %3, %cst_13 {dimension_numbers = #tpu.dot_dimension_numbers<[1], [0], [0], [1], [0, 0, 1, 1], [], []>} : vector<1x128xf32>, vector<128x384xf32>, vector<1x384xf32> -> vector<1x384xf32>
    %41 = vector.extract_strided_slice %39 {offsets = [0, 0], sizes = [1, 128], strides = [1, 1]} : vector<1x384xf32> to vector<1x128xf32>
    %42 = vector.extract_strided_slice %40 {offsets = [0, 0], sizes = [1, 128], strides = [1, 1]} : vector<1x384xf32> to vector<1x128xf32>
    %43 = arith.addf %41, %42 : vector<1x128xf32>
    %44 = arith.negf %43 : vector<1x128xf32>
    %45 = math.exp %44 : vector<1x128xf32>
    %cst_14 = arith.constant 1.000000e+00 : f32
    %46 = vector.broadcast %cst_14 : f32 to vector<1x128xf32>
    %47 = arith.addf %46, %45 : vector<1x128xf32>
    %48 = arith.divf %46, %47 : vector<1x128xf32>
    %49 = vector.extract_strided_slice %39 {offsets = [0, 128], sizes = [1, 128], strides = [1, 1]} : vector<1x384xf32> to vector<1x128xf32>
    %50 = vector.extract_strided_slice %40 {offsets = [0, 128], sizes = [1, 128], strides = [1, 1]} : vector<1x384xf32> to vector<1x128xf32>
    %51 = arith.addf %49, %50 : vector<1x128xf32>
    %52 = arith.negf %51 : vector<1x128xf32>
    %53 = math.exp %52 : vector<1x128xf32>
    %cst_15 = arith.constant 1.000000e+00 : f32
    %54 = vector.broadcast %cst_15 : f32 to vector<1x128xf32>
    %55 = arith.addf %54, %53 : vector<1x128xf32>
    %56 = arith.divf %54, %55 : vector<1x128xf32>
    %57 = vector.extract_strided_slice %39 {offsets = [0, 256], sizes = [1, 128], strides = [1, 1]} : vector<1x384xf32> to vector<1x128xf32>
    %58 = vector.extract_strided_slice %40 {offsets = [0, 256], sizes = [1, 128], strides = [1, 1]} : vector<1x384xf32> to vector<1x128xf32>
    %59 = arith.addf %58, %4 : vector<1x128xf32>
    %60 = arith.mulf %48, %59 : vector<1x128xf32>
    %61 = arith.addf %57, %60 : vector<1x128xf32>
    %62 = math.tanh %61 : vector<1x128xf32>
    %cst_16 = arith.constant 1.000000e+00 : f32
    %63 = vector.broadcast %cst_16 : f32 to vector<1x128xf32>
    %64 = arith.subf %63, %56 : vector<1x128xf32>
    %65 = arith.mulf %64, %62 : vector<1x128xf32>
    %66 = arith.mulf %56, %35 : vector<1x128xf32>
    %67 = arith.addf %65, %66 : vector<1x128xf32>
    %68 = arith.index_cast %c1_i32 : i32 to index
    %c0_17 = arith.constant 0 : index
    %69 = vector.load %arg5[%68, %c0_17] : memref<8x128xf32, #tpu.memory_space<vmem>>, vector<1x128xf32>
    tpu.vector_store %arg5[%68, %c0_17], %67 {strides = array<i32>} : memref<8x128xf32, #tpu.memory_space<vmem>>, vector<1x128xf32>,
    %c2_i32 = arith.constant 2 : i32
    %70 = arith.index_cast %c2_i32 : i32 to index
    %c0_18 = arith.constant 0 : index
    %71 = vector.load %arg1[%70, %c0_18] : memref<8x384xf32, #tpu.memory_space<vmem>>, vector<1x384xf32>
    %cst_19 = arith.constant dense<0.000000e+00> : vector<1x384xf32>
    %72 = tpu.matmul %67, %3, %cst_19 {dimension_numbers = #tpu.dot_dimension_numbers<[1], [0], [0], [1], [0, 0, 1, 1], [], []>} : vector<1x128xf32>, vector<128x384xf32>, vector<1x384xf32> -> vector<1x384xf32>
    %73 = vector.extract_strided_slice %71 {offsets = [0, 0], sizes = [1, 128], strides = [1, 1]} : vector<1x384xf32> to vector<1x128xf32>
    %74 = vector.extract_strided_slice %72 {offsets = [0, 0], sizes = [1, 128], strides = [1, 1]} : vector<1x384xf32> to vector<1x128xf32>
    %75 = arith.addf %73, %74 : vector<1x128xf32>
    %76 = arith.negf %75 : vector<1x128xf32>
    %77 = math.exp %76 : vector<1x128xf32>
    %cst_20 = arith.constant 1.000000e+00 : f32
    %78 = vector.broadcast %cst_20 : f32 to vector<1x128xf32>
    %79 = arith.addf %78, %77 : vector<1x128xf32>
    %80 = arith.divf %78, %79 : vector<1x128xf32>
    %81 = vector.extract_strided_slice %71 {offsets = [0, 128], sizes = [1, 128], strides = [1, 1]} : vector<1x384xf32> to vector<1x128xf32>
    %82 = vector.extract_strided_slice %72 {offsets = [0, 128], sizes = [1, 128], strides = [1, 1]} : vector<1x384xf32> to vector<1x128xf32>
    %83 = arith.addf %81, %82 : vector<1x128xf32>
    %84 = arith.negf %83 : vector<1x128xf32>
    %85 = math.exp %84 : vector<1x128xf32>
    %cst_21 = arith.constant 1.000000e+00 : f32
    %86 = vector.broadcast %cst_21 : f32 to vector<1x128xf32>
    %87 = arith.addf %86, %85 : vector<1x128xf32>
    %88 = arith.divf %86, %87 : vector<1x128xf32>
    %89 = vector.extract_strided_slice %71 {offsets = [0, 256], sizes = [1, 128], strides = [1, 1]} : vector<1x384xf32> to vector<1x128xf32>
    %90 = vector.extract_strided_slice %72 {offsets = [0, 256], sizes = [1, 128], strides = [1, 1]} : vector<1x384xf32> to vector<1x128xf32>
    %91 = arith.addf %90, %4 : vector<1x128xf32>
    %92 = arith.mulf %80, %91 : vector<1x128xf32>
    %93 = arith.addf %89, %92 : vector<1x128xf32>
    %94 = math.tanh %93 : vector<1x128xf32>
    %cst_22 = arith.constant 1.000000e+00 : f32
    %95 = vector.broadcast %cst_22 : f32 to vector<1x128xf32>
    %96 = arith.subf %95, %88 : vector<1x128xf32>
    %97 = arith.mulf %96, %94 : vector<1x128xf32>
    %98 = arith.mulf %88, %67 : vector<1x128xf32>
    %99 = arith.addf %97, %98 : vector<1x128xf32>
    %100 = arith.index_cast %c2_i32 : i32 to index
    %c0_23 = arith.constant 0 : index
    %101 = vector.load %arg5[%100, %c0_23] : memref<8x128xf32, #tpu.memory_space<vmem>>, vector<1x128xf32>
    tpu.vector_store %arg5[%100, %c0_23], %99 {strides = array<i32>} : memref<8x128xf32, #tpu.memory_space<vmem>>, vector<1x128xf32>,
    %c3_i32 = arith.constant 3 : i32
    %102 = arith.index_cast %c3_i32 : i32 to index
    %c0_24 = arith.constant 0 : index
    %103 = vector.load %arg1[%102, %c0_24] : memref<8x384xf32, #tpu.memory_space<vmem>>, vector<1x384xf32>
    %cst_25 = arith.constant dense<0.000000e+00> : vector<1x384xf32>
    %104 = tpu.matmul %99, %3, %cst_25 {dimension_numbers = #tpu.dot_dimension_numbers<[1], [0], [0], [1], [0, 0, 1, 1], [], []>} : vector<1x128xf32>, vector<128x384xf32>, vector<1x384xf32> -> vector<1x384xf32>
    %105 = vector.extract_strided_slice %103 {offsets = [0, 0], sizes = [1, 128], strides = [1, 1]} : vector<1x384xf32> to vector<1x128xf32>
    %106 = vector.extract_strided_slice %104 {offsets = [0, 0], sizes = [1, 128], strides = [1, 1]} : vector<1x384xf32> to vector<1x128xf32>
    %107 = arith.addf %105, %106 : vector<1x128xf32>
    %108 = arith.negf %107 : vector<1x128xf32>
    %109 = math.exp %108 : vector<1x128xf32>
    %cst_26 = arith.constant 1.000000e+00 : f32
    %110 = vector.broadcast %cst_26 : f32 to vector<1x128xf32>
    %111 = arith.addf %110, %109 : vector<1x128xf32>
    %112 = arith.divf %110, %111 : vector<1x128xf32>
    %113 = vector.extract_strided_slice %103 {offsets = [0, 128], sizes = [1, 128], strides = [1, 1]} : vector<1x384xf32> to vector<1x128xf32>
    %114 = vector.extract_strided_slice %104 {offsets = [0, 128], sizes = [1, 128], strides = [1, 1]} : vector<1x384xf32> to vector<1x128xf32>
    %115 = arith.addf %113, %114 : vector<1x128xf32>
    %116 = arith.negf %115 : vector<1x128xf32>
    %117 = math.exp %116 : vector<1x128xf32>
    %cst_27 = arith.constant 1.000000e+00 : f32
    %118 = vector.broadcast %cst_27 : f32 to vector<1x128xf32>
    %119 = arith.addf %118, %117 : vector<1x128xf32>
    %120 = arith.divf %118, %119 : vector<1x128xf32>
    %121 = vector.extract_strided_slice %103 {offsets = [0, 256], sizes = [1, 128], strides = [1, 1]} : vector<1x384xf32> to vector<1x128xf32>
    %122 = vector.extract_strided_slice %104 {offsets = [0, 256], sizes = [1, 128], strides = [1, 1]} : vector<1x384xf32> to vector<1x128xf32>
    %123 = arith.addf %122, %4 : vector<1x128xf32>
    %124 = arith.mulf %112, %123 : vector<1x128xf32>
    %125 = arith.addf %121, %124 : vector<1x128xf32>
    %126 = math.tanh %125 : vector<1x128xf32>
    %cst_28 = arith.constant 1.000000e+00 : f32
    %127 = vector.broadcast %cst_28 : f32 to vector<1x128xf32>
    %128 = arith.subf %127, %120 : vector<1x128xf32>
    %129 = arith.mulf %128, %126 : vector<1x128xf32>
    %130 = arith.mulf %120, %99 : vector<1x128xf32>
    %131 = arith.addf %129, %130 : vector<1x128xf32>
    %132 = arith.index_cast %c3_i32 : i32 to index
    %c0_29 = arith.constant 0 : index
    %133 = vector.load %arg5[%132, %c0_29] : memref<8x128xf32, #tpu.memory_space<vmem>>, vector<1x128xf32>
    tpu.vector_store %arg5[%132, %c0_29], %131 {strides = array<i32>} : memref<8x128xf32, #tpu.memory_space<vmem>>, vector<1x128xf32>,
    %c4_i32 = arith.constant 4 : i32
    %134 = arith.index_cast %c4_i32 : i32 to index
    %c0_30 = arith.constant 0 : index
    %135 = vector.load %arg1[%134, %c0_30] : memref<8x384xf32, #tpu.memory_space<vmem>>, vector<1x384xf32>
    %cst_31 = arith.constant dense<0.000000e+00> : vector<1x384xf32>
    %136 = tpu.matmul %131, %3, %cst_31 {dimension_numbers = #tpu.dot_dimension_numbers<[1], [0], [0], [1], [0, 0, 1, 1], [], []>} : vector<1x128xf32>, vector<128x384xf32>, vector<1x384xf32> -> vector<1x384xf32>
    %137 = vector.extract_strided_slice %135 {offsets = [0, 0], sizes = [1, 128], strides = [1, 1]} : vector<1x384xf32> to vector<1x128xf32>
    %138 = vector.extract_strided_slice %136 {offsets = [0, 0], sizes = [1, 128], strides = [1, 1]} : vector<1x384xf32> to vector<1x128xf32>
    %139 = arith.addf %137, %138 : vector<1x128xf32>
    %140 = arith.negf %139 : vector<1x128xf32>
    %141 = math.exp %140 : vector<1x128xf32>
    %cst_32 = arith.constant 1.000000e+00 : f32
    %142 = vector.broadcast %cst_32 : f32 to vector<1x128xf32>
    %143 = arith.addf %142, %141 : vector<1x128xf32>
    %144 = arith.divf %142, %143 : vector<1x128xf32>
    %145 = vector.extract_strided_slice %135 {offsets = [0, 128], sizes = [1, 128], strides = [1, 1]} : vector<1x384xf32> to vector<1x128xf32>
    %146 = vector.extract_strided_slice %136 {offsets = [0, 128], sizes = [1, 128], strides = [1, 1]} : vector<1x384xf32> to vector<1x128xf32>
    %147 = arith.addf %145, %146 : vector<1x128xf32>
    %148 = arith.negf %147 : vector<1x128xf32>
    %149 = math.exp %148 : vector<1x128xf32>
    %cst_33 = arith.constant 1.000000e+00 : f32
    %150 = vector.broadcast %cst_33 : f32 to vector<1x128xf32>
    %151 = arith.addf %150, %149 : vector<1x128xf32>
    %152 = arith.divf %150, %151 : vector<1x128xf32>
    %153 = vector.extract_strided_slice %135 {offsets = [0, 256], sizes = [1, 128], strides = [1, 1]} : vector<1x384xf32> to vector<1x128xf32>
    %154 = vector.extract_strided_slice %136 {offsets = [0, 256], sizes = [1, 128], strides = [1, 1]} : vector<1x384xf32> to vector<1x128xf32>
    %155 = arith.addf %154, %4 : vector<1x128xf32>
    %156 = arith.mulf %144, %155 : vector<1x128xf32>
    %157 = arith.addf %153, %156 : vector<1x128xf32>
    %158 = math.tanh %157 : vector<1x128xf32>
    %cst_34 = arith.constant 1.000000e+00 : f32
    %159 = vector.broadcast %cst_34 : f32 to vector<1x128xf32>
    %160 = arith.subf %159, %152 : vector<1x128xf32>
    %161 = arith.mulf %160, %158 : vector<1x128xf32>
    %162 = arith.mulf %152, %131 : vector<1x128xf32>
    %163 = arith.addf %161, %162 : vector<1x128xf32>
    %164 = arith.index_cast %c4_i32 : i32 to index
    %c0_35 = arith.constant 0 : index
    %165 = vector.load %arg5[%164, %c0_35] : memref<8x128xf32, #tpu.memory_space<vmem>>, vector<1x128xf32>
    tpu.vector_store %arg5[%164, %c0_35], %163 {strides = array<i32>} : memref<8x128xf32, #tpu.memory_space<vmem>>, vector<1x128xf32>,
    %c5_i32 = arith.constant 5 : i32
    %166 = arith.index_cast %c5_i32 : i32 to index
    %c0_36 = arith.constant 0 : index
    %167 = vector.load %arg1[%166, %c0_36] : memref<8x384xf32, #tpu.memory_space<vmem>>, vector<1x384xf32>
    %cst_37 = arith.constant dense<0.000000e+00> : vector<1x384xf32>
    %168 = tpu.matmul %163, %3, %cst_37 {dimension_numbers = #tpu.dot_dimension_numbers<[1], [0], [0], [1], [0, 0, 1, 1], [], []>} : vector<1x128xf32>, vector<128x384xf32>, vector<1x384xf32> -> vector<1x384xf32>
    %169 = vector.extract_strided_slice %167 {offsets = [0, 0], sizes = [1, 128], strides = [1, 1]} : vector<1x384xf32> to vector<1x128xf32>
    %170 = vector.extract_strided_slice %168 {offsets = [0, 0], sizes = [1, 128], strides = [1, 1]} : vector<1x384xf32> to vector<1x128xf32>
    %171 = arith.addf %169, %170 : vector<1x128xf32>
    %172 = arith.negf %171 : vector<1x128xf32>
    %173 = math.exp %172 : vector<1x128xf32>
    %cst_38 = arith.constant 1.000000e+00 : f32
    %174 = vector.broadcast %cst_38 : f32 to vector<1x128xf32>
    %175 = arith.addf %174, %173 : vector<1x128xf32>
    %176 = arith.divf %174, %175 : vector<1x128xf32>
    %177 = vector.extract_strided_slice %167 {offsets = [0, 128], sizes = [1, 128], strides = [1, 1]} : vector<1x384xf32> to vector<1x128xf32>
    %178 = vector.extract_strided_slice %168 {offsets = [0, 128], sizes = [1, 128], strides = [1, 1]} : vector<1x384xf32> to vector<1x128xf32>
    %179 = arith.addf %177, %178 : vector<1x128xf32>
    %180 = arith.negf %179 : vector<1x128xf32>
    %181 = math.exp %180 : vector<1x128xf32>
    %cst_39 = arith.constant 1.000000e+00 : f32
    %182 = vector.broadcast %cst_39 : f32 to vector<1x128xf32>
    %183 = arith.addf %182, %181 : vector<1x128xf32>
    %184 = arith.divf %182, %183 : vector<1x128xf32>
    %185 = vector.extract_strided_slice %167 {offsets = [0, 256], sizes = [1, 128], strides = [1, 1]} : vector<1x384xf32> to vector<1x128xf32>
    %186 = vector.extract_strided_slice %168 {offsets = [0, 256], sizes = [1, 128], strides = [1, 1]} : vector<1x384xf32> to vector<1x128xf32>
    %187 = arith.addf %186, %4 : vector<1x128xf32>
    %188 = arith.mulf %176, %187 : vector<1x128xf32>
    %189 = arith.addf %185, %188 : vector<1x128xf32>
    %190 = math.tanh %189 : vector<1x128xf32>
    %cst_40 = arith.constant 1.000000e+00 : f32
    %191 = vector.broadcast %cst_40 : f32 to vector<1x128xf32>
    %192 = arith.subf %191, %184 : vector<1x128xf32>
    %193 = arith.mulf %192, %190 : vector<1x128xf32>
    %194 = arith.mulf %184, %163 : vector<1x128xf32>
    %195 = arith.addf %193, %194 : vector<1x128xf32>
    %196 = arith.index_cast %c5_i32 : i32 to index
    %c0_41 = arith.constant 0 : index
    %197 = vector.load %arg5[%196, %c0_41] : memref<8x128xf32, #tpu.memory_space<vmem>>, vector<1x128xf32>
    tpu.vector_store %arg5[%196, %c0_41], %195 {strides = array<i32>} : memref<8x128xf32, #tpu.memory_space<vmem>>, vector<1x128xf32>,
    %c6_i32 = arith.constant 6 : i32
    %198 = arith.index_cast %c6_i32 : i32 to index
    %c0_42 = arith.constant 0 : index
    %199 = vector.load %arg1[%198, %c0_42] : memref<8x384xf32, #tpu.memory_space<vmem>>, vector<1x384xf32>
    %cst_43 = arith.constant dense<0.000000e+00> : vector<1x384xf32>
    %200 = tpu.matmul %195, %3, %cst_43 {dimension_numbers = #tpu.dot_dimension_numbers<[1], [0], [0], [1], [0, 0, 1, 1], [], []>} : vector<1x128xf32>, vector<128x384xf32>, vector<1x384xf32> -> vector<1x384xf32>
    %201 = vector.extract_strided_slice %199 {offsets = [0, 0], sizes = [1, 128], strides = [1, 1]} : vector<1x384xf32> to vector<1x128xf32>
    %202 = vector.extract_strided_slice %200 {offsets = [0, 0], sizes = [1, 128], strides = [1, 1]} : vector<1x384xf32> to vector<1x128xf32>
    %203 = arith.addf %201, %202 : vector<1x128xf32>
    %204 = arith.negf %203 : vector<1x128xf32>
    %205 = math.exp %204 : vector<1x128xf32>
    %cst_44 = arith.constant 1.000000e+00 : f32
    %206 = vector.broadcast %cst_44 : f32 to vector<1x128xf32>
    %207 = arith.addf %206, %205 : vector<1x128xf32>
    %208 = arith.divf %206, %207 : vector<1x128xf32>
    %209 = vector.extract_strided_slice %199 {offsets = [0, 128], sizes = [1, 128], strides = [1, 1]} : vector<1x384xf32> to vector<1x128xf32>
    %210 = vector.extract_strided_slice %200 {offsets = [0, 128], sizes = [1, 128], strides = [1, 1]} : vector<1x384xf32> to vector<1x128xf32>
    %211 = arith.addf %209, %210 : vector<1x128xf32>
    %212 = arith.negf %211 : vector<1x128xf32>
    %213 = math.exp %212 : vector<1x128xf32>
    %cst_45 = arith.constant 1.000000e+00 : f32
    %214 = vector.broadcast %cst_45 : f32 to vector<1x128xf32>
    %215 = arith.addf %214, %213 : vector<1x128xf32>
    %216 = arith.divf %214, %215 : vector<1x128xf32>
    %217 = vector.extract_strided_slice %199 {offsets = [0, 256], sizes = [1, 128], strides = [1, 1]} : vector<1x384xf32> to vector<1x128xf32>
    %218 = vector.extract_strided_slice %200 {offsets = [0, 256], sizes = [1, 128], strides = [1, 1]} : vector<1x384xf32> to vector<1x128xf32>
    %219 = arith.addf %218, %4 : vector<1x128xf32>
    %220 = arith.mulf %208, %219 : vector<1x128xf32>
    %221 = arith.addf %217, %220 : vector<1x128xf32>
    %222 = math.tanh %221 : vector<1x128xf32>
    %cst_46 = arith.constant 1.000000e+00 : f32
    %223 = vector.broadcast %cst_46 : f32 to vector<1x128xf32>
    %224 = arith.subf %223, %216 : vector<1x128xf32>
    %225 = arith.mulf %224, %222 : vector<1x128xf32>
    %226 = arith.mulf %216, %195 : vector<1x128xf32>
    %227 = arith.addf %225, %226 : vector<1x128xf32>
    %228 = arith.index_cast %c6_i32 : i32 to index
    %c0_47 = arith.constant 0 : index
    %229 = vector.load %arg5[%228, %c0_47] : memref<8x128xf32, #tpu.memory_space<vmem>>, vector<1x128xf32>
    tpu.vector_store %arg5[%228, %c0_47], %227 {strides = array<i32>} : memref<8x128xf32, #tpu.memory_space<vmem>>, vector<1x128xf32>,
    %c7_i32 = arith.constant 7 : i32
    %230 = arith.index_cast %c7_i32 : i32 to index
    %c0_48 = arith.constant 0 : index
    %231 = vector.load %arg1[%230, %c0_48] : memref<8x384xf32, #tpu.memory_space<vmem>>, vector<1x384xf32>
    %cst_49 = arith.constant dense<0.000000e+00> : vector<1x384xf32>
    %232 = tpu.matmul %227, %3, %cst_49 {dimension_numbers = #tpu.dot_dimension_numbers<[1], [0], [0], [1], [0, 0, 1, 1], [], []>} : vector<1x128xf32>, vector<128x384xf32>, vector<1x384xf32> -> vector<1x384xf32>
    %233 = vector.extract_strided_slice %231 {offsets = [0, 0], sizes = [1, 128], strides = [1, 1]} : vector<1x384xf32> to vector<1x128xf32>
    %234 = vector.extract_strided_slice %232 {offsets = [0, 0], sizes = [1, 128], strides = [1, 1]} : vector<1x384xf32> to vector<1x128xf32>
    %235 = arith.addf %233, %234 : vector<1x128xf32>
    %236 = arith.negf %235 : vector<1x128xf32>
    %237 = math.exp %236 : vector<1x128xf32>
    %cst_50 = arith.constant 1.000000e+00 : f32
    %238 = vector.broadcast %cst_50 : f32 to vector<1x128xf32>
    %239 = arith.addf %238, %237 : vector<1x128xf32>
    %240 = arith.divf %238, %239 : vector<1x128xf32>
    %241 = vector.extract_strided_slice %231 {offsets = [0, 128], sizes = [1, 128], strides = [1, 1]} : vector<1x384xf32> to vector<1x128xf32>
    %242 = vector.extract_strided_slice %232 {offsets = [0, 128], sizes = [1, 128], strides = [1, 1]} : vector<1x384xf32> to vector<1x128xf32>
    %243 = arith.addf %241, %242 : vector<1x128xf32>
    %244 = arith.negf %243 : vector<1x128xf32>
    %245 = math.exp %244 : vector<1x128xf32>
    %cst_51 = arith.constant 1.000000e+00 : f32
    %246 = vector.broadcast %cst_51 : f32 to vector<1x128xf32>
    %247 = arith.addf %246, %245 : vector<1x128xf32>
    %248 = arith.divf %246, %247 : vector<1x128xf32>
    %249 = vector.extract_strided_slice %231 {offsets = [0, 256], sizes = [1, 128], strides = [1, 1]} : vector<1x384xf32> to vector<1x128xf32>
    %250 = vector.extract_strided_slice %232 {offsets = [0, 256], sizes = [1, 128], strides = [1, 1]} : vector<1x384xf32> to vector<1x128xf32>
    %251 = arith.addf %250, %4 : vector<1x128xf32>
    %252 = arith.mulf %240, %251 : vector<1x128xf32>
    %253 = arith.addf %249, %252 : vector<1x128xf32>
    %254 = math.tanh %253 : vector<1x128xf32>
    %cst_52 = arith.constant 1.000000e+00 : f32
    %255 = vector.broadcast %cst_52 : f32 to vector<1x128xf32>
    %256 = arith.subf %255, %248 : vector<1x128xf32>
    %257 = arith.mulf %256, %254 : vector<1x128xf32>
    %258 = arith.mulf %248, %227 : vector<1x128xf32>
    %259 = arith.addf %257, %258 : vector<1x128xf32>
    %260 = arith.index_cast %c7_i32 : i32 to index
    %c0_53 = arith.constant 0 : index
    %261 = vector.load %arg5[%260, %c0_53] : memref<8x128xf32, #tpu.memory_space<vmem>>, vector<1x128xf32>
    tpu.vector_store %arg5[%260, %c0_53], %259 {strides = array<i32>} : memref<8x128xf32, #tpu.memory_space<vmem>>, vector<1x128xf32>,
    %c8_i32 = arith.constant 8 : i32
    %c0_54 = arith.constant 0 : index
    %c0_55 = arith.constant 0 : index
    %262 = vector.load %arg6[%c0_54, %c0_55] : memref<1x128xf32, #tpu.memory_space<vmem>>, vector<1x128xf32>
    tpu.vector_store %arg6[%c0_54, %c0_55], %259 {strides = array<i32>} : memref<1x128xf32, #tpu.memory_space<vmem>>, vector<1x128xf32>,
    return
  }
  func.func @transform_0(%arg0: i32) -> (i32, i32) {
    %c0_i32 = arith.constant 0 : i32
    %c0_i32_0 = arith.constant 0 : i32
    return %arg0, %c0_i32 : i32, i32
  }
  func.func @transform_1(%arg0: i32) -> (i32, i32) {
    %c0_i32 = arith.constant 0 : i32
    %c0_i32_0 = arith.constant 0 : i32
    %c0_i32_1 = arith.constant 0 : i32
    return %c0_i32, %c0_i32_0 : i32, i32
  }
  func.func @transform_2(%arg0: i32) -> (i32, i32) {
    %c0_i32 = arith.constant 0 : i32
    %c0_i32_0 = arith.constant 0 : i32
    %c0_i32_1 = arith.constant 0 : i32
    return %c0_i32, %c0_i32_0 : i32, i32
  }
  func.func @transform_3(%arg0: i32) -> (i32, i32) {
    %c0_i32 = arith.constant 0 : i32
    %c0_i32_0 = arith.constant 0 : i32
    %c0_i32_1 = arith.constant 0 : i32
    return %c0_i32, %c0_i32_0 : i32, i32
  }
  func.func @transform_4(%arg0: i32) -> (i32, i32) {
    %c0_i32 = arith.constant 0 : i32
    %c0_i32_0 = arith.constant 0 : i32
    return %arg0, %c0_i32 : i32, i32
  }
  func.func @transform_5(%arg0: i32) -> (i32, i32) {
    %c0_i32 = arith.constant 0 : i32
    %c0_i32_0 = arith.constant 0 : i32
    %c0_i32_1 = arith.constant 0 : i32
    return %c0_i32, %c0_i32_0 : i32, i32
  }
}

module attributes {stable_mosaic.version = 11 : i64} {
  func.func @kernel(%arg0: i32, %arg1: memref<8x384xf32, #tpu.memory_space<vmem>>, %arg2: memref<1x128xf32, #tpu.memory_space<vmem>>, %arg3: memref<128x384xf32, #tpu.memory_space<vmem>>, %arg4: memref<1x128xf32, #tpu.memory_space<vmem>>, %arg5: memref<8x128xf32, #tpu.memory_space<vmem>>, %arg6: memref<1x128xf32, #tpu.memory_space<vmem>>) attributes {dimension_semantics = [#tpu.dimension_semantics<arbitrary>], iteration_bounds = array<i64: 2>, scalar_prefetch = 0 : i64, scratch_operands = 0 : i64, tpu.core_type = #tpu.core_type<tc>, window_params = [{transform_indices = @transform_0, window_bounds = array<i64: 8, 384>}, {pipeline_mode = #tpu.pipeline_mode<synchronous>, transform_indices = @transform_1, window_bounds = array<i64: 1, 128>}, {pipeline_mode = #tpu.pipeline_mode<synchronous>, transform_indices = @transform_2, window_bounds = array<i64: 128, 384>}, {pipeline_mode = #tpu.pipeline_mode<synchronous>, transform_indices = @transform_3, window_bounds = array<i64: 1, 128>}, {transform_indices = @transform_4, window_bounds = array<i64: 8, 128>}, {pipeline_mode = #tpu.pipeline_mode<synchronous>, transform_indices = @transform_5, window_bounds = array<i64: 1, 128>}]} {
    %c0_i32 = arith.constant 0 : i32
    %0 = arith.cmpi eq, %arg0, %c0_i32 : i32
    %1 = arith.extui %0 : i1 to i32
    %c0_i32_0 = arith.constant 0 : i32
    %2 = arith.cmpi ne, %1, %c0_i32_0 : i32
    scf.if %2 {
      %c0_56 = arith.constant 0 : index
      %c0_57 = arith.constant 0 : index
      %263 = vector.load %arg2[%c0_56, %c0_57] : memref<1x128xf32, #tpu.memory_space<vmem>>, vector<1x128xf32>
      %c0_58 = arith.constant 0 : index
      %c0_59 = arith.constant 0 : index
      %264 = vector.load %arg6[%c0_58, %c0_59] : memref<1x128xf32, #tpu.memory_space<vmem>>, vector<1x128xf32>
      tpu.vector_store %arg6[%c0_58, %c0_59], %263 {strides = array<i32>} : memref<1x128xf32, #tpu.memory_space<vmem>>, vector<1x128xf32>,
    } else {
    }
    %c0 = arith.constant 0 : index
    %c0_1 = arith.constant 0 : index
    %3 = vector.load %arg3[%c0, %c0_1] : memref<128x384xf32, #tpu.memory_space<vmem>>, vector<128x384xf32>
    %c0_2 = arith.constant 0 : index
    %c0_3 = arith.constant 0 : index
    %4 = vector.load %arg4[%c0_2, %c0_3] : memref<1x128xf32, #tpu.memory_space<vmem>>, vector<1x128xf32>
    %c0_4 = arith.constant 0 : index
    %c0_5 = arith.constant 0 : index
    %5 = vector.load %arg6[%c0_4, %c0_5] : memref<1x128xf32, #tpu.memory_space<vmem>>, vector<1x128xf32>
    %c0_i32_6 = arith.constant 0 : i32
    %6 = arith.index_cast %c0_i32_6 : i32 to index
    %c0_7 = arith.constant 0 : index
    %7 = vector.load %arg1[%6, %c0_7] : memref<8x384xf32, #tpu.memory_space<vmem>>, vector<1x384xf32>
    %cst = arith.constant dense<0.000000e+00> : vector<1x384xf32>
    %8 = tpu.matmul %5, %3, %cst {dimension_numbers = #tpu.dot_dimension_numbers<[1], [0], [0], [1], [0, 0, 1, 1], [], []>} : vector<1x128xf32>, vector<128x384xf32>, vector<1x384xf32> -> vector<1x384xf32>
    %9 = vector.extract_strided_slice %7 {offsets = [0, 0], sizes = [1, 128], strides = [1, 1]} : vector<1x384xf32> to vector<1x128xf32>
    %10 = vector.extract_strided_slice %8 {offsets = [0, 0], sizes = [1, 128], strides = [1, 1]} : vector<1x384xf32> to vector<1x128xf32>
    %11 = arith.addf %9, %10 : vector<1x128xf32>
    %12 = arith.negf %11 : vector<1x128xf32>
    %13 = math.exp %12 : vector<1x128xf32>
    %cst_8 = arith.constant 1.000000e+00 : f32
    %14 = vector.broadcast %cst_8 : f32 to vector<1x128xf32>
    %15 = arith.addf %14, %13 : vector<1x128xf32>
    %16 = arith.divf %14, %15 : vector<1x128xf32>
    %17 = vector.extract_strided_slice %7 {offsets = [0, 128], sizes = [1, 128], strides = [1, 1]} : vector<1x384xf32> to vector<1x128xf32>
    %18 = vector.extract_strided_slice %8 {offsets = [0, 128], sizes = [1, 128], strides = [1, 1]} : vector<1x384xf32> to vector<1x128xf32>
    %19 = arith.addf %17, %18 : vector<1x128xf32>
    %20 = arith.negf %19 : vector<1x128xf32>
    %21 = math.exp %20 : vector<1x128xf32>
    %cst_9 = arith.constant 1.000000e+00 : f32
    %22 = vector.broadcast %cst_9 : f32 to vector<1x128xf32>
    %23 = arith.addf %22, %21 : vector<1x128xf32>
    %24 = arith.divf %22, %23 : vector<1x128xf32>
    %25 = vector.extract_strided_slice %7 {offsets = [0, 256], sizes = [1, 128], strides = [1, 1]} : vector<1x384xf32> to vector<1x128xf32>
    %26 = vector.extract_strided_slice %8 {offsets = [0, 256], sizes = [1, 128], strides = [1, 1]} : vector<1x384xf32> to vector<1x128xf32>
    %27 = arith.addf %26, %4 : vector<1x128xf32>
    %28 = arith.mulf %16, %27 : vector<1x128xf32>
    %29 = arith.addf %25, %28 : vector<1x128xf32>
    %30 = math.tanh %29 : vector<1x128xf32>
    %cst_10 = arith.constant 1.000000e+00 : f32
    %31 = vector.broadcast %cst_10 : f32 to vector<1x128xf32>
    %32 = arith.subf %31, %24 : vector<1x128xf32>
    %33 = arith.mulf %32, %30 : vector<1x128xf32>
    %34 = arith.mulf %24, %5 : vector<1x128xf32>
    %35 = arith.addf %33, %34 : vector<1x128xf32>
    %36 = arith.index_cast %c0_i32_6 : i32 to index
    %c0_11 = arith.constant 0 : index
    %37 = vector.load %arg5[%36, %c0_11] : memref<8x128xf32, #tpu.memory_space<vmem>>, vector<1x128xf32>
    tpu.vector_store %arg5[%36, %c0_11], %35 {strides = array<i32>} : memref<8x128xf32, #tpu.memory_space<vmem>>, vector<1x128xf32>,
    %c1_i32 = arith.constant 1 : i32
    %38 = arith.index_cast %c1_i32 : i32 to index
    %c0_12 = arith.constant 0 : index
    %39 = vector.load %arg1[%38, %c0_12] : memref<8x384xf32, #tpu.memory_space<vmem>>, vector<1x384xf32>
    %cst_13 = arith.constant dense<0.000000e+00> : vector<1x384xf32>
    %40 = tpu.matmul %35, %3, %cst_13 {dimension_numbers = #tpu.dot_dimension_numbers<[1], [0], [0], [1], [0, 0, 1, 1], [], []>} : vector<1x128xf32>, vector<128x384xf32>, vector<1x384xf32> -> vector<1x384xf32>
    %41 = vector.extract_strided_slice %39 {offsets = [0, 0], sizes = [1, 128], strides = [1, 1]} : vector<1x384xf32> to vector<1x128xf32>
    %42 = vector.extract_strided_slice %40 {offsets = [0, 0], sizes = [1, 128], strides = [1, 1]} : vector<1x384xf32> to vector<1x128xf32>
    %43 = arith.addf %41, %42 : vector<1x128xf32>
    %44 = arith.negf %43 : vector<1x128xf32>
    %45 = math.exp %44 : vector<1x128xf32>
    %cst_14 = arith.constant 1.000000e+00 : f32
    %46 = vector.broadcast %cst_14 : f32 to vector<1x128xf32>
    %47 = arith.addf %46, %45 : vector<1x128xf32>
    %48 = arith.divf %46, %47 : vector<1x128xf32>
    %49 = vector.extract_strided_slice %39 {offsets = [0, 128], sizes = [1, 128], strides = [1, 1]} : vector<1x384xf32> to vector<1x128xf32>
    %50 = vector.extract_strided_slice %40 {offsets = [0, 128], sizes = [1, 128], strides = [1, 1]} : vector<1x384xf32> to vector<1x128xf32>
    %51 = arith.addf %49, %50 : vector<1x128xf32>
    %52 = arith.negf %51 : vector<1x128xf32>
    %53 = math.exp %52 : vector<1x128xf32>
    %cst_15 = arith.constant 1.000000e+00 : f32
    %54 = vector.broadcast %cst_15 : f32 to vector<1x128xf32>
    %55 = arith.addf %54, %53 : vector<1x128xf32>
    %56 = arith.divf %54, %55 : vector<1x128xf32>
    %57 = vector.extract_strided_slice %39 {offsets = [0, 256], sizes = [1, 128], strides = [1, 1]} : vector<1x384xf32> to vector<1x128xf32>
    %58 = vector.extract_strided_slice %40 {offsets = [0, 256], sizes = [1, 128], strides = [1, 1]} : vector<1x384xf32> to vector<1x128xf32>
    %59 = arith.addf %58, %4 : vector<1x128xf32>
    %60 = arith.mulf %48, %59 : vector<1x128xf32>
    %61 = arith.addf %57, %60 : vector<1x128xf32>
    %62 = math.tanh %61 : vector<1x128xf32>
    %cst_16 = arith.constant 1.000000e+00 : f32
    %63 = vector.broadcast %cst_16 : f32 to vector<1x128xf32>
    %64 = arith.subf %63, %56 : vector<1x128xf32>
    %65 = arith.mulf %64, %62 : vector<1x128xf32>
    %66 = arith.mulf %56, %35 : vector<1x128xf32>
    %67 = arith.addf %65, %66 : vector<1x128xf32>
    %68 = arith.index_cast %c1_i32 : i32 to index
    %c0_17 = arith.constant 0 : index
    %69 = vector.load %arg5[%68, %c0_17] : memref<8x128xf32, #tpu.memory_space<vmem>>, vector<1x128xf32>
    tpu.vector_store %arg5[%68, %c0_17], %67 {strides = array<i32>} : memref<8x128xf32, #tpu.memory_space<vmem>>, vector<1x128xf32>,
    %c2_i32 = arith.constant 2 : i32
    %70 = arith.index_cast %c2_i32 : i32 to index
    %c0_18 = arith.constant 0 : index
    %71 = vector.load %arg1[%70, %c0_18] : memref<8x384xf32, #tpu.memory_space<vmem>>, vector<1x384xf32>
    %cst_19 = arith.constant dense<0.000000e+00> : vector<1x384xf32>
    %72 = tpu.matmul %67, %3, %cst_19 {dimension_numbers = #tpu.dot_dimension_numbers<[1], [0], [0], [1], [0, 0, 1, 1], [], []>} : vector<1x128xf32>, vector<128x384xf32>, vector<1x384xf32> -> vector<1x384xf32>
    %73 = vector.extract_strided_slice %71 {offsets = [0, 0], sizes = [1, 128], strides = [1, 1]} : vector<1x384xf32> to vector<1x128xf32>
    %74 = vector.extract_strided_slice %72 {offsets = [0, 0], sizes = [1, 128], strides = [1, 1]} : vector<1x384xf32> to vector<1x128xf32>
    %75 = arith.addf %73, %74 : vector<1x128xf32>
    %76 = arith.negf %75 : vector<1x128xf32>
    %77 = math.exp %76 : vector<1x128xf32>
    %cst_20 = arith.constant 1.000000e+00 : f32
    %78 = vector.broadcast %cst_20 : f32 to vector<1x128xf32>
    %79 = arith.addf %78, %77 : vector<1x128xf32>
    %80 = arith.divf %78, %79 : vector<1x128xf32>
    %81 = vector.extract_strided_slice %71 {offsets = [0, 128], sizes = [1, 128], strides = [1, 1]} : vector<1x384xf32> to vector<1x128xf32>
    %82 = vector.extract_strided_slice %72 {offsets = [0, 128], sizes = [1, 128], strides = [1, 1]} : vector<1x384xf32> to vector<1x128xf32>
    %83 = arith.addf %81, %82 : vector<1x128xf32>
    %84 = arith.negf %83 : vector<1x128xf32>
    %85 = math.exp %84 : vector<1x128xf32>
    %cst_21 = arith.constant 1.000000e+00 : f32
    %86 = vector.broadcast %cst_21 : f32 to vector<1x128xf32>
    %87 = arith.addf %86, %85 : vector<1x128xf32>
    %88 = arith.divf %86, %87 : vector<1x128xf32>
    %89 = vector.extract_strided_slice %71 {offsets = [0, 256], sizes = [1, 128], strides = [1, 1]} : vector<1x384xf32> to vector<1x128xf32>
    %90 = vector.extract_strided_slice %72 {offsets = [0, 256], sizes = [1, 128], strides = [1, 1]} : vector<1x384xf32> to vector<1x128xf32>
    %91 = arith.addf %90, %4 : vector<1x128xf32>
    %92 = arith.mulf %80, %91 : vector<1x128xf32>
    %93 = arith.addf %89, %92 : vector<1x128xf32>
    %94 = math.tanh %93 : vector<1x128xf32>
    %cst_22 = arith.constant 1.000000e+00 : f32
    %95 = vector.broadcast %cst_22 : f32 to vector<1x128xf32>
    %96 = arith.subf %95, %88 : vector<1x128xf32>
    %97 = arith.mulf %96, %94 : vector<1x128xf32>
    %98 = arith.mulf %88, %67 : vector<1x128xf32>
    %99 = arith.addf %97, %98 : vector<1x128xf32>
    %100 = arith.index_cast %c2_i32 : i32 to index
    %c0_23 = arith.constant 0 : index
    %101 = vector.load %arg5[%100, %c0_23] : memref<8x128xf32, #tpu.memory_space<vmem>>, vector<1x128xf32>
    tpu.vector_store %arg5[%100, %c0_23], %99 {strides = array<i32>} : memref<8x128xf32, #tpu.memory_space<vmem>>, vector<1x128xf32>,
    %c3_i32 = arith.constant 3 : i32
    %102 = arith.index_cast %c3_i32 : i32 to index
    %c0_24 = arith.constant 0 : index
    %103 = vector.load %arg1[%102, %c0_24] : memref<8x384xf32, #tpu.memory_space<vmem>>, vector<1x384xf32>
    %cst_25 = arith.constant dense<0.000000e+00> : vector<1x384xf32>
    %104 = tpu.matmul %99, %3, %cst_25 {dimension_numbers = #tpu.dot_dimension_numbers<[1], [0], [0], [1], [0, 0, 1, 1], [], []>} : vector<1x128xf32>, vector<128x384xf32>, vector<1x384xf32> -> vector<1x384xf32>
    %105 = vector.extract_strided_slice %103 {offsets = [0, 0], sizes = [1, 128], strides = [1, 1]} : vector<1x384xf32> to vector<1x128xf32>
    %106 = vector.extract_strided_slice %104 {offsets = [0, 0], sizes = [1, 128], strides = [1, 1]} : vector<1x384xf32> to vector<1x128xf32>
    %107 = arith.addf %105, %106 : vector<1x128xf32>
    %108 = arith.negf %107 : vector<1x128xf32>
    %109 = math.exp %108 : vector<1x128xf32>
    %cst_26 = arith.constant 1.000000e+00 : f32
    %110 = vector.broadcast %cst_26 : f32 to vector<1x128xf32>
    %111 = arith.addf %110, %109 : vector<1x128xf32>
    %112 = arith.divf %110, %111 : vector<1x128xf32>
    %113 = vector.extract_strided_slice %103 {offsets = [0, 128], sizes = [1, 128], strides = [1, 1]} : vector<1x384xf32> to vector<1x128xf32>
    %114 = vector.extract_strided_slice %104 {offsets = [0, 128], sizes = [1, 128], strides = [1, 1]} : vector<1x384xf32> to vector<1x128xf32>
    %115 = arith.addf %113, %114 : vector<1x128xf32>
    %116 = arith.negf %115 : vector<1x128xf32>
    %117 = math.exp %116 : vector<1x128xf32>
    %cst_27 = arith.constant 1.000000e+00 : f32
    %118 = vector.broadcast %cst_27 : f32 to vector<1x128xf32>
    %119 = arith.addf %118, %117 : vector<1x128xf32>
    %120 = arith.divf %118, %119 : vector<1x128xf32>
    %121 = vector.extract_strided_slice %103 {offsets = [0, 256], sizes = [1, 128], strides = [1, 1]} : vector<1x384xf32> to vector<1x128xf32>
    %122 = vector.extract_strided_slice %104 {offsets = [0, 256], sizes = [1, 128], strides = [1, 1]} : vector<1x384xf32> to vector<1x128xf32>
    %123 = arith.addf %122, %4 : vector<1x128xf32>
    %124 = arith.mulf %112, %123 : vector<1x128xf32>
    %125 = arith.addf %121, %124 : vector<1x128xf32>
    %126 = math.tanh %125 : vector<1x128xf32>
    %cst_28 = arith.constant 1.000000e+00 : f32
    %127 = vector.broadcast %cst_28 : f32 to vector<1x128xf32>
    %128 = arith.subf %127, %120 : vector<1x128xf32>
    %129 = arith.mulf %128, %126 : vector<1x128xf32>
    %130 = arith.mulf %120, %99 : vector<1x128xf32>
    %131 = arith.addf %129, %130 : vector<1x128xf32>
    %132 = arith.index_cast %c3_i32 : i32 to index
    %c0_29 = arith.constant 0 : index
    %133 = vector.load %arg5[%132, %c0_29] : memref<8x128xf32, #tpu.memory_space<vmem>>, vector<1x128xf32>
    tpu.vector_store %arg5[%132, %c0_29], %131 {strides = array<i32>} : memref<8x128xf32, #tpu.memory_space<vmem>>, vector<1x128xf32>,
    %c4_i32 = arith.constant 4 : i32
    %134 = arith.index_cast %c4_i32 : i32 to index
    %c0_30 = arith.constant 0 : index
    %135 = vector.load %arg1[%134, %c0_30] : memref<8x384xf32, #tpu.memory_space<vmem>>, vector<1x384xf32>
    %cst_31 = arith.constant dense<0.000000e+00> : vector<1x384xf32>
    %136 = tpu.matmul %131, %3, %cst_31 {dimension_numbers = #tpu.dot_dimension_numbers<[1], [0], [0], [1], [0, 0, 1, 1], [], []>} : vector<1x128xf32>, vector<128x384xf32>, vector<1x384xf32> -> vector<1x384xf32>
    %137 = vector.extract_strided_slice %135 {offsets = [0, 0], sizes = [1, 128], strides = [1, 1]} : vector<1x384xf32> to vector<1x128xf32>
    %138 = vector.extract_strided_slice %136 {offsets = [0, 0], sizes = [1, 128], strides = [1, 1]} : vector<1x384xf32> to vector<1x128xf32>
    %139 = arith.addf %137, %138 : vector<1x128xf32>
    %140 = arith.negf %139 : vector<1x128xf32>
    %141 = math.exp %140 : vector<1x128xf32>
    %cst_32 = arith.constant 1.000000e+00 : f32
    %142 = vector.broadcast %cst_32 : f32 to vector<1x128xf32>
    %143 = arith.addf %142, %141 : vector<1x128xf32>
    %144 = arith.divf %142, %143 : vector<1x128xf32>
    %145 = vector.extract_strided_slice %135 {offsets = [0, 128], sizes = [1, 128], strides = [1, 1]} : vector<1x384xf32> to vector<1x128xf32>
    %146 = vector.extract_strided_slice %136 {offsets = [0, 128], sizes = [1, 128], strides = [1, 1]} : vector<1x384xf32> to vector<1x128xf32>
    %147 = arith.addf %145, %146 : vector<1x128xf32>
    %148 = arith.negf %147 : vector<1x128xf32>
    %149 = math.exp %148 : vector<1x128xf32>
    %cst_33 = arith.constant 1.000000e+00 : f32
    %150 = vector.broadcast %cst_33 : f32 to vector<1x128xf32>
    %151 = arith.addf %150, %149 : vector<1x128xf32>
    %152 = arith.divf %150, %151 : vector<1x128xf32>
    %153 = vector.extract_strided_slice %135 {offsets = [0, 256], sizes = [1, 128], strides = [1, 1]} : vector<1x384xf32> to vector<1x128xf32>
    %154 = vector.extract_strided_slice %136 {offsets = [0, 256], sizes = [1, 128], strides = [1, 1]} : vector<1x384xf32> to vector<1x128xf32>
    %155 = arith.addf %154, %4 : vector<1x128xf32>
    %156 = arith.mulf %144, %155 : vector<1x128xf32>
    %157 = arith.addf %153, %156 : vector<1x128xf32>
    %158 = math.tanh %157 : vector<1x128xf32>
    %cst_34 = arith.constant 1.000000e+00 : f32
    %159 = vector.broadcast %cst_34 : f32 to vector<1x128xf32>
    %160 = arith.subf %159, %152 : vector<1x128xf32>
    %161 = arith.mulf %160, %158 : vector<1x128xf32>
    %162 = arith.mulf %152, %131 : vector<1x128xf32>
    %163 = arith.addf %161, %162 : vector<1x128xf32>
    %164 = arith.index_cast %c4_i32 : i32 to index
    %c0_35 = arith.constant 0 : index
    %165 = vector.load %arg5[%164, %c0_35] : memref<8x128xf32, #tpu.memory_space<vmem>>, vector<1x128xf32>
    tpu.vector_store %arg5[%164, %c0_35], %163 {strides = array<i32>} : memref<8x128xf32, #tpu.memory_space<vmem>>, vector<1x128xf32>,
    %c5_i32 = arith.constant 5 : i32
    %166 = arith.index_cast %c5_i32 : i32 to index
    %c0_36 = arith.constant 0 : index
    %167 = vector.load %arg1[%166, %c0_36] : memref<8x384xf32, #tpu.memory_space<vmem>>, vector<1x384xf32>
    %cst_37 = arith.constant dense<0.000000e+00> : vector<1x384xf32>
    %168 = tpu.matmul %163, %3, %cst_37 {dimension_numbers = #tpu.dot_dimension_numbers<[1], [0], [0], [1], [0, 0, 1, 1], [], []>} : vector<1x128xf32>, vector<128x384xf32>, vector<1x384xf32> -> vector<1x384xf32>
    %169 = vector.extract_strided_slice %167 {offsets = [0, 0], sizes = [1, 128], strides = [1, 1]} : vector<1x384xf32> to vector<1x128xf32>
    %170 = vector.extract_strided_slice %168 {offsets = [0, 0], sizes = [1, 128], strides = [1, 1]} : vector<1x384xf32> to vector<1x128xf32>
    %171 = arith.addf %169, %170 : vector<1x128xf32>
    %172 = arith.negf %171 : vector<1x128xf32>
    %173 = math.exp %172 : vector<1x128xf32>
    %cst_38 = arith.constant 1.000000e+00 : f32
    %174 = vector.broadcast %cst_38 : f32 to vector<1x128xf32>
    %175 = arith.addf %174, %173 : vector<1x128xf32>
    %176 = arith.divf %174, %175 : vector<1x128xf32>
    %177 = vector.extract_strided_slice %167 {offsets = [0, 128], sizes = [1, 128], strides = [1, 1]} : vector<1x384xf32> to vector<1x128xf32>
    %178 = vector.extract_strided_slice %168 {offsets = [0, 128], sizes = [1, 128], strides = [1, 1]} : vector<1x384xf32> to vector<1x128xf32>
    %179 = arith.addf %177, %178 : vector<1x128xf32>
    %180 = arith.negf %179 : vector<1x128xf32>
    %181 = math.exp %180 : vector<1x128xf32>
    %cst_39 = arith.constant 1.000000e+00 : f32
    %182 = vector.broadcast %cst_39 : f32 to vector<1x128xf32>
    %183 = arith.addf %182, %181 : vector<1x128xf32>
    %184 = arith.divf %182, %183 : vector<1x128xf32>
    %185 = vector.extract_strided_slice %167 {offsets = [0, 256], sizes = [1, 128], strides = [1, 1]} : vector<1x384xf32> to vector<1x128xf32>
    %186 = vector.extract_strided_slice %168 {offsets = [0, 256], sizes = [1, 128], strides = [1, 1]} : vector<1x384xf32> to vector<1x128xf32>
    %187 = arith.addf %186, %4 : vector<1x128xf32>
    %188 = arith.mulf %176, %187 : vector<1x128xf32>
    %189 = arith.addf %185, %188 : vector<1x128xf32>
    %190 = math.tanh %189 : vector<1x128xf32>
    %cst_40 = arith.constant 1.000000e+00 : f32
    %191 = vector.broadcast %cst_40 : f32 to vector<1x128xf32>
    %192 = arith.subf %191, %184 : vector<1x128xf32>
    %193 = arith.mulf %192, %190 : vector<1x128xf32>
    %194 = arith.mulf %184, %163 : vector<1x128xf32>
    %195 = arith.addf %193, %194 : vector<1x128xf32>
    %196 = arith.index_cast %c5_i32 : i32 to index
    %c0_41 = arith.constant 0 : index
    %197 = vector.load %arg5[%196, %c0_41] : memref<8x128xf32, #tpu.memory_space<vmem>>, vector<1x128xf32>
    tpu.vector_store %arg5[%196, %c0_41], %195 {strides = array<i32>} : memref<8x128xf32, #tpu.memory_space<vmem>>, vector<1x128xf32>,
    %c6_i32 = arith.constant 6 : i32
    %198 = arith.index_cast %c6_i32 : i32 to index
    %c0_42 = arith.constant 0 : index
    %199 = vector.load %arg1[%198, %c0_42] : memref<8x384xf32, #tpu.memory_space<vmem>>, vector<1x384xf32>
    %cst_43 = arith.constant dense<0.000000e+00> : vector<1x384xf32>
    %200 = tpu.matmul %195, %3, %cst_43 {dimension_numbers = #tpu.dot_dimension_numbers<[1], [0], [0], [1], [0, 0, 1, 1], [], []>} : vector<1x128xf32>, vector<128x384xf32>, vector<1x384xf32> -> vector<1x384xf32>
    %201 = vector.extract_strided_slice %199 {offsets = [0, 0], sizes = [1, 128], strides = [1, 1]} : vector<1x384xf32> to vector<1x128xf32>
    %202 = vector.extract_strided_slice %200 {offsets = [0, 0], sizes = [1, 128], strides = [1, 1]} : vector<1x384xf32> to vector<1x128xf32>
    %203 = arith.addf %201, %202 : vector<1x128xf32>
    %204 = arith.negf %203 : vector<1x128xf32>
    %205 = math.exp %204 : vector<1x128xf32>
    %cst_44 = arith.constant 1.000000e+00 : f32
    %206 = vector.broadcast %cst_44 : f32 to vector<1x128xf32>
    %207 = arith.addf %206, %205 : vector<1x128xf32>
    %208 = arith.divf %206, %207 : vector<1x128xf32>
    %209 = vector.extract_strided_slice %199 {offsets = [0, 128], sizes = [1, 128], strides = [1, 1]} : vector<1x384xf32> to vector<1x128xf32>
    %210 = vector.extract_strided_slice %200 {offsets = [0, 128], sizes = [1, 128], strides = [1, 1]} : vector<1x384xf32> to vector<1x128xf32>
    %211 = arith.addf %209, %210 : vector<1x128xf32>
    %212 = arith.negf %211 : vector<1x128xf32>
    %213 = math.exp %212 : vector<1x128xf32>
    %cst_45 = arith.constant 1.000000e+00 : f32
    %214 = vector.broadcast %cst_45 : f32 to vector<1x128xf32>
    %215 = arith.addf %214, %213 : vector<1x128xf32>
    %216 = arith.divf %214, %215 : vector<1x128xf32>
    %217 = vector.extract_strided_slice %199 {offsets = [0, 256], sizes = [1, 128], strides = [1, 1]} : vector<1x384xf32> to vector<1x128xf32>
    %218 = vector.extract_strided_slice %200 {offsets = [0, 256], sizes = [1, 128], strides = [1, 1]} : vector<1x384xf32> to vector<1x128xf32>
    %219 = arith.addf %218, %4 : vector<1x128xf32>
    %220 = arith.mulf %208, %219 : vector<1x128xf32>
    %221 = arith.addf %217, %220 : vector<1x128xf32>
    %222 = math.tanh %221 : vector<1x128xf32>
    %cst_46 = arith.constant 1.000000e+00 : f32
    %223 = vector.broadcast %cst_46 : f32 to vector<1x128xf32>
    %224 = arith.subf %223, %216 : vector<1x128xf32>
    %225 = arith.mulf %224, %222 : vector<1x128xf32>
    %226 = arith.mulf %216, %195 : vector<1x128xf32>
    %227 = arith.addf %225, %226 : vector<1x128xf32>
    %228 = arith.index_cast %c6_i32 : i32 to index
    %c0_47 = arith.constant 0 : index
    %229 = vector.load %arg5[%228, %c0_47] : memref<8x128xf32, #tpu.memory_space<vmem>>, vector<1x128xf32>
    tpu.vector_store %arg5[%228, %c0_47], %227 {strides = array<i32>} : memref<8x128xf32, #tpu.memory_space<vmem>>, vector<1x128xf32>,
    %c7_i32 = arith.constant 7 : i32
    %230 = arith.index_cast %c7_i32 : i32 to index
    %c0_48 = arith.constant 0 : index
    %231 = vector.load %arg1[%230, %c0_48] : memref<8x384xf32, #tpu.memory_space<vmem>>, vector<1x384xf32>
    %cst_49 = arith.constant dense<0.000000e+00> : vector<1x384xf32>
    %232 = tpu.matmul %227, %3, %cst_49 {dimension_numbers = #tpu.dot_dimension_numbers<[1], [0], [0], [1], [0, 0, 1, 1], [], []>} : vector<1x128xf32>, vector<128x384xf32>, vector<1x384xf32> -> vector<1x384xf32>
    %233 = vector.extract_strided_slice %231 {offsets = [0, 0], sizes = [1, 128], strides = [1, 1]} : vector<1x384xf32> to vector<1x128xf32>
    %234 = vector.extract_strided_slice %232 {offsets = [0, 0], sizes = [1, 128], strides = [1, 1]} : vector<1x384xf32> to vector<1x128xf32>
    %235 = arith.addf %233, %234 : vector<1x128xf32>
    %236 = arith.negf %235 : vector<1x128xf32>
    %237 = math.exp %236 : vector<1x128xf32>
    %cst_50 = arith.constant 1.000000e+00 : f32
    %238 = vector.broadcast %cst_50 : f32 to vector<1x128xf32>
    %239 = arith.addf %238, %237 : vector<1x128xf32>
    %240 = arith.divf %238, %239 : vector<1x128xf32>
    %241 = vector.extract_strided_slice %231 {offsets = [0, 128], sizes = [1, 128], strides = [1, 1]} : vector<1x384xf32> to vector<1x128xf32>
    %242 = vector.extract_strided_slice %232 {offsets = [0, 128], sizes = [1, 128], strides = [1, 1]} : vector<1x384xf32> to vector<1x128xf32>
    %243 = arith.addf %241, %242 : vector<1x128xf32>
    %244 = arith.negf %243 : vector<1x128xf32>
    %245 = math.exp %244 : vector<1x128xf32>
    %cst_51 = arith.constant 1.000000e+00 : f32
    %246 = vector.broadcast %cst_51 : f32 to vector<1x128xf32>
    %247 = arith.addf %246, %245 : vector<1x128xf32>
    %248 = arith.divf %246, %247 : vector<1x128xf32>
    %249 = vector.extract_strided_slice %231 {offsets = [0, 256], sizes = [1, 128], strides = [1, 1]} : vector<1x384xf32> to vector<1x128xf32>
    %250 = vector.extract_strided_slice %232 {offsets = [0, 256], sizes = [1, 128], strides = [1, 1]} : vector<1x384xf32> to vector<1x128xf32>
    %251 = arith.addf %250, %4 : vector<1x128xf32>
    %252 = arith.mulf %240, %251 : vector<1x128xf32>
    %253 = arith.addf %249, %252 : vector<1x128xf32>
    %254 = math.tanh %253 : vector<1x128xf32>
    %cst_52 = arith.constant 1.000000e+00 : f32
    %255 = vector.broadcast %cst_52 : f32 to vector<1x128xf32>
    %256 = arith.subf %255, %248 : vector<1x128xf32>
    %257 = arith.mulf %256, %254 : vector<1x128xf32>
    %258 = arith.mulf %248, %227 : vector<1x128xf32>
    %259 = arith.addf %257, %258 : vector<1x128xf32>
    %260 = arith.index_cast %c7_i32 : i32 to index
    %c0_53 = arith.constant 0 : index
    %261 = vector.load %arg5[%260, %c0_53] : memref<8x128xf32, #tpu.memory_space<vmem>>, vector<1x128xf32>
    tpu.vector_store %arg5[%260, %c0_53], %259 {strides = array<i32>} : memref<8x128xf32, #tpu.memory_space<vmem>>, vector<1x128xf32>,
    %c8_i32 = arith.constant 8 : i32
    %c0_54 = arith.constant 0 : index
    %c0_55 = arith.constant 0 : index
    %262 = vector.load %arg6[%c0_54, %c0_55] : memref<1x128xf32, #tpu.memory_space<vmem>>, vector<1x128xf32>
    tpu.vector_store %arg6[%c0_54, %c0_55], %259 {strides = array<i32>} : memref<1x128xf32, #tpu.memory_space<vmem>>, vector<1x128xf32>,
    return
  }
  func.func @transform_0(%arg0: i32) -> (i32, i32) {
    %c0_i32 = arith.constant 0 : i32
    %c0_i32_0 = arith.constant 0 : i32
    return %arg0, %c0_i32 : i32, i32
  }
  func.func @transform_1(%arg0: i32) -> (i32, i32) {
    %c0_i32 = arith.constant 0 : i32
    %c0_i32_0 = arith.constant 0 : i32
    %c0_i32_1 = arith.constant 0 : i32
    return %c0_i32, %c0_i32_0 : i32, i32
  }
  func.func @transform_2(%arg0: i32) -> (i32, i32) {
    %c0_i32 = arith.constant 0 : i32
    %c0_i32_0 = arith.constant 0 : i32
    %c0_i32_1 = arith.constant 0 : i32
    return %c0_i32, %c0_i32_0 : i32, i32
  }
  func.func @transform_3(%arg0: i32) -> (i32, i32) {
    %c0_i32 = arith.constant 0 : i32
    %c0_i32_0 = arith.constant 0 : i32
    %c0_i32_1 = arith.constant 0 : i32
    return %c0_i32, %c0_i32_0 : i32, i32
  }
  func.func @transform_4(%arg0: i32) -> (i32, i32) {
    %c0_i32 = arith.constant 0 : i32
    %c0_i32_0 = arith.constant 0 : i32
    return %arg0, %c0_i32 : i32, i32
  }
  func.func @transform_5(%arg0: i32) -> (i32, i32) {
    %c0_i32 = arith.constant 0 : i32
    %c0_i32_0 = arith.constant 0 : i32
    %c0_i32_1 = arith.constant 0 : i32
    return %c0_i32, %c0_i32_0 : i32, i32
  }
}

</mosaic_0001>

<llo_original>
// kernel: tpu_custom_call.1
$region0: #{tpu_custom_call.1}
  #allocation0 [shape = 'u32[]', space=smem, size = 0x4, offset = 0x4, fixed_abs, tag = 'smem constant byte address 0x4 - core index']
  #allocation1 [shape = 'u32[72,128]{1,0:T(1,128)}', space=vmem, size = 0x9000, scoped, tag = 'internal scratch']
  %s0 = inlined_call_operand.hbm [shape: f32[16,384], index: 0, kind: input, shape index: {}]
  %s1 = inlined_call_operand.hbm [shape: f32[1,128], index: 1, kind: input, shape index: {}]
  %s2 = inlined_call_operand.hbm [shape: f32[128,384], index: 2, kind: input, shape index: {}]
  %s3 = inlined_call_operand.vmem [shape: f32[1,128], index: 3, kind: input, shape index: {}]
  %s4 = inlined_call_operand.hbm [shape: f32[16,128], index: 4, kind: output, shape index: {0}]
  %s5 = inlined_call_operand.hbm [shape: f32[1,128], index: 5, kind: output, shape index: {1}]
  %6 = xla_tuple %s4, %s5
  %s7 = sld [smem:[#allocation0]]
  $region73: #{tpu_custom_call.1} parent=0
    _
  %s9 = ssub.s32 1, %s7
  %s10 = scalar_select 0, %s9, %s7
  $region1: #{tpu_custom_call.1} parent=0
    #allocation2 [shape = 'u8[24576]{0}', space=vmem, size = 0x6000, scoped, tag = 'input window, operand 0']
    #allocation3 [shape = 's32[2]{0}', space=sflag, size = 0x8, scoped, tag = 'scoped memory for tpu_custom_call.1']
    #allocation4 [shape = 's32[2]{0}', space=sflag, size = 0x8, scoped, tag = 'scoped memory for tpu_custom_call.1']
    #allocation5 [shape = 'u8[512]{0}', space=vmem, size = 0x400, scoped, tag = 'input window, operand 1, single buffered']
    #allocation6 [shape = 's32[1]{0}', space=sflag, size = 0x4, scoped, tag = 'scoped memory for tpu_custom_call.1']
    #allocation7 [shape = 'u8[196608]{0}', space=vmem, size = 0x30000, scoped, tag = 'input window, operand 2, single buffered']
    #allocation8 [shape = 'u8[8192]{0}', space=vmem, size = 0x2000, scoped, tag = 'output window, operand 0']
    #allocation9 [shape = 'u8[512]{0}', space=vmem, size = 0x400, scoped, tag = 'output window, operand 1, single buffered']
    #allocation10 [shape = 's32[1]{0}', space=sflag, size = 0x4, scoped, tag = 'scoped memory for tpu_custom_call.1']
    %11 = vsyncpa [#allocation3], 0
    %s12 = scalar_lea.sflag [#allocation3], 1
    %13 = vsyncpa %s12, 0
    %14 = vsyncpa [#allocation6], 0
    %15 = vsyncpa [#allocation4], 0
    %s16 = scalar_lea.sflag [#allocation4], 1
    %17 = vsyncpa %s16, 0
    %18 = vsyncpa [#allocation10], 0
    loop: start=0, step=1, limit=4
    $region2: #{tpu_custom_call.1} parent=1 // loop_pre_header
      _
    $region3: #{tpu_custom_call.1} parent=1 // loop_header
      %s20 = sphi 0, %s24
      %p21 = scmp.ge.s32.totalorder %s20, 4
      %s30 = sphi 0, %s32
      %s33 = sphi 0, %s30
      %s34 = sphi 0, %s33
      %s50 = sphi 0, %s34
      %s54 = sphi 0, %s54
      %s56 = sphi 0, %s54
      %s57 = sphi 0, %s56
      %s71 = sphi 0, %s57
      %s75 = sphi 0, %s75
      %s77 = sphi 0, %s75
      %s78 = sphi 0, %s77
      %s92 = sphi 0, %s78
      %s96 = sphi 0, %s96
      %s98 = sphi 0, %s96
      %s99 = sphi 0, %s98
      %s113 = sphi 0, %s99
      %s119 = sphi 0, %s121
      %s122 = sphi 0, %s119
      %s123 = sphi 0, %s122
      %s139 = sphi 0, %s123
      %s143 = sphi 0, %s143
      %s145 = sphi 0, %s143
      %s146 = sphi 0, %s145
      %s160 = sphi 0, %s146
    $region4: #{tpu_custom_call.1} parent=1 // loop_header_branch
      %23 = sbr.rel (%p21) target = $region8
    $region5: #{tpu_custom_call.1} parent=1 // loop_body
      %s25 = ssub.s32 %s20, 1
      %s26 = ssub.s32 %s20, 2
      %s27 = sadd.s32 %s20, 1
      %s28 = ssub.s32 %s20, %s27
      %p29 = scmp.eq.s32.totalorder %s28, 0
      %s31 = sadd.s32 %s30, 1
      %s32 = scalar_select %p29, %s30, %s31
      %p35 = pneg %p29
      %p36 = scmp.eq.s32.totalorder %s20, 1
      %p37 = por %p35, %p36
      %p38 = scmp.ne.s32.totalorder %s30, %s33
      %p39 = scmp.eq.s32.totalorder %s20, 0
      %p40 = por %p38, %p39
      %p41 = scmp.ne.s32.totalorder %s30, %s33
      %p42 = scmp.eq.s32.totalorder %s25, 1
      %p43 = por %p41, %p42
      %p44 = scmp.ne.s32.totalorder %s33, %s34
      %p45 = scmp.eq.s32.totalorder %s25, 0
      %p46 = por %p44, %p45
      %p47 = scmp.ne.s32.totalorder %s33, %s34
      %p48 = scmp.eq.s32.totalorder %s26, 1
      %p49 = por %p47, %p48
      %p51 = scmp.ne.s32.totalorder %s34, %s50
      %p52 = scmp.eq.s32.totalorder %s26, 0
      %p53 = por %p51, %p52
      %s55 = sadd.s32 %s54, 1
      %p58 = scmp.eq.s32.totalorder %s20, 1
      %p59 = scmp.ne.s32.totalorder %s54, %s56
      %p60 = scmp.eq.s32.totalorder %s20, 0
      %p61 = por %p59, %p60
      %p62 = scmp.ne.s32.totalorder %s54, %s56
      %p63 = scmp.eq.s32.totalorder %s25, 1
      %p64 = por %p62, %p63
      %p65 = scmp.ne.s32.totalorder %s56, %s57
      %p66 = scmp.eq.s32.totalorder %s25, 0
      %p67 = por %p65, %p66
      %p68 = scmp.ne.s32.totalorder %s56, %s57
      %p69 = scmp.eq.s32.totalorder %s26, 1
      %p70 = por %p68, %p69
      %p72 = scmp.ne.s32.totalorder %s57, %s71
      %p73 = scmp.eq.s32.totalorder %s26, 0
      %p74 = por %p72, %p73
      %s76 = sadd.s32 %s75, 1
      %p79 = scmp.eq.s32.totalorder %s20, 1
      %p80 = scmp.ne.s32.totalorder %s75, %s77
      %p81 = scmp.eq.s32.totalorder %s20, 0
      %p82 = por %p80, %p81
      %p83 = scmp.ne.s32.totalorder %s75, %s77
      %p84 = scmp.eq.s32.totalorder %s25, 1
      %p85 = por %p83, %p84
      %p86 = scmp.ne.s32.totalorder %s77, %s78
      %p87 = scmp.eq.s32.totalorder %s25, 0
      %p88 = por %p86, %p87
      %p89 = scmp.ne.s32.totalorder %s77, %s78
      %p90 = scmp.eq.s32.totalorder %s26, 1
      %p91 = por %p89, %p90
      %p93 = scmp.ne.s32.totalorder %s78, %s92
      %p94 = scmp.eq.s32.totalorder %s26, 0
      %p95 = por %p93, %p94
      %s97 = sadd.s32 %s96, 1
      %p100 = scmp.eq.s32.totalorder %s20, 1
      %p101 = scmp.ne.s32.totalorder %s96, %s98
      %p102 = scmp.eq.s32.totalorder %s20, 0
      %p103 = por %p101, %p102
      %p104 = scmp.ne.s32.totalorder %s96, %s98
      %p105 = scmp.eq.s32.totalorder %s25, 1
      %p106 = por %p104, %p105
      %p107 = scmp.ne.s32.totalorder %s98, %s99
      %p108 = scmp.eq.s32.totalorder %s25, 0
      %p109 = por %p107, %p108
      %p110 = scmp.ne.s32.totalorder %s98, %s99
      %p111 = scmp.eq.s32.totalorder %s26, 1
      %p112 = por %p110, %p111
      %p114 = scmp.ne.s32.totalorder %s99, %s113
      %p115 = scmp.eq.s32.totalorder %s26, 0
      %p116 = por %p114, %p115
      %s117 = ssub.s32 %s20, %s27
      %p118 = scmp.eq.s32.totalorder %s117, 0
      %s120 = sadd.s32 %s119, 1
      %s121 = scalar_select %p118, %s119, %s120
      %p124 = pneg %p118
      %p125 = scmp.eq.s32.totalorder %s20, 1
      %p126 = por %p124, %p125
      %p127 = scmp.ne.s32.totalorder %s119, %s122
      %p128 = scmp.eq.s32.totalorder %s20, 0
      %p129 = por %p127, %p128
      %p130 = scmp.ne.s32.totalorder %s119, %s122
      %p131 = scmp.eq.s32.totalorder %s25, 1
      %p132 = por %p130, %p131
      %p133 = scmp.ne.s32.totalorder %s122, %s123
      %p134 = scmp.eq.s32.totalorder %s25, 0
      %p135 = por %p133, %p134
      %p136 = scmp.ne.s32.totalorder %s122, %s123
      %p137 = scmp.eq.s32.totalorder %s26, 1
      %p138 = por %p136, %p137
      %p140 = scmp.ne.s32.totalorder %s123, %s139
      %p141 = scmp.eq.s32.totalorder %s26, 0
      %p142 = por %p140, %p141
      %s144 = sadd.s32 %s143, 1
      %p147 = scmp.eq.s32.totalorder %s20, 1
      %p148 = scmp.ne.s32.totalorder %s143, %s145
      %p149 = scmp.eq.s32.totalorder %s20, 0
      %p150 = por %p148, %p149
      %p151 = scmp.ne.s32.totalorder %s143, %s145
      %p152 = scmp.eq.s32.totalorder %s25, 1
      %p153 = por %p151, %p152
      %p154 = scmp.ne.s32.totalorder %s145, %s146
      %p155 = scmp.eq.s32.totalorder %s25, 0
      %p156 = por %p154, %p155
      %p157 = scmp.ne.s32.totalorder %s145, %s146
      %p158 = scmp.eq.s32.totalorder %s26, 1
      %p159 = por %p157, %p158
      %p161 = scmp.ne.s32.totalorder %s146, %s160
      %p162 = scmp.eq.s32.totalorder %s26, 0
      %p163 = por %p161, %p162
      %p164 = scmp.le.s32.totalorder 1, %s20
      %p165 = scmp.lt.s32.totalorder %s20, 3
      %p166 = pnand %p164, %p165
      %p167 = pneg %p166
      // Predicated region
      $region9: #{tpu_custom_call.1} parent=5 // pred_check
        _
      $region10: #{tpu_custom_call.1} parent=5 // pred_check_branch
        %169 = sbr.rel (%p166) target = $region12
      $region11: #{tpu_custom_call.1} parent=5 // pred_region
        %s170 = ssub.s32 %s20, 1
        // Predicated region
        $region13: #{tpu_custom_call.1} parent=11 // pred_check
          %p171 = pneg %p67
        $region14: #{tpu_custom_call.1} parent=11 // pred_check_branch
          %173 = sbr.rel (%p171) target = $region16
        $region15: #{tpu_custom_call.1} parent=11 // pred_region
          %175 = vsyncadd [#allocation6], 0
          %s177 = sshll.u32 %s1, 4
          %s178 = int_to_ptr.hbm [resolvable:$true] %s177
          %s179 = sshll.u32 [#allocation5], 4
          %s180 = int_to_ptr.vmem [resolvable:$true] %s179
          %182 = dma.hbm_to_vmem [thread:$0]  %s178, 16, %s180, [#allocation6]
        $region16: #{tpu_custom_call.1} parent=11 // pred_fallthru
          _
        // Predicated region
        $region17: #{tpu_custom_call.1} parent=11 // pred_check
          %p183 = pneg %p88
        $region18: #{tpu_custom_call.1} parent=11 // pred_check_branch
          %185 = sbr.rel (%p183) target = $region20
        $region19: #{tpu_custom_call.1} parent=11 // pred_region
          %187 = vsyncadd [#allocation6], 0
          %s188 = sshll.u32 %s2, 4
          %s189 = int_to_ptr.hbm [resolvable:$true] %s188
          %s190 = sshll.u32 [#allocation7], 4
          %s191 = int_to_ptr.vmem [resolvable:$true] %s190
          %196 = dma.hbm_to_vmem [thread:$0]  %s189, 6144, %s191, [#allocation6], 384, 384, 24
        $region20: #{tpu_custom_call.1} parent=11 // pred_fallthru
          _
        // Predicated region
        $region21: #{tpu_custom_call.1} parent=11 // pred_check
          %p197 = pneg %p109
        $region22: #{tpu_custom_call.1} parent=11 // pred_check_branch
          %199 = sbr.rel (%p197) target = $region24
        $region23: #{tpu_custom_call.1} parent=11 // pred_region
          _
        $region24: #{tpu_custom_call.1} parent=11 // pred_fallthru
          _
      $region12: #{tpu_custom_call.1} parent=5 // pred_fallthru
        _
      %p200 = scmp.lt.s32.totalorder %s20, 2
      // Predicated region
      $region25: #{tpu_custom_call.1} parent=5 // pred_check
        %p201 = pneg %p200
      $region26: #{tpu_custom_call.1} parent=5 // pred_check_branch
        %203 = sbr.rel (%p201) target = $region28
      $region27: #{tpu_custom_call.1} parent=5 // pred_region
        // Predicated region
        $region29: #{tpu_custom_call.1} parent=27 // pred_check
          %p204 = pneg %p40
        $region30: #{tpu_custom_call.1} parent=27 // pred_check_branch
          %206 = sbr.rel (%p204) target = $region32
        $region31: #{tpu_custom_call.1} parent=27 // pred_region
          %s207 = sand.u32 %s30, 1
          %s208 = scalar_lea.sflag [#allocation3], %s207
          %s209 = sand.u32 %s30, 1
          %s210 = smul.addr %s209, 24
          %s211 = scalar_lea.vmem [#allocation2], %s210
          %213 = vsyncadd %s208, 0
          %s214 = smul.addr %s20, 3
          %s215 = smul.addr %s214, 8
          %s216 = scalar_lea.hbm %s0, %s215
          %s218 = sshll.u32 %s216, 4
          %s219 = int_to_ptr.hbm [resolvable:$true] %s218
          %s220 = sshll.u32 %s211, 4
          %s221 = int_to_ptr.vmem [resolvable:$true] %s220
          %223 = dma.hbm_to_vmem [thread:$0]  %s219, 384, %s221, %s208
        $region32: #{tpu_custom_call.1} parent=27 // pred_fallthru
          _
      $region28: #{tpu_custom_call.1} parent=5 // pred_fallthru
        _
      %p224 = scmp.le.s32.totalorder 1, %s20
      %p225 = scmp.lt.s32.totalorder %s20, 3
      %p226 = pnand %p224, %p225
      %p227 = pneg %p226
      // Predicated region
      $region33: #{tpu_custom_call.1} parent=5 // pred_check
        _
      $region34: #{tpu_custom_call.1} parent=5 // pred_check_branch
        %229 = sbr.rel (%p226) target = $region36
      $region35: #{tpu_custom_call.1} parent=5 // pred_region
        %s230 = ssub.s32 %s20, 1
        %s231 = sand.u32 %s33, 1
        %s232 = scalar_lea.sflag [#allocation3], %s231
        %s233 = sand.u32 %s33, 1
        %s234 = smul.addr %s233, 24
        %s235 = scalar_lea.vmem [#allocation2], %s234
        // Predicated region
        $region37: #{tpu_custom_call.1} parent=35 // pred_check
          %p236 = pneg %p46
        $region38: #{tpu_custom_call.1} parent=35 // pred_check_branch
          %238 = sbr.rel (%p236) target = $region40
        $region39: #{tpu_custom_call.1} parent=35 // pred_region
          %240 = dma.done %s232, 384
        $region40: #{tpu_custom_call.1} parent=35 // pred_fallthru
          _
        // Predicated region
        $region41: #{tpu_custom_call.1} parent=35 // pred_check
          %p241 = pneg %p67
        $region42: #{tpu_custom_call.1} parent=35 // pred_check_branch
          %243 = sbr.rel (%p241) target = $region44
        $region43: #{tpu_custom_call.1} parent=35 // pred_region
          %245 = dma.done [#allocation6], 16
        $region44: #{tpu_custom_call.1} parent=35 // pred_fallthru
          _
        // Predicated region
        $region45: #{tpu_custom_call.1} parent=35 // pred_check
          %p246 = pneg %p88
        $region46: #{tpu_custom_call.1} parent=35 // pred_check_branch
          %248 = sbr.rel (%p246) target = $region48
        $region47: #{tpu_custom_call.1} parent=35 // pred_region
          %250 = dma.done [#allocation6], 6144
        $region48: #{tpu_custom_call.1} parent=35 // pred_fallthru
          _
        %s251 = sand.u32 %s33, 1
        %s252 = scalar_lea.sflag [#allocation3], %s251
        %s253 = sand.u32 %s33, 1
        %s254 = smul.addr %s253, 24
        %s255 = scalar_lea.vmem [#allocation2], %s254
        %p256 = pneg %p46
        %p257 = pneg %p43
        %p258 = pneg %p67
        %p259 = pneg %p64
        %p260 = pneg %p88
        %p261 = pneg %p85
        %p262 = pneg %p109
        %p263 = pneg %p106
        %p264 = pneg %p135
        %p265 = pneg %p132
        %s266 = sand.u32 %s122, 1
        %s267 = scalar_lea.sflag [#allocation4], %s266
        %s268 = sand.u32 %s122, 1
        %s269 = smul.addr %s268, 8
        %s270 = scalar_lea.vmem [#allocation8], %s269
        %p271 = pneg %p156
        %p272 = pneg %p153
        %p273 = scmp.eq.s32.totalorder %s25, 0
        // Predicated region
        $region49: #{tpu_custom_call.1} parent=35 // pred_check
          %p274 = pneg %p273
        $region50: #{tpu_custom_call.1} parent=35 // pred_check_branch
          %276 = sbr.rel (%p274) target = $region52
        $region51: #{tpu_custom_call.1} parent=35 // pred_region
          %v277 = vld [vmem:[#allocation5] sm:$0x1]
          %278 = vst [vmem:[#allocation9] sm:$0x1] %v277
        $region52: #{tpu_custom_call.1} parent=35 // pred_fallthru
          _
        %v279 = vld [vmem:[#allocation7] sm:$0xff]
        %v280 = vld [vmem:[#allocation7 + $0x8] sm:$0xff]
        %v281 = vld [vmem:[#allocation7 + $0x10] sm:$0xff]
        %v282 = vld [vmem:[#allocation7 + $0x18] sm:$0xff]
        %v283 = vld [vmem:[#allocation7 + $0x20] sm:$0xff]
        %v284 = vld [vmem:[#allocation7 + $0x28] sm:$0xff]
        %v285 = vld [vmem:[#allocation7 + $0x30] sm:$0xff]
        %v286 = vld [vmem:[#allocation7 + $0x38] sm:$0xff]
        %v287 = vld [vmem:[#allocation7 + $0x40] sm:$0xff]
        %v288 = vld [vmem:[#allocation7 + $0x48] sm:$0xff]
        %v289 = vld [vmem:[#allocation7 + $0x50] sm:$0xff]
        %v290 = vld [vmem:[#allocation7 + $0x58] sm:$0xff]
        %v291 = vld [vmem:[#allocation7 + $0x60] sm:$0xff]
        %v292 = vld [vmem:[#allocation7 + $0x68] sm:$0xff]
        %v293 = vld [vmem:[#allocation7 + $0x70] sm:$0xff]
        %v294 = vld [vmem:[#allocation7 + $0x78] sm:$0xff]
        %v295 = vld [vmem:[#allocation7 + $0x80] sm:$0xff]
        %v296 = vld [vmem:[#allocation7 + $0x88] sm:$0xff]
        %v297 = vld [vmem:[#allocation7 + $0x90] sm:$0xff]
        %v298 = vld [vmem:[#allocation7 + $0x98] sm:$0xff]
        %v299 = vld [vmem:[#allocation7 + $0xa0] sm:$0xff]
        %v300 = vld [vmem:[#allocation7 + $0xa8] sm:$0xff]
        %v301 = vld [vmem:[#allocation7 + $0xb0] sm:$0xff]
        %v302 = vld [vmem:[#allocation7 + $0xb8] sm:$0xff]
        %v303 = vld [vmem:[#allocation7 + $0xc0] sm:$0xff]
        %v304 = vld [vmem:[#allocation7 + $0xc8] sm:$0xff]
        %v305 = vld [vmem:[#allocation7 + $0xd0] sm:$0xff]
        %v306 = vld [vmem:[#allocation7 + $0xd8] sm:$0xff]
        %v307 = vld [vmem:[#allocation7 + $0xe0] sm:$0xff]
        %v308 = vld [vmem:[#allocation7 + $0xe8] sm:$0xff]
        %v309 = vld [vmem:[#allocation7 + $0xf0] sm:$0xff]
        %v310 = vld [vmem:[#allocation7 + $0xf8] sm:$0xff]
        %v311 = vld [vmem:[#allocation7 + $0x100] sm:$0xff]
        %v312 = vld [vmem:[#allocation7 + $0x108] sm:$0xff]
        %v313 = vld [vmem:[#allocation7 + $0x110] sm:$0xff]
        %v314 = vld [vmem:[#allocation7 + $0x118] sm:$0xff]
        %v315 = vld [vmem:[#allocation7 + $0x120] sm:$0xff]
        %v316 = vld [vmem:[#allocation7 + $0x128] sm:$0xff]
        %v317 = vld [vmem:[#allocation7 + $0x130] sm:$0xff]
        %v318 = vld [vmem:[#allocation7 + $0x138] sm:$0xff]
        %v319 = vld [vmem:[#allocation7 + $0x140] sm:$0xff]
        %v320 = vld [vmem:[#allocation7 + $0x148] sm:$0xff]
        %v321 = vld [vmem:[#allocation7 + $0x150] sm:$0xff]
        %v322 = vld [vmem:[#allocation7 + $0x158] sm:$0xff]
        %v323 = vld [vmem:[#allocation7 + $0x160] sm:$0xff]
        %v324 = vld [vmem:[#allocation7 + $0x168] sm:$0xff]
        %v325 = vld [vmem:[#allocation7 + $0x170] sm:$0xff]
        %v326 = vld [vmem:[#allocation7 + $0x178] sm:$0xff]
        %v327 = vld [vmem:[%s3] sm:$0x1]
        %v328 = vld [vmem:[#allocation9] sm:$0x1]
        %v329 = vld [vmem:[%s235] ss:$8 sm:$0x7]
        %330 = vmatpush.msra.mxu0 %v324
        %331 = vmatpush.msra.mxu0 %v321
        %332 = vmatpush.msra.mxu0 %v318
        %333 = vmatpush.msra.mxu0 %v315
        %334 = vmatpush.msra.mxu0 %v312
        %335 = vmatpush.msra.mxu0 %v309
        %336 = vmatpush.msra.mxu0 %v306
        %337 = vmatpush.msra.mxu0 %v303
        %338 = vmatpush.msra.mxu0 %v300
        %339 = vmatpush.msra.mxu0 %v297
        %340 = vmatpush.msra.mxu0 %v294
        %341 = vmatpush.msra.mxu0 %v291
        %342 = vmatpush.msra.mxu0 %v288
        %343 = vmatpush.msra.mxu0 %v285
        %344 = vmatpush.msra.mxu0 %v282
        %345 = vmatpush.msra.mxu0 %v279
        %346 = vmatmul.f32.gmra.mxu0 %v328
        %v347 = vpop.f32.mrf.mxu0
        %v348 = vadd.f32 0.0, %v347
        %349 = vdwg.mxu0
        %350 = vmatpush.msra.mxu0 %v325
        %351 = vmatpush.msra.mxu0 %v322
        %352 = vmatpush.msra.mxu0 %v319
        %353 = vmatpush.msra.mxu0 %v316
        %354 = vmatpush.msra.mxu0 %v313
        %355 = vmatpush.msra.mxu0 %v310
        %356 = vmatpush.msra.mxu0 %v307
        %357 = vmatpush.msra.mxu0 %v304
        %358 = vmatpush.msra.mxu0 %v301
        %359 = vmatpush.msra.mxu0 %v298
        %360 = vmatpush.msra.mxu0 %v295
        %361 = vmatpush.msra.mxu0 %v292
        %362 = vmatpush.msra.mxu0 %v289
        %363 = vmatpush.msra.mxu0 %v286
        %364 = vmatpush.msra.mxu0 %v283
        %365 = vmatpush.msra.mxu0 %v280
        %366 = vmatmul.f32.gmra.mxu0 %v328
        %v367 = vpop.f32.mrf.mxu0
        %v368 = vadd.f32 0.0, %v367
        %369 = vdwg.mxu0
        %370 = vmatpush.msra.mxu0 %v326
        %371 = vmatpush.msra.mxu0 %v323
        %372 = vmatpush.msra.mxu0 %v320
        %373 = vmatpush.msra.mxu0 %v317
        %374 = vmatpush.msra.mxu0 %v314
        %375 = vmatpush.msra.mxu0 %v311
        %376 = vmatpush.msra.mxu0 %v308
        %377 = vmatpush.msra.mxu0 %v305
        %378 = vmatpush.msra.mxu0 %v302
        %379 = vmatpush.msra.mxu0 %v299
        %380 = vmatpush.msra.mxu0 %v296
        %381 = vmatpush.msra.mxu0 %v293
        %382 = vmatpush.msra.mxu0 %v290
        %383 = vmatpush.msra.mxu0 %v287
        %384 = vmatpush.msra.mxu0 %v284
        %385 = vmatpush.msra.mxu0 %v281
        %386 = vmatmul.f32.gmra.mxu0 %v328
        %v387 = vpop.f32.mrf.mxu0
        %v388 = vadd.f32 0.0, %v387
        %389 = vdwg.mxu0
        %v390 = vadd.f32 %v329, %v348
        %v391 = vxor.u32 %v390, 2147483648
        %v392 = vmul.f32 %v391, 1.442695
        %v393 = vpow.pop %v392
        %v394 = vadd.f32 %v393, 1.0
        %v395 = vrcp.pop %v394
        %v396 = vmul.f32 %v394, %v395
        %v397 = vsub.f32 1.0, %v396
        %v398 = vmul.f32 %v395, %v397
        %v399 = vadd.f32 %v395, %v398
        %vm400 = vweird.f32 %v394
        %vm401 = vweird.f32 %v395
        %vm402 = vmor %vm400, %vm401
        %v403 = vsel %vm402, %v395, %v399
        %v404 = vand.u32 2147483647, %v394
        %vm405 = vcmp.eq.f32.partialorder %v404, 8.507059e+37
        %v406 = vand.u32 %v394, 2147483648
        %v407 = vor.u32 1.1754944e-38, %v406
        %v408 = vsel %vm405, %v407, %v403
        %v409 = vmul.f32 1.0, %v408
        %v411 = vrot.slane %v329, 1
        %v413 = vadd.f32 %v411, %v368
        %v414 = vxor.u32 %v413, 2147483648
        %v415 = vmul.f32 %v414, 1.442695
        %v416 = vpow.pop %v415
        %v417 = vadd.f32 %v416, 1.0
        %v418 = vrcp.pop %v417
        %v419 = vmul.f32 %v417, %v418
        %v420 = vsub.f32 1.0, %v419
        %v421 = vmul.f32 %v418, %v420
        %v422 = vadd.f32 %v418, %v421
        %vm423 = vweird.f32 %v417
        %vm424 = vweird.f32 %v418
        %vm425 = vmor %vm423, %vm424
        %v426 = vsel %vm425, %v418, %v422
        %v427 = vand.u32 2147483647, %v417
        %vm428 = vcmp.eq.f32.partialorder %v427, 8.507059e+37
        %v429 = vand.u32 %v417, 2147483648
        %v430 = vor.u32 1.1754944e-38, %v429
        %v431 = vsel %vm428, %v430, %v426
        %v432 = vmul.f32 1.0, %v431
        %v433 = vadd.f32 %v388, %v327
        %v434 = vmul.f32 %v409, %v433
        %v435 = vrot.slane %v329, 2
        %v437 = vadd.f32 %v435, %v434
        %v438 = vtanh.pop %v437
        %v439 = vsub.f32 1.0, %v432
        %v440 = vmul.f32 %v439, %v438
        %v441 = vmul.f32 %v432, %v328
        %v442 = vadd.f32 %v440, %v441
        %443 = vst [vmem:[%s270] sm:$0x1] %v442
        %s444 = scalar_lea.vmem %s235, 1 [#allocation2]
        %v445 = vld [vmem:[%s444] ss:$8 sm:$0x7]
        %446 = vmatpush.msra.mxu0 %v324
        %447 = vmatpush.msra.mxu0 %v321
        %448 = vmatpush.msra.mxu0 %v318
        %449 = vmatpush.msra.mxu0 %v315
        %450 = vmatpush.msra.mxu0 %v312
        %451 = vmatpush.msra.mxu0 %v309
        %452 = vmatpush.msra.mxu0 %v306
        %453 = vmatpush.msra.mxu0 %v303
        %454 = vmatpush.msra.mxu0 %v300
        %455 = vmatpush.msra.mxu0 %v297
        %456 = vmatpush.msra.mxu0 %v294
        %457 = vmatpush.msra.mxu0 %v291
        %458 = vmatpush.msra.mxu0 %v288
        %459 = vmatpush.msra.mxu0 %v285
        %460 = vmatpush.msra.mxu0 %v282
        %461 = vmatpush.msra.mxu0 %v279
        %462 = vmatmul.f32.gmra.mxu0 %v442
        %v463 = vpop.f32.mrf.mxu0
        %v464 = vadd.f32 0.0, %v463
        %465 = vdwg.mxu0
        %466 = vmatpush.msra.mxu0 %v325
        %467 = vmatpush.msra.mxu0 %v322
        %468 = vmatpush.msra.mxu0 %v319
        %469 = vmatpush.msra.mxu0 %v316
        %470 = vmatpush.msra.mxu0 %v313
        %471 = vmatpush.msra.mxu0 %v310
        %472 = vmatpush.msra.mxu0 %v307
        %473 = vmatpush.msra.mxu0 %v304
        %474 = vmatpush.msra.mxu0 %v301
        %475 = vmatpush.msra.mxu0 %v298
        %476 = vmatpush.msra.mxu0 %v295
        %477 = vmatpush.msra.mxu0 %v292
        %478 = vmatpush.msra.mxu0 %v289
        %479 = vmatpush.msra.mxu0 %v286
        %480 = vmatpush.msra.mxu0 %v283
        %481 = vmatpush.msra.mxu0 %v280
        %482 = vmatmul.f32.gmra.mxu0 %v442
        %v483 = vpop.f32.mrf.mxu0
        %v484 = vadd.f32 0.0, %v483
        %485 = vdwg.mxu0
        %486 = vmatpush.msra.mxu0 %v326
        %487 = vmatpush.msra.mxu0 %v323
        %488 = vmatpush.msra.mxu0 %v320
        %489 = vmatpush.msra.mxu0 %v317
        %490 = vmatpush.msra.mxu0 %v314
        %491 = vmatpush.msra.mxu0 %v311
        %492 = vmatpush.msra.mxu0 %v308
        %493 = vmatpush.msra.mxu0 %v305
        %494 = vmatpush.msra.mxu0 %v302
        %495 = vmatpush.msra.mxu0 %v299
        %496 = vmatpush.msra.mxu0 %v296
        %497 = vmatpush.msra.mxu0 %v293
        %498 = vmatpush.msra.mxu0 %v290
        %499 = vmatpush.msra.mxu0 %v287
        %500 = vmatpush.msra.mxu0 %v284
        %501 = vmatpush.msra.mxu0 %v281
        %502 = vmatmul.f32.gmra.mxu0 %v442
        %v503 = vpop.f32.mrf.mxu0
        %v504 = vadd.f32 0.0, %v503
        %505 = vdwg.mxu0
        %v506 = vadd.f32 %v445, %v464
        %v507 = vxor.u32 %v506, 2147483648
        %v508 = vmul.f32 %v507, 1.442695
        %v509 = vpow.pop %v508
        %v510 = vadd.f32 %v509, 1.0
        %v511 = vrcp.pop %v510
        %v512 = vmul.f32 %v510, %v511
        %v513 = vsub.f32 1.0, %v512
        %v514 = vmul.f32 %v511, %v513
        %v515 = vadd.f32 %v511, %v514
        %vm516 = vweird.f32 %v510
        %vm517 = vweird.f32 %v511
        %vm518 = vmor %vm516, %vm517
        %v519 = vsel %vm518, %v511, %v515
        %v520 = vand.u32 2147483647, %v510
        %vm521 = vcmp.eq.f32.partialorder %v520, 8.507059e+37
        %v522 = vand.u32 %v510, 2147483648
        %v523 = vor.u32 1.1754944e-38, %v522
        %v524 = vsel %vm521, %v523, %v519
        %v525 = vmul.f32 1.0, %v524
        %v527 = vrot.slane %v445, 1
        %v529 = vadd.f32 %v527, %v484
        %v530 = vxor.u32 %v529, 2147483648
        %v531 = vmul.f32 %v530, 1.442695
        %v532 = vpow.pop %v531
        %v533 = vadd.f32 %v532, 1.0
        %v534 = vrcp.pop %v533
        %v535 = vmul.f32 %v533, %v534
        %v536 = vsub.f32 1.0, %v535
        %v537 = vmul.f32 %v534, %v536
        %v538 = vadd.f32 %v534, %v537
        %vm539 = vweird.f32 %v533
        %vm540 = vweird.f32 %v534
        %vm541 = vmor %vm539, %vm540
        %v542 = vsel %vm541, %v534, %v538
        %v543 = vand.u32 2147483647, %v533
        %vm544 = vcmp.eq.f32.partialorder %v543, 8.507059e+37
        %v545 = vand.u32 %v533, 2147483648
        %v546 = vor.u32 1.1754944e-38, %v545
        %v547 = vsel %vm544, %v546, %v542
        %v548 = vmul.f32 1.0, %v547
        %v549 = vadd.f32 %v504, %v327
        %v550 = vmul.f32 %v525, %v549
        %v551 = vrot.slane %v445, 2
        %v553 = vadd.f32 %v551, %v550
        %v554 = vtanh.pop %v553
        %v555 = vsub.f32 1.0, %v548
        %v556 = vmul.f32 %v555, %v554
        %v557 = vmul.f32 %v548, %v442
        %v558 = vadd.f32 %v556, %v557
        %559 = vst [vmem:[%s270 + $0x1] sm:$0x1] %v558
        %s560 = scalar_lea.vmem %s235, 2 [#allocation2]
        %v561 = vld [vmem:[%s560] ss:$8 sm:$0x7]
        %562 = vmatpush.msra.mxu0 %v324
        %563 = vmatpush.msra.mxu0 %v321
        %564 = vmatpush.msra.mxu0 %v318
        %565 = vmatpush.msra.mxu0 %v315
        %566 = vmatpush.msra.mxu0 %v312
        %567 = vmatpush.msra.mxu0 %v309
        %568 = vmatpush.msra.mxu0 %v306
        %569 = vmatpush.msra.mxu0 %v303
        %570 = vmatpush.msra.mxu0 %v300
        %571 = vmatpush.msra.mxu0 %v297
        %572 = vmatpush.msra.mxu0 %v294
        %573 = vmatpush.msra.mxu0 %v291
        %574 = vmatpush.msra.mxu0 %v288
        %575 = vmatpush.msra.mxu0 %v285
        %576 = vmatpush.msra.mxu0 %v282
        %577 = vmatpush.msra.mxu0 %v279
        %578 = vmatmul.f32.gmra.mxu0 %v558
        %v579 = vpop.f32.mrf.mxu0
        %v580 = vadd.f32 0.0, %v579
        %581 = vdwg.mxu0
        %582 = vmatpush.msra.mxu0 %v325
        %583 = vmatpush.msra.mxu0 %v322
        %584 = vmatpush.msra.mxu0 %v319
        %585 = vmatpush.msra.mxu0 %v316
        %586 = vmatpush.msra.mxu0 %v313
        %587 = vmatpush.msra.mxu0 %v310
        %588 = vmatpush.msra.mxu0 %v307
        %589 = vmatpush.msra.mxu0 %v304
        %590 = vmatpush.msra.mxu0 %v301
        %591 = vmatpush.msra.mxu0 %v298
        %592 = vmatpush.msra.mxu0 %v295
        %593 = vmatpush.msra.mxu0 %v292
        %594 = vmatpush.msra.mxu0 %v289
        %595 = vmatpush.msra.mxu0 %v286
        %596 = vmatpush.msra.mxu0 %v283
        %597 = vmatpush.msra.mxu0 %v280
        %598 = vmatmul.f32.gmra.mxu0 %v558
        %v599 = vpop.f32.mrf.mxu0
        %v600 = vadd.f32 0.0, %v599
        %601 = vdwg.mxu0
        %602 = vmatpush.msra.mxu0 %v326
        %603 = vmatpush.msra.mxu0 %v323
        %604 = vmatpush.msra.mxu0 %v320
        %605 = vmatpush.msra.mxu0 %v317
        %606 = vmatpush.msra.mxu0 %v314
        %607 = vmatpush.msra.mxu0 %v311
        %608 = vmatpush.msra.mxu0 %v308
        %609 = vmatpush.msra.mxu0 %v305
        %610 = vmatpush.msra.mxu0 %v302
        %611 = vmatpush.msra.mxu0 %v299
        %612 = vmatpush.msra.mxu0 %v296
        %613 = vmatpush.msra.mxu0 %v293
        %614 = vmatpush.msra.mxu0 %v290
        %615 = vmatpush.msra.mxu0 %v287
        %616 = vmatpush.msra.mxu0 %v284
        %617 = vmatpush.msra.mxu0 %v281
        %618 = vmatmul.f32.gmra.mxu0 %v558
        %v619 = vpop.f32.mrf.mxu0
        %v620 = vadd.f32 0.0, %v619
        %621 = vdwg.mxu0
        %v622 = vadd.f32 %v561, %v580
        %v623 = vxor.u32 %v622, 2147483648
        %v624 = vmul.f32 %v623, 1.442695
        %v625 = vpow.pop %v624
        %v626 = vadd.f32 %v625, 1.0
        %v627 = vrcp.pop %v626
        %v628 = vmul.f32 %v626, %v627
        %v629 = vsub.f32 1.0, %v628
        %v630 = vmul.f32 %v627, %v629
        %v631 = vadd.f32 %v627, %v630
        %vm632 = vweird.f32 %v626
        %vm633 = vweird.f32 %v627
        %vm634 = vmor %vm632, %vm633
        %v635 = vsel %vm634, %v627, %v631
        %v636 = vand.u32 2147483647, %v626
        %vm637 = vcmp.eq.f32.partialorder %v636, 8.507059e+37
        %v638 = vand.u32 %v626, 2147483648
        %v639 = vor.u32 1.1754944e-38, %v638
        %v640 = vsel %vm637, %v639, %v635
        %v641 = vmul.f32 1.0, %v640
        %v643 = vrot.slane %v561, 1
        %v645 = vadd.f32 %v643, %v600
        %v646 = vxor.u32 %v645, 2147483648
        %v647 = vmul.f32 %v646, 1.442695
        %v648 = vpow.pop %v647
        %v649 = vadd.f32 %v648, 1.0
        %v650 = vrcp.pop %v649
        %v651 = vmul.f32 %v649, %v650
        %v652 = vsub.f32 1.0, %v651
        %v653 = vmul.f32 %v650, %v652
        %v654 = vadd.f32 %v650, %v653
        %vm655 = vweird.f32 %v649
        %vm656 = vweird.f32 %v650
        %vm657 = vmor %vm655, %vm656
        %v658 = vsel %vm657, %v650, %v654
        %v659 = vand.u32 2147483647, %v649
        %vm660 = vcmp.eq.f32.partialorder %v659, 8.507059e+37
        %v661 = vand.u32 %v649, 2147483648
        %v662 = vor.u32 1.1754944e-38, %v661
        %v663 = vsel %vm660, %v662, %v658
        %v664 = vmul.f32 1.0, %v663
        %v665 = vadd.f32 %v620, %v327
        %v666 = vmul.f32 %v641, %v665
        %v667 = vrot.slane %v561, 2
        %v669 = vadd.f32 %v667, %v666
        %v670 = vtanh.pop %v669
        %v671 = vsub.f32 1.0, %v664
        %v672 = vmul.f32 %v671, %v670
        %v673 = vmul.f32 %v664, %v558
        %v674 = vadd.f32 %v672, %v673
        %675 = vst [vmem:[%s270 + $0x2] sm:$0x1] %v674
        %s676 = scalar_lea.vmem %s235, 3 [#allocation2]
        %v677 = vld [vmem:[%s676] ss:$8 sm:$0x7]
        %678 = vmatpush.msra.mxu0 %v324
        %679 = vmatpush.msra.mxu0 %v321
        %680 = vmatpush.msra.mxu0 %v318
        %681 = vmatpush.msra.mxu0 %v315
        %682 = vmatpush.msra.mxu0 %v312
        %683 = vmatpush.msra.mxu0 %v309
        %684 = vmatpush.msra.mxu0 %v306
        %685 = vmatpush.msra.mxu0 %v303
        %686 = vmatpush.msra.mxu0 %v300
        %687 = vmatpush.msra.mxu0 %v297
        %688 = vmatpush.msra.mxu0 %v294
        %689 = vmatpush.msra.mxu0 %v291
        %690 = vmatpush.msra.mxu0 %v288
        %691 = vmatpush.msra.mxu0 %v285
        %692 = vmatpush.msra.mxu0 %v282
        %693 = vmatpush.msra.mxu0 %v279
        %694 = vmatmul.f32.gmra.mxu0 %v674
        %v695 = vpop.f32.mrf.mxu0
        %v696 = vadd.f32 0.0, %v695
        %697 = vdwg.mxu0
        %698 = vmatpush.msra.mxu0 %v325
        %699 = vmatpush.msra.mxu0 %v322
        %700 = vmatpush.msra.mxu0 %v319
        %701 = vmatpush.msra.mxu0 %v316
        %702 = vmatpush.msra.mxu0 %v313
        %703 = vmatpush.msra.mxu0 %v310
        %704 = vmatpush.msra.mxu0 %v307
        %705 = vmatpush.msra.mxu0 %v304
        %706 = vmatpush.msra.mxu0 %v301
        %707 = vmatpush.msra.mxu0 %v298
        %708 = vmatpush.msra.mxu0 %v295
        %709 = vmatpush.msra.mxu0 %v292
        %710 = vmatpush.msra.mxu0 %v289
        %711 = vmatpush.msra.mxu0 %v286
        %712 = vmatpush.msra.mxu0 %v283
        %713 = vmatpush.msra.mxu0 %v280
        %714 = vmatmul.f32.gmra.mxu0 %v674
        %v715 = vpop.f32.mrf.mxu0
        %v716 = vadd.f32 0.0, %v715
        %717 = vdwg.mxu0
        %718 = vmatpush.msra.mxu0 %v326
        %719 = vmatpush.msra.mxu0 %v323
        %720 = vmatpush.msra.mxu0 %v320
        %721 = vmatpush.msra.mxu0 %v317
        %722 = vmatpush.msra.mxu0 %v314
        %723 = vmatpush.msra.mxu0 %v311
        %724 = vmatpush.msra.mxu0 %v308
        %725 = vmatpush.msra.mxu0 %v305
        %726 = vmatpush.msra.mxu0 %v302
        %727 = vmatpush.msra.mxu0 %v299
        %728 = vmatpush.msra.mxu0 %v296
        %729 = vmatpush.msra.mxu0 %v293
        %730 = vmatpush.msra.mxu0 %v290
        %731 = vmatpush.msra.mxu0 %v287
        %732 = vmatpush.msra.mxu0 %v284
        %733 = vmatpush.msra.mxu0 %v281
        %734 = vmatmul.f32.gmra.mxu0 %v674
        %v735 = vpop.f32.mrf.mxu0
        %v736 = vadd.f32 0.0, %v735
        %737 = vdwg.mxu0
        %v738 = vadd.f32 %v677, %v696
        %v739 = vxor.u32 %v738, 2147483648
        %v740 = vmul.f32 %v739, 1.442695
        %v741 = vpow.pop %v740
        %v742 = vadd.f32 %v741, 1.0
        %v743 = vrcp.pop %v742
        %v744 = vmul.f32 %v742, %v743
        %v745 = vsub.f32 1.0, %v744
        %v746 = vmul.f32 %v743, %v745
        %v747 = vadd.f32 %v743, %v746
        %vm748 = vweird.f32 %v742
        %vm749 = vweird.f32 %v743
        %vm750 = vmor %vm748, %vm749
        %v751 = vsel %vm750, %v743, %v747
        %v752 = vand.u32 2147483647, %v742
        %vm753 = vcmp.eq.f32.partialorder %v752, 8.507059e+37
        %v754 = vand.u32 %v742, 2147483648
        %v755 = vor.u32 1.1754944e-38, %v754
        %v756 = vsel %vm753, %v755, %v751
        %v757 = vmul.f32 1.0, %v756
        %v759 = vrot.slane %v677, 1
        %v761 = vadd.f32 %v759, %v716
        %v762 = vxor.u32 %v761, 2147483648
        %v763 = vmul.f32 %v762, 1.442695
        %v764 = vpow.pop %v763
        %v765 = vadd.f32 %v764, 1.0
        %v766 = vrcp.pop %v765
        %v767 = vmul.f32 %v765, %v766
        %v768 = vsub.f32 1.0, %v767
        %v769 = vmul.f32 %v766, %v768
        %v770 = vadd.f32 %v766, %v769
        %vm771 = vweird.f32 %v765
        %vm772 = vweird.f32 %v766
        %vm773 = vmor %vm771, %vm772
        %v774 = vsel %vm773, %v766, %v770
        %v775 = vand.u32 2147483647, %v765
        %vm776 = vcmp.eq.f32.partialorder %v775, 8.507059e+37
        %v777 = vand.u32 %v765, 2147483648
        %v778 = vor.u32 1.1754944e-38, %v777
        %v779 = vsel %vm776, %v778, %v774
        %v780 = vmul.f32 1.0, %v779
        %v781 = vadd.f32 %v736, %v327
        %v782 = vmul.f32 %v757, %v781
        %v783 = vrot.slane %v677, 2
        %v785 = vadd.f32 %v783, %v782
        %v786 = vtanh.pop %v785
        %v787 = vsub.f32 1.0, %v780
        %v788 = vmul.f32 %v787, %v786
        %v789 = vmul.f32 %v780, %v674
        %v790 = vadd.f32 %v788, %v789
        %791 = vst [vmem:[%s270 + $0x3] sm:$0x1] %v790
        %s792 = scalar_lea.vmem %s235, 4 [#allocation2]
        %v793 = vld [vmem:[%s792] ss:$8 sm:$0x7]
        %794 = vmatpush.msra.mxu0 %v324
        %795 = vmatpush.msra.mxu0 %v321
        %796 = vmatpush.msra.mxu0 %v318
        %797 = vmatpush.msra.mxu0 %v315
        %798 = vmatpush.msra.mxu0 %v312
        %799 = vmatpush.msra.mxu0 %v309
        %800 = vmatpush.msra.mxu0 %v306
        %801 = vmatpush.msra.mxu0 %v303
        %802 = vmatpush.msra.mxu0 %v300
        %803 = vmatpush.msra.mxu0 %v297
        %804 = vmatpush.msra.mxu0 %v294
        %805 = vmatpush.msra.mxu0 %v291
        %806 = vmatpush.msra.mxu0 %v288
        %807 = vmatpush.msra.mxu0 %v285
        %808 = vmatpush.msra.mxu0 %v282
        %809 = vmatpush.msra.mxu0 %v279
        %810 = vmatmul.f32.gmra.mxu0 %v790
        %v811 = vpop.f32.mrf.mxu0
        %v812 = vadd.f32 0.0, %v811
        %813 = vdwg.mxu0
        %814 = vmatpush.msra.mxu0 %v325
        %815 = vmatpush.msra.mxu0 %v322
        %816 = vmatpush.msra.mxu0 %v319
        %817 = vmatpush.msra.mxu0 %v316
        %818 = vmatpush.msra.mxu0 %v313
        %819 = vmatpush.msra.mxu0 %v310
        %820 = vmatpush.msra.mxu0 %v307
        %821 = vmatpush.msra.mxu0 %v304
        %822 = vmatpush.msra.mxu0 %v301
        %823 = vmatpush.msra.mxu0 %v298
        %824 = vmatpush.msra.mxu0 %v295
        %825 = vmatpush.msra.mxu0 %v292
        %826 = vmatpush.msra.mxu0 %v289
        %827 = vmatpush.msra.mxu0 %v286
        %828 = vmatpush.msra.mxu0 %v283
        %829 = vmatpush.msra.mxu0 %v280
        %830 = vmatmul.f32.gmra.mxu0 %v790
        %v831 = vpop.f32.mrf.mxu0
        %v832 = vadd.f32 0.0, %v831
        %833 = vdwg.mxu0
        %834 = vmatpush.msra.mxu0 %v326
        %835 = vmatpush.msra.mxu0 %v323
        %836 = vmatpush.msra.mxu0 %v320
        %837 = vmatpush.msra.mxu0 %v317
        %838 = vmatpush.msra.mxu0 %v314
        %839 = vmatpush.msra.mxu0 %v311
        %840 = vmatpush.msra.mxu0 %v308
        %841 = vmatpush.msra.mxu0 %v305
        %842 = vmatpush.msra.mxu0 %v302
        %843 = vmatpush.msra.mxu0 %v299
        %844 = vmatpush.msra.mxu0 %v296
        %845 = vmatpush.msra.mxu0 %v293
        %846 = vmatpush.msra.mxu0 %v290
        %847 = vmatpush.msra.mxu0 %v287
        %848 = vmatpush.msra.mxu0 %v284
        %849 = vmatpush.msra.mxu0 %v281
        %850 = vmatmul.f32.gmra.mxu0 %v790
        %v851 = vpop.f32.mrf.mxu0
        %v852 = vadd.f32 0.0, %v851
        %853 = vdwg.mxu0
        %v854 = vadd.f32 %v793, %v812
        %v855 = vxor.u32 %v854, 2147483648
        %v856 = vmul.f32 %v855, 1.442695
        %v857 = vpow.pop %v856
        %v858 = vadd.f32 %v857, 1.0
        %v859 = vrcp.pop %v858
        %v860 = vmul.f32 %v858, %v859
        %v861 = vsub.f32 1.0, %v860
        %v862 = vmul.f32 %v859, %v861
        %v863 = vadd.f32 %v859, %v862
        %vm864 = vweird.f32 %v858
        %vm865 = vweird.f32 %v859
        %vm866 = vmor %vm864, %vm865
        %v867 = vsel %vm866, %v859, %v863
        %v868 = vand.u32 2147483647, %v858
        %vm869 = vcmp.eq.f32.partialorder %v868, 8.507059e+37
        %v870 = vand.u32 %v858, 2147483648
        %v871 = vor.u32 1.1754944e-38, %v870
        %v872 = vsel %vm869, %v871, %v867
        %v873 = vmul.f32 1.0, %v872
        %v875 = vrot.slane %v793, 1
        %v877 = vadd.f32 %v875, %v832
        %v878 = vxor.u32 %v877, 2147483648
        %v879 = vmul.f32 %v878, 1.442695
        %v880 = vpow.pop %v879
        %v881 = vadd.f32 %v880, 1.0
        %v882 = vrcp.pop %v881
        %v883 = vmul.f32 %v881, %v882
        %v884 = vsub.f32 1.0, %v883
        %v885 = vmul.f32 %v882, %v884
        %v886 = vadd.f32 %v882, %v885
        %vm887 = vweird.f32 %v881
        %vm888 = vweird.f32 %v882
        %vm889 = vmor %vm887, %vm888
        %v890 = vsel %vm889, %v882, %v886
        %v891 = vand.u32 2147483647, %v881
        %vm892 = vcmp.eq.f32.partialorder %v891, 8.507059e+37
        %v893 = vand.u32 %v881, 2147483648
        %v894 = vor.u32 1.1754944e-38, %v893
        %v895 = vsel %vm892, %v894, %v890
        %v896 = vmul.f32 1.0, %v895
        %v897 = vadd.f32 %v852, %v327
        %v898 = vmul.f32 %v873, %v897
        %v899 = vrot.slane %v793, 2
        %v901 = vadd.f32 %v899, %v898
        %v902 = vtanh.pop %v901
        %v903 = vsub.f32 1.0, %v896
        %v904 = vmul.f32 %v903, %v902
        %v905 = vmul.f32 %v896, %v790
        %v906 = vadd.f32 %v904, %v905
        %907 = vst [vmem:[%s270 + $0x4] sm:$0x1] %v906
        %s908 = scalar_lea.vmem %s235, 5 [#allocation2]
        %v909 = vld [vmem:[%s908] ss:$8 sm:$0x7]
        %910 = vmatpush.msra.mxu0 %v324
        %911 = vmatpush.msra.mxu0 %v321
        %912 = vmatpush.msra.mxu0 %v318
        %913 = vmatpush.msra.mxu0 %v315
        %914 = vmatpush.msra.mxu0 %v312
        %915 = vmatpush.msra.mxu0 %v309
        %916 = vmatpush.msra.mxu0 %v306
        %917 = vmatpush.msra.mxu0 %v303
        %918 = vmatpush.msra.mxu0 %v300
        %919 = vmatpush.msra.mxu0 %v297
        %920 = vmatpush.msra.mxu0 %v294
        %921 = vmatpush.msra.mxu0 %v291
        %922 = vmatpush.msra.mxu0 %v288
        %923 = vmatpush.msra.mxu0 %v285
        %924 = vmatpush.msra.mxu0 %v282
        %925 = vmatpush.msra.mxu0 %v279
        %926 = vmatmul.f32.gmra.mxu0 %v906
        %v927 = vpop.f32.mrf.mxu0
        %v928 = vadd.f32 0.0, %v927
        %929 = vdwg.mxu0
        %930 = vmatpush.msra.mxu0 %v325
        %931 = vmatpush.msra.mxu0 %v322
        %932 = vmatpush.msra.mxu0 %v319
        %933 = vmatpush.msra.mxu0 %v316
        %934 = vmatpush.msra.mxu0 %v313
        %935 = vmatpush.msra.mxu0 %v310
        %936 = vmatpush.msra.mxu0 %v307
        %937 = vmatpush.msra.mxu0 %v304
        %938 = vmatpush.msra.mxu0 %v301
        %939 = vmatpush.msra.mxu0 %v298
        %940 = vmatpush.msra.mxu0 %v295
        %941 = vmatpush.msra.mxu0 %v292
        %942 = vmatpush.msra.mxu0 %v289
        %943 = vmatpush.msra.mxu0 %v286
        %944 = vmatpush.msra.mxu0 %v283
        %945 = vmatpush.msra.mxu0 %v280
        %946 = vmatmul.f32.gmra.mxu0 %v906
        %v947 = vpop.f32.mrf.mxu0
        %v948 = vadd.f32 0.0, %v947
        %949 = vdwg.mxu0
        %950 = vmatpush.msra.mxu0 %v326
        %951 = vmatpush.msra.mxu0 %v323
        %952 = vmatpush.msra.mxu0 %v320
        %953 = vmatpush.msra.mxu0 %v317
        %954 = vmatpush.msra.mxu0 %v314
        %955 = vmatpush.msra.mxu0 %v311
        %956 = vmatpush.msra.mxu0 %v308
        %957 = vmatpush.msra.mxu0 %v305
        %958 = vmatpush.msra.mxu0 %v302
        %959 = vmatpush.msra.mxu0 %v299
        %960 = vmatpush.msra.mxu0 %v296
        %961 = vmatpush.msra.mxu0 %v293
        %962 = vmatpush.msra.mxu0 %v290
        %963 = vmatpush.msra.mxu0 %v287
        %964 = vmatpush.msra.mxu0 %v284
        %965 = vmatpush.msra.mxu0 %v281
        %966 = vmatmul.f32.gmra.mxu0 %v906
        %v967 = vpop.f32.mrf.mxu0
        %v968 = vadd.f32 0.0, %v967
        %969 = vdwg.mxu0
        %v970 = vadd.f32 %v909, %v928
        %v971 = vxor.u32 %v970, 2147483648
        %v972 = vmul.f32 %v971, 1.442695
        %v973 = vpow.pop %v972
        %v974 = vadd.f32 %v973, 1.0
        %v975 = vrcp.pop %v974
        %v976 = vmul.f32 %v974, %v975
        %v977 = vsub.f32 1.0, %v976
        %v978 = vmul.f32 %v975, %v977
        %v979 = vadd.f32 %v975, %v978
        %vm980 = vweird.f32 %v974
        %vm981 = vweird.f32 %v975
        %vm982 = vmor %vm980, %vm981
        %v983 = vsel %vm982, %v975, %v979
        %v984 = vand.u32 2147483647, %v974
        %vm985 = vcmp.eq.f32.partialorder %v984, 8.507059e+37
        %v986 = vand.u32 %v974, 2147483648
        %v987 = vor.u32 1.1754944e-38, %v986
        %v988 = vsel %vm985, %v987, %v983
        %v989 = vmul.f32 1.0, %v988
        %v991 = vrot.slane %v909, 1
        %v993 = vadd.f32 %v991, %v948
        %v994 = vxor.u32 %v993, 2147483648
        %v995 = vmul.f32 %v994, 1.442695
        %v996 = vpow.pop %v995
        %v997 = vadd.f32 %v996, 1.0
        %v998 = vrcp.pop %v997
        %v999 = vmul.f32 %v997, %v998
        %v1000 = vsub.f32 1.0, %v999
        %v1001 = vmul.f32 %v998, %v1000
        %v1002 = vadd.f32 %v998, %v1001
        %vm1003 = vweird.f32 %v997
        %vm1004 = vweird.f32 %v998
        %vm1005 = vmor %vm1003, %vm1004
        %v1006 = vsel %vm1005, %v998, %v1002
        %v1007 = vand.u32 2147483647, %v997
        %vm1008 = vcmp.eq.f32.partialorder %v1007, 8.507059e+37
        %v1009 = vand.u32 %v997, 2147483648
        %v1010 = vor.u32 1.1754944e-38, %v1009
        %v1011 = vsel %vm1008, %v1010, %v1006
        %v1012 = vmul.f32 1.0, %v1011
        %v1013 = vadd.f32 %v968, %v327
        %v1014 = vmul.f32 %v989, %v1013
        %v1015 = vrot.slane %v909, 2
        %v1017 = vadd.f32 %v1015, %v1014
        %v1018 = vtanh.pop %v1017
        %v1019 = vsub.f32 1.0, %v1012
        %v1020 = vmul.f32 %v1019, %v1018
        %v1021 = vmul.f32 %v1012, %v906
        %v1022 = vadd.f32 %v1020, %v1021
        %1023 = vst [vmem:[%s270 + $0x5] sm:$0x1] %v1022
        %s1024 = scalar_lea.vmem %s235, 6 [#allocation2]
        %v1025 = vld [vmem:[%s1024] ss:$8 sm:$0x7]
        %1026 = vmatpush.msra.mxu0 %v324
        %1027 = vmatpush.msra.mxu0 %v321
        %1028 = vmatpush.msra.mxu0 %v318
        %1029 = vmatpush.msra.mxu0 %v315
        %1030 = vmatpush.msra.mxu0 %v312
        %1031 = vmatpush.msra.mxu0 %v309
        %1032 = vmatpush.msra.mxu0 %v306
        %1033 = vmatpush.msra.mxu0 %v303
        %1034 = vmatpush.msra.mxu0 %v300
        %1035 = vmatpush.msra.mxu0 %v297
        %1036 = vmatpush.msra.mxu0 %v294
        %1037 = vmatpush.msra.mxu0 %v291
        %1038 = vmatpush.msra.mxu0 %v288
        %1039 = vmatpush.msra.mxu0 %v285
        %1040 = vmatpush.msra.mxu0 %v282
        %1041 = vmatpush.msra.mxu0 %v279
        %1042 = vmatmul.f32.gmra.mxu0 %v1022
        %v1043 = vpop.f32.mrf.mxu0
        %v1044 = vadd.f32 0.0, %v1043
        %1045 = vdwg.mxu0
        %1046 = vmatpush.msra.mxu0 %v325
        %1047 = vmatpush.msra.mxu0 %v322
        %1048 = vmatpush.msra.mxu0 %v319
        %1049 = vmatpush.msra.mxu0 %v316
        %1050 = vmatpush.msra.mxu0 %v313
        %1051 = vmatpush.msra.mxu0 %v310
        %1052 = vmatpush.msra.mxu0 %v307
        %1053 = vmatpush.msra.mxu0 %v304
        %1054 = vmatpush.msra.mxu0 %v301
        %1055 = vmatpush.msra.mxu0 %v298
        %1056 = vmatpush.msra.mxu0 %v295
        %1057 = vmatpush.msra.mxu0 %v292
        %1058 = vmatpush.msra.mxu0 %v289
        %1059 = vmatpush.msra.mxu0 %v286
        %1060 = vmatpush.msra.mxu0 %v283
        %1061 = vmatpush.msra.mxu0 %v280
        %1062 = vmatmul.f32.gmra.mxu0 %v1022
        %v1063 = vpop.f32.mrf.mxu0
        %v1064 = vadd.f32 0.0, %v1063
        %1065 = vdwg.mxu0
        %1066 = vmatpush.msra.mxu0 %v326
        %1067 = vmatpush.msra.mxu0 %v323
        %1068 = vmatpush.msra.mxu0 %v320
        %1069 = vmatpush.msra.mxu0 %v317
        %1070 = vmatpush.msra.mxu0 %v314
        %1071 = vmatpush.msra.mxu0 %v311
        %1072 = vmatpush.msra.mxu0 %v308
        %1073 = vmatpush.msra.mxu0 %v305
        %1074 = vmatpush.msra.mxu0 %v302
        %1075 = vmatpush.msra.mxu0 %v299
        %1076 = vmatpush.msra.mxu0 %v296
        %1077 = vmatpush.msra.mxu0 %v293
        %1078 = vmatpush.msra.mxu0 %v290
        %1079 = vmatpush.msra.mxu0 %v287
        %1080 = vmatpush.msra.mxu0 %v284
        %1081 = vmatpush.msra.mxu0 %v281
        %1082 = vmatmul.f32.gmra.mxu0 %v1022
        %v1083 = vpop.f32.mrf.mxu0
        %v1084 = vadd.f32 0.0, %v1083
        %1085 = vdwg.mxu0
        %v1086 = vadd.f32 %v1025, %v1044
        %v1087 = vxor.u32 %v1086, 2147483648
        %v1088 = vmul.f32 %v1087, 1.442695
        %v1089 = vpow.pop %v1088
        %v1090 = vadd.f32 %v1089, 1.0
        %v1091 = vrcp.pop %v1090
        %v1092 = vmul.f32 %v1090, %v1091
        %v1093 = vsub.f32 1.0, %v1092
        %v1094 = vmul.f32 %v1091, %v1093
        %v1095 = vadd.f32 %v1091, %v1094
        %vm1096 = vweird.f32 %v1090
        %vm1097 = vweird.f32 %v1091
        %vm1098 = vmor %vm1096, %vm1097
        %v1099 = vsel %vm1098, %v1091, %v1095
        %v1100 = vand.u32 2147483647, %v1090
        %vm1101 = vcmp.eq.f32.partialorder %v1100, 8.507059e+37
        %v1102 = vand.u32 %v1090, 2147483648
        %v1103 = vor.u32 1.1754944e-38, %v1102
        %v1104 = vsel %vm1101, %v1103, %v1099
        %v1105 = vmul.f32 1.0, %v1104
        %v1107 = vrot.slane %v1025, 1
        %v1109 = vadd.f32 %v1107, %v1064
        %v1110 = vxor.u32 %v1109, 2147483648
        %v1111 = vmul.f32 %v1110, 1.442695
        %v1112 = vpow.pop %v1111
        %v1113 = vadd.f32 %v1112, 1.0
        %v1114 = vrcp.pop %v1113
        %v1115 = vmul.f32 %v1113, %v1114
        %v1116 = vsub.f32 1.0, %v1115
        %v1117 = vmul.f32 %v1114, %v1116
        %v1118 = vadd.f32 %v1114, %v1117
        %vm1119 = vweird.f32 %v1113
        %vm1120 = vweird.f32 %v1114
        %vm1121 = vmor %vm1119, %vm1120
        %v1122 = vsel %vm1121, %v1114, %v1118
        %v1123 = vand.u32 2147483647, %v1113
        %vm1124 = vcmp.eq.f32.partialorder %v1123, 8.507059e+37
        %v1125 = vand.u32 %v1113, 2147483648
        %v1126 = vor.u32 1.1754944e-38, %v1125
        %v1127 = vsel %vm1124, %v1126, %v1122
        %v1128 = vmul.f32 1.0, %v1127
        %v1129 = vadd.f32 %v1084, %v327
        %v1130 = vmul.f32 %v1105, %v1129
        %v1131 = vrot.slane %v1025, 2
        %v1133 = vadd.f32 %v1131, %v1130
        %v1134 = vtanh.pop %v1133
        %v1135 = vsub.f32 1.0, %v1128
        %v1136 = vmul.f32 %v1135, %v1134
        %v1137 = vmul.f32 %v1128, %v1022
        %v1138 = vadd.f32 %v1136, %v1137
        %1139 = vst [vmem:[%s270 + $0x6] sm:$0x1] %v1138
        %s1140 = scalar_lea.vmem %s235, 7 [#allocation2]
        %v1141 = vld [vmem:[%s1140] ss:$8 sm:$0x7]
        %1142 = vmatpush.msra.mxu0 %v324
        %1143 = vmatpush.msra.mxu0 %v321
        %1144 = vmatpush.msra.mxu0 %v318
        %1145 = vmatpush.msra.mxu0 %v315
        %1146 = vmatpush.msra.mxu0 %v312
        %1147 = vmatpush.msra.mxu0 %v309
        %1148 = vmatpush.msra.mxu0 %v306
        %1149 = vmatpush.msra.mxu0 %v303
        %1150 = vmatpush.msra.mxu0 %v300
        %1151 = vmatpush.msra.mxu0 %v297
        %1152 = vmatpush.msra.mxu0 %v294
        %1153 = vmatpush.msra.mxu0 %v291
        %1154 = vmatpush.msra.mxu0 %v288
        %1155 = vmatpush.msra.mxu0 %v285
        %1156 = vmatpush.msra.mxu0 %v282
        %1157 = vmatpush.msra.mxu0 %v279
        %1158 = vmatmul.f32.gmra.mxu0 %v1138
        %v1159 = vpop.f32.mrf.mxu0
        %v1160 = vadd.f32 0.0, %v1159
        %1161 = vdwg.mxu0
        %1162 = vmatpush.msra.mxu0 %v325
        %1163 = vmatpush.msra.mxu0 %v322
        %1164 = vmatpush.msra.mxu0 %v319
        %1165 = vmatpush.msra.mxu0 %v316
        %1166 = vmatpush.msra.mxu0 %v313
        %1167 = vmatpush.msra.mxu0 %v310
        %1168 = vmatpush.msra.mxu0 %v307
        %1169 = vmatpush.msra.mxu0 %v304
        %1170 = vmatpush.msra.mxu0 %v301
        %1171 = vmatpush.msra.mxu0 %v298
        %1172 = vmatpush.msra.mxu0 %v295
        %1173 = vmatpush.msra.mxu0 %v292
        %1174 = vmatpush.msra.mxu0 %v289
        %1175 = vmatpush.msra.mxu0 %v286
        %1176 = vmatpush.msra.mxu0 %v283
        %1177 = vmatpush.msra.mxu0 %v280
        %1178 = vmatmul.f32.gmra.mxu0 %v1138
        %v1179 = vpop.f32.mrf.mxu0
        %v1180 = vadd.f32 0.0, %v1179
        %1181 = vdwg.mxu0
        %1182 = vmatpush.msra.mxu0 %v326
        %1183 = vmatpush.msra.mxu0 %v323
        %1184 = vmatpush.msra.mxu0 %v320
        %1185 = vmatpush.msra.mxu0 %v317
        %1186 = vmatpush.msra.mxu0 %v314
        %1187 = vmatpush.msra.mxu0 %v311
        %1188 = vmatpush.msra.mxu0 %v308
        %1189 = vmatpush.msra.mxu0 %v305
        %1190 = vmatpush.msra.mxu0 %v302
        %1191 = vmatpush.msra.mxu0 %v299
        %1192 = vmatpush.msra.mxu0 %v296
        %1193 = vmatpush.msra.mxu0 %v293
        %1194 = vmatpush.msra.mxu0 %v290
        %1195 = vmatpush.msra.mxu0 %v287
        %1196 = vmatpush.msra.mxu0 %v284
        %1197 = vmatpush.msra.mxu0 %v281
        %1198 = vmatmul.f32.gmra.mxu0 %v1138
        %v1199 = vpop.f32.mrf.mxu0
        %v1200 = vadd.f32 0.0, %v1199
        %1201 = vdwg.mxu0
        %v1202 = vadd.f32 %v1141, %v1160
        %v1203 = vxor.u32 %v1202, 2147483648
        %v1204 = vmul.f32 %v1203, 1.442695
        %v1205 = vpow.pop %v1204
        %v1206 = vadd.f32 %v1205, 1.0
        %v1207 = vrcp.pop %v1206
        %v1208 = vmul.f32 %v1206, %v1207
        %v1209 = vsub.f32 1.0, %v1208
        %v1210 = vmul.f32 %v1207, %v1209
        %v1211 = vadd.f32 %v1207, %v1210
        %vm1212 = vweird.f32 %v1206
        %vm1213 = vweird.f32 %v1207
        %vm1214 = vmor %vm1212, %vm1213
        %v1215 = vsel %vm1214, %v1207, %v1211
        %v1216 = vand.u32 2147483647, %v1206
        %vm1217 = vcmp.eq.f32.partialorder %v1216, 8.507059e+37
        %v1218 = vand.u32 %v1206, 2147483648
        %v1219 = vor.u32 1.1754944e-38, %v1218
        %v1220 = vsel %vm1217, %v1219, %v1215
        %v1221 = vmul.f32 1.0, %v1220
        %v1223 = vrot.slane %v1141, 1
        %v1225 = vadd.f32 %v1223, %v1180
        %v1226 = vxor.u32 %v1225, 2147483648
        %v1227 = vmul.f32 %v1226, 1.442695
        %v1228 = vpow.pop %v1227
        %v1229 = vadd.f32 %v1228, 1.0
        %v1230 = vrcp.pop %v1229
        %v1231 = vmul.f32 %v1229, %v1230
        %v1232 = vsub.f32 1.0, %v1231
        %v1233 = vmul.f32 %v1230, %v1232
        %v1234 = vadd.f32 %v1230, %v1233
        %vm1235 = vweird.f32 %v1229
        %vm1236 = vweird.f32 %v1230
        %vm1237 = vmor %vm1235, %vm1236
        %v1238 = vsel %vm1237, %v1230, %v1234
        %v1239 = vand.u32 2147483647, %v1229
        %vm1240 = vcmp.eq.f32.partialorder %v1239, 8.507059e+37
        %v1241 = vand.u32 %v1229, 2147483648
        %v1242 = vor.u32 1.1754944e-38, %v1241
        %v1243 = vsel %vm1240, %v1242, %v1238
        %v1244 = vmul.f32 1.0, %v1243
        %v1245 = vadd.f32 %v1200, %v327
        %v1246 = vmul.f32 %v1221, %v1245
        %v1247 = vrot.slane %v1141, 2
        %v1249 = vadd.f32 %v1247, %v1246
        %v1250 = vtanh.pop %v1249
        %v1251 = vsub.f32 1.0, %v1244
        %v1252 = vmul.f32 %v1251, %v1250
        %v1253 = vmul.f32 %v1244, %v1138
        %v1254 = vadd.f32 %v1252, %v1253
        %1255 = vst [vmem:[%s270 + $0x7] sm:$0x1] %v1254
        %1256 = vst [vmem:[#allocation9] sm:$0x1] %v1254
        %s1257 = sand.u32 %s122, 1
        %s1258 = scalar_lea.sflag [#allocation4], %s1257
        %s1259 = sand.u32 %s122, 1
        %s1260 = smul.addr %s1259, 8
        %s1261 = scalar_lea.vmem [#allocation8], %s1260
        // Predicated region
        $region53: #{tpu_custom_call.1} parent=35 // pred_check
          %p1262 = pneg %p132
        $region54: #{tpu_custom_call.1} parent=35 // pred_check_branch
          %1264 = sbr.rel (%p1262) target = $region56
        $region55: #{tpu_custom_call.1} parent=35 // pred_region
          %1266 = vsyncadd %s1258, 0
          %s1267 = smul.addr %s25, 8
          %s1268 = scalar_lea.hbm %s4, %s1267
          %s1270 = sshll.u32 %s1261, 4
          %s1271 = int_to_ptr.vmem [resolvable:$true] %s1270
          %s1272 = sshll.u32 %s1268, 4
          %s1273 = int_to_ptr.hbm [resolvable:$true] %s1272
          %1275 = dma.vmem_to_hbm [thread:$0]  %s1271, 128, %s1273, %s1258
        $region56: #{tpu_custom_call.1} parent=35 // pred_fallthru
          _
        // Predicated region
        $region57: #{tpu_custom_call.1} parent=35 // pred_check
          %p1276 = pneg %p153
        $region58: #{tpu_custom_call.1} parent=35 // pred_check_branch
          %1278 = sbr.rel (%p1276) target = $region60
        $region59: #{tpu_custom_call.1} parent=35 // pred_region
          %1280 = vsyncadd [#allocation10], 0
          %s1282 = sshll.u32 [#allocation9], 4
          %s1283 = int_to_ptr.vmem [resolvable:$true] %s1282
          %s1284 = sshll.u32 %s5, 4
          %s1285 = int_to_ptr.hbm [resolvable:$true] %s1284
          %1287 = dma.vmem_to_hbm [thread:$0]  %s1283, 16, %s1285, [#allocation10]
        $region60: #{tpu_custom_call.1} parent=35 // pred_fallthru
          _
        // Predicated region
        $region61: #{tpu_custom_call.1} parent=35 // pred_check
          %p1288 = pneg %p153
        $region62: #{tpu_custom_call.1} parent=35 // pred_check_branch
          %1290 = sbr.rel (%p1288) target = $region64
        $region63: #{tpu_custom_call.1} parent=35 // pred_region
          %1292 = dma.done [#allocation10], 16
        $region64: #{tpu_custom_call.1} parent=35 // pred_fallthru
          _
      $region36: #{tpu_custom_call.1} parent=5 // pred_fallthru
        _
      %p1293 = scmp.le.s32.totalorder 2, %s20
      // Predicated region
      $region65: #{tpu_custom_call.1} parent=5 // pred_check
        %p1294 = pneg %p1293
      $region66: #{tpu_custom_call.1} parent=5 // pred_check_branch
        %1296 = sbr.rel (%p1294) target = $region68
      $region67: #{tpu_custom_call.1} parent=5 // pred_region
        %s1297 = ssub.s32 %s20, 2
        // Predicated region
        $region69: #{tpu_custom_call.1} parent=67 // pred_check
          %p1298 = pneg %p138
        $region70: #{tpu_custom_call.1} parent=67 // pred_check_branch
          %1300 = sbr.rel (%p1298) target = $region72
        $region71: #{tpu_custom_call.1} parent=67 // pred_region
          %s1301 = sand.u32 %s123, 1
          %s1302 = scalar_lea.sflag [#allocation4], %s1301
          %s1303 = sand.u32 %s123, 1
          %s1304 = smul.addr %s1303, 8
          %s1305 = scalar_lea.vmem [#allocation8], %s1304
          %1307 = dma.done %s1302, 128
        $region72: #{tpu_custom_call.1} parent=67 // pred_fallthru
          _
      $region68: #{tpu_custom_call.1} parent=5 // pred_fallthru
        _
    $region6: #{tpu_custom_call.1} parent=1 // loop_footer
      %s24 = sadd.s32 1, %s20
    $region7: #{tpu_custom_call.1} parent=1 // loop_footer_branch
      %19 = sbr.rel target = $region3
    $region8: #{tpu_custom_call.1} parent=1 // loop_exit
      _
    %1308 = vsyncpa [#allocation3], 1
    %s1309 = scalar_lea.sflag [#allocation3], 1
    %1310 = vsyncpa %s1309, 1
    %1311 = vsyncpa [#allocation6], 1
    %1312 = vsyncpa [#allocation4], 1
    %s1313 = scalar_lea.sflag [#allocation4], 1
    %1314 = vsyncpa %s1313, 1
    %1315 = vsyncpa [#allocation10], 1

// kernel: tpu_custom_call.1
$region0: #{tpu_custom_call.1}
  #allocation0 [shape = 'u32[]', space=smem, size = 0x4, offset = 0x4, fixed_abs, tag = 'smem constant byte address 0x4 - core index']
  #allocation1 [shape = 'u32[72,128]{1,0:T(1,128)}', space=vmem, size = 0x9000, scoped, tag = 'internal scratch']
  %s0 = inlined_call_operand.hbm [shape: f32[16,384], index: 0, kind: input, shape index: {}]
  %s1 = inlined_call_operand.hbm [shape: f32[1,128], index: 1, kind: input, shape index: {}]
  %s2 = inlined_call_operand.hbm [shape: f32[128,384], index: 2, kind: input, shape index: {}]
  %s3 = inlined_call_operand.vmem [shape: f32[1,128], index: 3, kind: input, shape index: {}]
  %s4 = inlined_call_operand.hbm [shape: f32[16,128], index: 4, kind: output, shape index: {0}]
  %s5 = inlined_call_operand.hbm [shape: f32[1,128], index: 5, kind: output, shape index: {1}]
  %6 = xla_tuple %s4, %s5
  %s7 = sld [smem:[#allocation0]]
  $region73: #{tpu_custom_call.1} parent=0
    _
  %s9 = ssub.s32 1, %s7
  %s10 = scalar_select 0, %s9, %s7
  $region1: #{tpu_custom_call.1} parent=0
    #allocation2 [shape = 'u8[24576]{0}', space=vmem, size = 0x6000, scoped, tag = 'input window, operand 0']
    #allocation3 [shape = 's32[2]{0}', space=sflag, size = 0x8, scoped, tag = 'scoped memory for tpu_custom_call.1']
    #allocation4 [shape = 's32[2]{0}', space=sflag, size = 0x8, scoped, tag = 'scoped memory for tpu_custom_call.1']
    #allocation5 [shape = 'u8[512]{0}', space=vmem, size = 0x400, scoped, tag = 'input window, operand 1, single buffered']
    #allocation6 [shape = 's32[1]{0}', space=sflag, size = 0x4, scoped, tag = 'scoped memory for tpu_custom_call.1']
    #allocation7 [shape = 'u8[196608]{0}', space=vmem, size = 0x30000, scoped, tag = 'input window, operand 2, single buffered']
    #allocation8 [shape = 'u8[8192]{0}', space=vmem, size = 0x2000, scoped, tag = 'output window, operand 0']
    #allocation9 [shape = 'u8[512]{0}', space=vmem, size = 0x400, scoped, tag = 'output window, operand 1, single buffered']
    #allocation10 [shape = 's32[1]{0}', space=sflag, size = 0x4, scoped, tag = 'scoped memory for tpu_custom_call.1']
    %11 = vsyncpa [#allocation3], 0
    %s12 = scalar_lea.sflag [#allocation3], 1
    %13 = vsyncpa %s12, 0
    %14 = vsyncpa [#allocation6], 0
    %15 = vsyncpa [#allocation4], 0
    %s16 = scalar_lea.sflag [#allocation4], 1
    %17 = vsyncpa %s16, 0
    %18 = vsyncpa [#allocation10], 0
    loop: start=0, step=1, limit=4
    $region2: #{tpu_custom_call.1} parent=1 // loop_pre_header
      _
    $region3: #{tpu_custom_call.1} parent=1 // loop_header
      %s20 = sphi 0, %s24
      %p21 = scmp.ge.s32.totalorder %s20, 4
      %s30 = sphi 0, %s32
      %s33 = sphi 0, %s30
      %s34 = sphi 0, %s33
      %s50 = sphi 0, %s34
      %s54 = sphi 0, %s54
      %s56 = sphi 0, %s54
      %s57 = sphi 0, %s56
      %s71 = sphi 0, %s57
      %s75 = sphi 0, %s75
      %s77 = sphi 0, %s75
      %s78 = sphi 0, %s77
      %s92 = sphi 0, %s78
      %s96 = sphi 0, %s96
      %s98 = sphi 0, %s96
      %s99 = sphi 0, %s98
      %s113 = sphi 0, %s99
      %s119 = sphi 0, %s121
      %s122 = sphi 0, %s119
      %s123 = sphi 0, %s122
      %s139 = sphi 0, %s123
      %s143 = sphi 0, %s143
      %s145 = sphi 0, %s143
      %s146 = sphi 0, %s145
      %s160 = sphi 0, %s146
    $region4: #{tpu_custom_call.1} parent=1 // loop_header_branch
      %23 = sbr.rel (%p21) target = $region8
    $region5: #{tpu_custom_call.1} parent=1 // loop_body
      %s25 = ssub.s32 %s20, 1
      %s26 = ssub.s32 %s20, 2
      %s27 = sadd.s32 %s20, 1
      %s28 = ssub.s32 %s20, %s27
      %p29 = scmp.eq.s32.totalorder %s28, 0
      %s31 = sadd.s32 %s30, 1
      %s32 = scalar_select %p29, %s30, %s31
      %p35 = pneg %p29
      %p36 = scmp.eq.s32.totalorder %s20, 1
      %p37 = por %p35, %p36
      %p38 = scmp.ne.s32.totalorder %s30, %s33
      %p39 = scmp.eq.s32.totalorder %s20, 0
      %p40 = por %p38, %p39
      %p41 = scmp.ne.s32.totalorder %s30, %s33
      %p42 = scmp.eq.s32.totalorder %s25, 1
      %p43 = por %p41, %p42
      %p44 = scmp.ne.s32.totalorder %s33, %s34
      %p45 = scmp.eq.s32.totalorder %s25, 0
      %p46 = por %p44, %p45
      %p47 = scmp.ne.s32.totalorder %s33, %s34
      %p48 = scmp.eq.s32.totalorder %s26, 1
      %p49 = por %p47, %p48
      %p51 = scmp.ne.s32.totalorder %s34, %s50
      %p52 = scmp.eq.s32.totalorder %s26, 0
      %p53 = por %p51, %p52
      %s55 = sadd.s32 %s54, 1
      %p58 = scmp.eq.s32.totalorder %s20, 1
      %p59 = scmp.ne.s32.totalorder %s54, %s56
      %p60 = scmp.eq.s32.totalorder %s20, 0
      %p61 = por %p59, %p60
      %p62 = scmp.ne.s32.totalorder %s54, %s56
      %p63 = scmp.eq.s32.totalorder %s25, 1
      %p64 = por %p62, %p63
      %p65 = scmp.ne.s32.totalorder %s56, %s57
      %p66 = scmp.eq.s32.totalorder %s25, 0
      %p67 = por %p65, %p66
      %p68 = scmp.ne.s32.totalorder %s56, %s57
      %p69 = scmp.eq.s32.totalorder %s26, 1
      %p70 = por %p68, %p69
      %p72 = scmp.ne.s32.totalorder %s57, %s71
      %p73 = scmp.eq.s32.totalorder %s26, 0
      %p74 = por %p72, %p73
      %s76 = sadd.s32 %s75, 1
      %p79 = scmp.eq.s32.totalorder %s20, 1
      %p80 = scmp.ne.s32.totalorder %s75, %s77
      %p81 = scmp.eq.s32.totalorder %s20, 0
      %p82 = por %p80, %p81
      %p83 = scmp.ne.s32.totalorder %s75, %s77
      %p84 = scmp.eq.s32.totalorder %s25, 1
      %p85 = por %p83, %p84
      %p86 = scmp.ne.s32.totalorder %s77, %s78
      %p87 = scmp.eq.s32.totalorder %s25, 0
      %p88 = por %p86, %p87
      %p89 = scmp.ne.s32.totalorder %s77, %s78
      %p90 = scmp.eq.s32.totalorder %s26, 1
      %p91 = por %p89, %p90
      %p93 = scmp.ne.s32.totalorder %s78, %s92
      %p94 = scmp.eq.s32.totalorder %s26, 0
      %p95 = por %p93, %p94
      %s97 = sadd.s32 %s96, 1
      %p100 = scmp.eq.s32.totalorder %s20, 1
      %p101 = scmp.ne.s32.totalorder %s96, %s98
      %p102 = scmp.eq.s32.totalorder %s20, 0
      %p103 = por %p101, %p102
      %p104 = scmp.ne.s32.totalorder %s96, %s98
      %p105 = scmp.eq.s32.totalorder %s25, 1
      %p106 = por %p104, %p105
      %p107 = scmp.ne.s32.totalorder %s98, %s99
      %p108 = scmp.eq.s32.totalorder %s25, 0
      %p109 = por %p107, %p108
      %p110 = scmp.ne.s32.totalorder %s98, %s99
      %p111 = scmp.eq.s32.totalorder %s26, 1
      %p112 = por %p110, %p111
      %p114 = scmp.ne.s32.totalorder %s99, %s113
      %p115 = scmp.eq.s32.totalorder %s26, 0
      %p116 = por %p114, %p115
      %s117 = ssub.s32 %s20, %s27
      %p118 = scmp.eq.s32.totalorder %s117, 0
      %s120 = sadd.s32 %s119, 1
      %s121 = scalar_select %p118, %s119, %s120
      %p124 = pneg %p118
      %p125 = scmp.eq.s32.totalorder %s20, 1
      %p126 = por %p124, %p125
      %p127 = scmp.ne.s32.totalorder %s119, %s122
      %p128 = scmp.eq.s32.totalorder %s20, 0
      %p129 = por %p127, %p128
      %p130 = scmp.ne.s32.totalorder %s119, %s122
      %p131 = scmp.eq.s32.totalorder %s25, 1
      %p132 = por %p130, %p131
      %p133 = scmp.ne.s32.totalorder %s122, %s123
      %p134 = scmp.eq.s32.totalorder %s25, 0
      %p135 = por %p133, %p134
      %p136 = scmp.ne.s32.totalorder %s122, %s123
      %p137 = scmp.eq.s32.totalorder %s26, 1
      %p138 = por %p136, %p137
      %p140 = scmp.ne.s32.totalorder %s123, %s139
      %p141 = scmp.eq.s32.totalorder %s26, 0
      %p142 = por %p140, %p141
      %s144 = sadd.s32 %s143, 1
      %p147 = scmp.eq.s32.totalorder %s20, 1
      %p148 = scmp.ne.s32.totalorder %s143, %s145
      %p149 = scmp.eq.s32.totalorder %s20, 0
      %p150 = por %p148, %p149
      %p151 = scmp.ne.s32.totalorder %s143, %s145
      %p152 = scmp.eq.s32.totalorder %s25, 1
      %p153 = por %p151, %p152
      %p154 = scmp.ne.s32.totalorder %s145, %s146
      %p155 = scmp.eq.s32.totalorder %s25, 0
      %p156 = por %p154, %p155
      %p157 = scmp.ne.s32.totalorder %s145, %s146
      %p158 = scmp.eq.s32.totalorder %s26, 1
      %p159 = por %p157, %p158
      %p161 = scmp.ne.s32.totalorder %s146, %s160
      %p162 = scmp.eq.s32.totalorder %s26, 0
      %p163 = por %p161, %p162
      %p164 = scmp.le.s32.totalorder 1, %s20
      %p165 = scmp.lt.s32.totalorder %s20, 3
      %p166 = pnand %p164, %p165
      %p167 = pneg %p166
      // Predicated region
      $region9: #{tpu_custom_call.1} parent=5 // pred_check
        _
      $region10: #{tpu_custom_call.1} parent=5 // pred_check_branch
        %169 = sbr.rel (%p166) target = $region12
      $region11: #{tpu_custom_call.1} parent=5 // pred_region
        %s170 = ssub.s32 %s20, 1
        // Predicated region
        $region13: #{tpu_custom_call.1} parent=11 // pred_check
          %p171 = pneg %p67
        $region14: #{tpu_custom_call.1} parent=11 // pred_check_branch
          %173 = sbr.rel (%p171) target = $region16
        $region15: #{tpu_custom_call.1} parent=11 // pred_region
          %175 = vsyncadd [#allocation6], 0
          %s177 = sshll.u32 %s1, 4
          %s178 = int_to_ptr.hbm [resolvable:$true] %s177
          %s179 = sshll.u32 [#allocation5], 4
          %s180 = int_to_ptr.vmem [resolvable:$true] %s179
          %182 = dma.hbm_to_vmem [thread:$0]  %s178, 16, %s180, [#allocation6]
        $region16: #{tpu_custom_call.1} parent=11 // pred_fallthru
          _
        // Predicated region
        $region17: #{tpu_custom_call.1} parent=11 // pred_check
          %p183 = pneg %p88
        $region18: #{tpu_custom_call.1} parent=11 // pred_check_branch
          %185 = sbr.rel (%p183) target = $region20
        $region19: #{tpu_custom_call.1} parent=11 // pred_region
          %187 = vsyncadd [#allocation6], 0
          %s188 = sshll.u32 %s2, 4
          %s189 = int_to_ptr.hbm [resolvable:$true] %s188
          %s190 = sshll.u32 [#allocation7], 4
          %s191 = int_to_ptr.vmem [resolvable:$true] %s190
          %196 = dma.hbm_to_vmem [thread:$0]  %s189, 6144, %s191, [#allocation6], 384, 384, 24
        $region20: #{tpu_custom_call.1} parent=11 // pred_fallthru
          _
        // Predicated region
        $region21: #{tpu_custom_call.1} parent=11 // pred_check
          %p197 = pneg %p109
        $region22: #{tpu_custom_call.1} parent=11 // pred_check_branch
          %199 = sbr.rel (%p197) target = $region24
        $region23: #{tpu_custom_call.1} parent=11 // pred_region
          _
        $region24: #{tpu_custom_call.1} parent=11 // pred_fallthru
          _
      $region12: #{tpu_custom_call.1} parent=5 // pred_fallthru
        _
      %p200 = scmp.lt.s32.totalorder %s20, 2
      // Predicated region
      $region25: #{tpu_custom_call.1} parent=5 // pred_check
        %p201 = pneg %p200
      $region26: #{tpu_custom_call.1} parent=5 // pred_check_branch
        %203 = sbr.rel (%p201) target = $region28
      $region27: #{tpu_custom_call.1} parent=5 // pred_region
        // Predicated region
        $region29: #{tpu_custom_call.1} parent=27 // pred_check
          %p204 = pneg %p40
        $region30: #{tpu_custom_call.1} parent=27 // pred_check_branch
          %206 = sbr.rel (%p204) target = $region32
        $region31: #{tpu_custom_call.1} parent=27 // pred_region
          %s207 = sand.u32 %s30, 1
          %s208 = scalar_lea.sflag [#allocation3], %s207
          %s209 = sand.u32 %s30, 1
          %s210 = smul.addr %s209, 24
          %s211 = scalar_lea.vmem [#allocation2], %s210
          %213 = vsyncadd %s208, 0
          %s214 = smul.addr %s20, 3
          %s215 = smul.addr %s214, 8
          %s216 = scalar_lea.hbm %s0, %s215
          %s218 = sshll.u32 %s216, 4
          %s219 = int_to_ptr.hbm [resolvable:$true] %s218
          %s220 = sshll.u32 %s211, 4
          %s221 = int_to_ptr.vmem [resolvable:$true] %s220
          %223 = dma.hbm_to_vmem [thread:$0]  %s219, 384, %s221, %s208
        $region32: #{tpu_custom_call.1} parent=27 // pred_fallthru
          _
      $region28: #{tpu_custom_call.1} parent=5 // pred_fallthru
        _
      %p224 = scmp.le.s32.totalorder 1, %s20
      %p225 = scmp.lt.s32.totalorder %s20, 3
      %p226 = pnand %p224, %p225
      %p227 = pneg %p226
      // Predicated region
      $region33: #{tpu_custom_call.1} parent=5 // pred_check
        _
      $region34: #{tpu_custom_call.1} parent=5 // pred_check_branch
        %229 = sbr.rel (%p226) target = $region36
      $region35: #{tpu_custom_call.1} parent=5 // pred_region
        %s230 = ssub.s32 %s20, 1
        %s231 = sand.u32 %s33, 1
        %s232 = scalar_lea.sflag [#allocation3], %s231
        %s233 = sand.u32 %s33, 1
        %s234 = smul.addr %s233, 24
        %s235 = scalar_lea.vmem [#allocation2], %s234
        // Predicated region
        $region37: #{tpu_custom_call.1} parent=35 // pred_check
          %p236 = pneg %p46
        $region38: #{tpu_custom_call.1} parent=35 // pred_check_branch
          %238 = sbr.rel (%p236) target = $region40
        $region39: #{tpu_custom_call.1} parent=35 // pred_region
          %240 = dma.done %s232, 384
        $region40: #{tpu_custom_call.1} parent=35 // pred_fallthru
          _
        // Predicated region
        $region41: #{tpu_custom_call.1} parent=35 // pred_check
          %p241 = pneg %p67
        $region42: #{tpu_custom_call.1} parent=35 // pred_check_branch
          %243 = sbr.rel (%p241) target = $region44
        $region43: #{tpu_custom_call.1} parent=35 // pred_region
          %245 = dma.done [#allocation6], 16
        $region44: #{tpu_custom_call.1} parent=35 // pred_fallthru
          _
        // Predicated region
        $region45: #{tpu_custom_call.1} parent=35 // pred_check
          %p246 = pneg %p88
        $region46: #{tpu_custom_call.1} parent=35 // pred_check_branch
          %248 = sbr.rel (%p246) target = $region48
        $region47: #{tpu_custom_call.1} parent=35 // pred_region
          %250 = dma.done [#allocation6], 6144
        $region48: #{tpu_custom_call.1} parent=35 // pred_fallthru
          _
        %s251 = sand.u32 %s33, 1
        %s252 = scalar_lea.sflag [#allocation3], %s251
        %s253 = sand.u32 %s33, 1
        %s254 = smul.addr %s253, 24
        %s255 = scalar_lea.vmem [#allocation2], %s254
        %p256 = pneg %p46
        %p257 = pneg %p43
        %p258 = pneg %p67
        %p259 = pneg %p64
        %p260 = pneg %p88
        %p261 = pneg %p85
        %p262 = pneg %p109
        %p263 = pneg %p106
        %p264 = pneg %p135
        %p265 = pneg %p132
        %s266 = sand.u32 %s122, 1
        %s267 = scalar_lea.sflag [#allocation4], %s266
        %s268 = sand.u32 %s122, 1
        %s269 = smul.addr %s268, 8
        %s270 = scalar_lea.vmem [#allocation8], %s269
        %p271 = pneg %p156
        %p272 = pneg %p153
        %p273 = scmp.eq.s32.totalorder %s25, 0
        // Predicated region
        $region49: #{tpu_custom_call.1} parent=35 // pred_check
          %p274 = pneg %p273
        $region50: #{tpu_custom_call.1} parent=35 // pred_check_branch
          %276 = sbr.rel (%p274) target = $region52
        $region51: #{tpu_custom_call.1} parent=35 // pred_region
          %v277 = vld [vmem:[#allocation5] sm:$0x1]
          %278 = vst [vmem:[#allocation9] sm:$0x1] %v277
        $region52: #{tpu_custom_call.1} parent=35 // pred_fallthru
          _
        %v279 = vld [vmem:[#allocation7] sm:$0xff]
        %v280 = vld [vmem:[#allocation7 + $0x8] sm:$0xff]
        %v281 = vld [vmem:[#allocation7 + $0x10] sm:$0xff]
        %v282 = vld [vmem:[#allocation7 + $0x18] sm:$0xff]
        %v283 = vld [vmem:[#allocation7 + $0x20] sm:$0xff]
        %v284 = vld [vmem:[#allocation7 + $0x28] sm:$0xff]
        %v285 = vld [vmem:[#allocation7 + $0x30] sm:$0xff]
        %v286 = vld [vmem:[#allocation7 + $0x38] sm:$0xff]
        %v287 = vld [vmem:[#allocation7 + $0x40] sm:$0xff]
        %v288 = vld [vmem:[#allocation7 + $0x48] sm:$0xff]
        %v289 = vld [vmem:[#allocation7 + $0x50] sm:$0xff]
        %v290 = vld [vmem:[#allocation7 + $0x58] sm:$0xff]
        %v291 = vld [vmem:[#allocation7 + $0x60] sm:$0xff]
        %v292 = vld [vmem:[#allocation7 + $0x68] sm:$0xff]
        %v293 = vld [vmem:[#allocation7 + $0x70] sm:$0xff]
        %v294 = vld [vmem:[#allocation7 + $0x78] sm:$0xff]
        %v295 = vld [vmem:[#allocation7 + $0x80] sm:$0xff]
        %v296 = vld [vmem:[#allocation7 + $0x88] sm:$0xff]
        %v297 = vld [vmem:[#allocation7 + $0x90] sm:$0xff]
        %v298 = vld [vmem:[#allocation7 + $0x98] sm:$0xff]
        %v299 = vld [vmem:[#allocation7 + $0xa0] sm:$0xff]
        %v300 = vld [vmem:[#allocation7 + $0xa8] sm:$0xff]
        %v301 = vld [vmem:[#allocation7 + $0xb0] sm:$0xff]
        %v302 = vld [vmem:[#allocation7 + $0xb8] sm:$0xff]
        %v303 = vld [vmem:[#allocation7 + $0xc0] sm:$0xff]
        %v304 = vld [vmem:[#allocation7 + $0xc8] sm:$0xff]
        %v305 = vld [vmem:[#allocation7 + $0xd0] sm:$0xff]
        %v306 = vld [vmem:[#allocation7 + $0xd8] sm:$0xff]
        %v307 = vld [vmem:[#allocation7 + $0xe0] sm:$0xff]
        %v308 = vld [vmem:[#allocation7 + $0xe8] sm:$0xff]
        %v309 = vld [vmem:[#allocation7 + $0xf0] sm:$0xff]
        %v310 = vld [vmem:[#allocation7 + $0xf8] sm:$0xff]
        %v311 = vld [vmem:[#allocation7 + $0x100] sm:$0xff]
        %v312 = vld [vmem:[#allocation7 + $0x108] sm:$0xff]
        %v313 = vld [vmem:[#allocation7 + $0x110] sm:$0xff]
        %v314 = vld [vmem:[#allocation7 + $0x118] sm:$0xff]
        %v315 = vld [vmem:[#allocation7 + $0x120] sm:$0xff]
        %v316 = vld [vmem:[#allocation7 + $0x128] sm:$0xff]
        %v317 = vld [vmem:[#allocation7 + $0x130] sm:$0xff]
        %v318 = vld [vmem:[#allocation7 + $0x138] sm:$0xff]
        %v319 = vld [vmem:[#allocation7 + $0x140] sm:$0xff]
        %v320 = vld [vmem:[#allocation7 + $0x148] sm:$0xff]
        %v321 = vld [vmem:[#allocation7 + $0x150] sm:$0xff]
        %v322 = vld [vmem:[#allocation7 + $0x158] sm:$0xff]
        %v323 = vld [vmem:[#allocation7 + $0x160] sm:$0xff]
        %v324 = vld [vmem:[#allocation7 + $0x168] sm:$0xff]
        %v325 = vld [vmem:[#allocation7 + $0x170] sm:$0xff]
        %v326 = vld [vmem:[#allocation7 + $0x178] sm:$0xff]
        %v327 = vld [vmem:[%s3] sm:$0x1]
        %v328 = vld [vmem:[#allocation9] sm:$0x1]
        %v329 = vld [vmem:[%s235] ss:$8 sm:$0x7]
        %330 = vmatpush.msra.mxu0 %v324
        %331 = vmatpush.msra.mxu0 %v321
        %332 = vmatpush.msra.mxu0 %v318
        %333 = vmatpush.msra.mxu0 %v315
        %334 = vmatpush.msra.mxu0 %v312
        %335 = vmatpush.msra.mxu0 %v309
        %336 = vmatpush.msra.mxu0 %v306
        %337 = vmatpush.msra.mxu0 %v303
        %338 = vmatpush.msra.mxu0 %v300
        %339 = vmatpush.msra.mxu0 %v297
        %340 = vmatpush.msra.mxu0 %v294
        %341 = vmatpush.msra.mxu0 %v291
        %342 = vmatpush.msra.mxu0 %v288
        %343 = vmatpush.msra.mxu0 %v285
        %344 = vmatpush.msra.mxu0 %v282
        %345 = vmatpush.msra.mxu0 %v279
        %346 = vmatmul.f32.gmra.mxu0 %v328
        %v347 = vpop.f32.mrf.mxu0
        %v348 = vadd.f32 0.0, %v347
        %349 = vdwg.mxu0
        %350 = vmatpush.msra.mxu0 %v325
        %351 = vmatpush.msra.mxu0 %v322
        %352 = vmatpush.msra.mxu0 %v319
        %353 = vmatpush.msra.mxu0 %v316
        %354 = vmatpush.msra.mxu0 %v313
        %355 = vmatpush.msra.mxu0 %v310
        %356 = vmatpush.msra.mxu0 %v307
        %357 = vmatpush.msra.mxu0 %v304
        %358 = vmatpush.msra.mxu0 %v301
        %359 = vmatpush.msra.mxu0 %v298
        %360 = vmatpush.msra.mxu0 %v295
        %361 = vmatpush.msra.mxu0 %v292
        %362 = vmatpush.msra.mxu0 %v289
        %363 = vmatpush.msra.mxu0 %v286
        %364 = vmatpush.msra.mxu0 %v283
        %365 = vmatpush.msra.mxu0 %v280
        %366 = vmatmul.f32.gmra.mxu0 %v328
        %v367 = vpop.f32.mrf.mxu0
        %v368 = vadd.f32 0.0, %v367
        %369 = vdwg.mxu0
        %370 = vmatpush.msra.mxu0 %v326
        %371 = vmatpush.msra.mxu0 %v323
        %372 = vmatpush.msra.mxu0 %v320
        %373 = vmatpush.msra.mxu0 %v317
        %374 = vmatpush.msra.mxu0 %v314
        %375 = vmatpush.msra.mxu0 %v311
        %376 = vmatpush.msra.mxu0 %v308
        %377 = vmatpush.msra.mxu0 %v305
        %378 = vmatpush.msra.mxu0 %v302
        %379 = vmatpush.msra.mxu0 %v299
        %380 = vmatpush.msra.mxu0 %v296
        %381 = vmatpush.msra.mxu0 %v293
        %382 = vmatpush.msra.mxu0 %v290
        %383 = vmatpush.msra.mxu0 %v287
        %384 = vmatpush.msra.mxu0 %v284
        %385 = vmatpush.msra.mxu0 %v281
        %386 = vmatmul.f32.gmra.mxu0 %v328
        %v387 = vpop.f32.mrf.mxu0
        %v388 = vadd.f32 0.0, %v387
        %389 = vdwg.mxu0
        %v390 = vadd.f32 %v329, %v348
        %v391 = vxor.u32 %v390, 2147483648
        %v392 = vmul.f32 %v391, 1.442695
        %v393 = vpow.pop %v392
        %v394 = vadd.f32 %v393, 1.0
        %v395 = vrcp.pop %v394
        %v396 = vmul.f32 %v394, %v395
        %v397 = vsub.f32 1.0, %v396
        %v398 = vmul.f32 %v395, %v397
        %v399 = vadd.f32 %v395, %v398
        %vm400 = vweird.f32 %v394
        %vm401 = vweird.f32 %v395
        %vm402 = vmor %vm400, %vm401
        %v403 = vsel %vm402, %v395, %v399
        %v404 = vand.u32 2147483647, %v394
        %vm405 = vcmp.eq.f32.partialorder %v404, 8.507059e+37
        %v406 = vand.u32 %v394, 2147483648
        %v407 = vor.u32 1.1754944e-38, %v406
        %v408 = vsel %vm405, %v407, %v403
        %v409 = vmul.f32 1.0, %v408
        %v411 = vrot.slane %v329, 1
        %v413 = vadd.f32 %v411, %v368
        %v414 = vxor.u32 %v413, 2147483648
        %v415 = vmul.f32 %v414, 1.442695
        %v416 = vpow.pop %v415
        %v417 = vadd.f32 %v416, 1.0
        %v418 = vrcp.pop %v417
        %v419 = vmul.f32 %v417, %v418
        %v420 = vsub.f32 1.0, %v419
        %v421 = vmul.f32 %v418, %v420
        %v422 = vadd.f32 %v418, %v421
        %vm423 = vweird.f32 %v417
        %vm424 = vweird.f32 %v418
        %vm425 = vmor %vm423, %vm424
        %v426 = vsel %vm425, %v418, %v422
        %v427 = vand.u32 2147483647, %v417
        %vm428 = vcmp.eq.f32.partialorder %v427, 8.507059e+37
        %v429 = vand.u32 %v417, 2147483648
        %v430 = vor.u32 1.1754944e-38, %v429
        %v431 = vsel %vm428, %v430, %v426
        %v432 = vmul.f32 1.0, %v431
        %v433 = vadd.f32 %v388, %v327
        %v434 = vmul.f32 %v409, %v433
        %v435 = vrot.slane %v329, 2
        %v437 = vadd.f32 %v435, %v434
        %v438 = vtanh.pop %v437
        %v439 = vsub.f32 1.0, %v432
        %v440 = vmul.f32 %v439, %v438
        %v441 = vmul.f32 %v432, %v328
        %v442 = vadd.f32 %v440, %v441
        %443 = vst [vmem:[%s270] sm:$0x1] %v442
        %s444 = scalar_lea.vmem %s235, 1 [#allocation2]
        %v445 = vld [vmem:[%s444] ss:$8 sm:$0x7]
        %446 = vmatpush.msra.mxu0 %v324
        %447 = vmatpush.msra.mxu0 %v321
        %448 = vmatpush.msra.mxu0 %v318
        %449 = vmatpush.msra.mxu0 %v315
        %450 = vmatpush.msra.mxu0 %v312
        %451 = vmatpush.msra.mxu0 %v309
        %452 = vmatpush.msra.mxu0 %v306
        %453 = vmatpush.msra.mxu0 %v303
        %454 = vmatpush.msra.mxu0 %v300
        %455 = vmatpush.msra.mxu0 %v297
        %456 = vmatpush.msra.mxu0 %v294
        %457 = vmatpush.msra.mxu0 %v291
        %458 = vmatpush.msra.mxu0 %v288
        %459 = vmatpush.msra.mxu0 %v285
        %460 = vmatpush.msra.mxu0 %v282
        %461 = vmatpush.msra.mxu0 %v279
        %462 = vmatmul.f32.gmra.mxu0 %v442
        %v463 = vpop.f32.mrf.mxu0
        %v464 = vadd.f32 0.0, %v463
        %465 = vdwg.mxu0
        %466 = vmatpush.msra.mxu0 %v325
        %467 = vmatpush.msra.mxu0 %v322
        %468 = vmatpush.msra.mxu0 %v319
        %469 = vmatpush.msra.mxu0 %v316
        %470 = vmatpush.msra.mxu0 %v313
        %471 = vmatpush.msra.mxu0 %v310
        %472 = vmatpush.msra.mxu0 %v307
        %473 = vmatpush.msra.mxu0 %v304
        %474 = vmatpush.msra.mxu0 %v301
        %475 = vmatpush.msra.mxu0 %v298
        %476 = vmatpush.msra.mxu0 %v295
        %477 = vmatpush.msra.mxu0 %v292
        %478 = vmatpush.msra.mxu0 %v289
        %479 = vmatpush.msra.mxu0 %v286
        %480 = vmatpush.msra.mxu0 %v283
        %481 = vmatpush.msra.mxu0 %v280
        %482 = vmatmul.f32.gmra.mxu0 %v442
        %v483 = vpop.f32.mrf.mxu0
        %v484 = vadd.f32 0.0, %v483
        %485 = vdwg.mxu0
        %486 = vmatpush.msra.mxu0 %v326
        %487 = vmatpush.msra.mxu0 %v323
        %488 = vmatpush.msra.mxu0 %v320
        %489 = vmatpush.msra.mxu0 %v317
        %490 = vmatpush.msra.mxu0 %v314
        %491 = vmatpush.msra.mxu0 %v311
        %492 = vmatpush.msra.mxu0 %v308
        %493 = vmatpush.msra.mxu0 %v305
        %494 = vmatpush.msra.mxu0 %v302
        %495 = vmatpush.msra.mxu0 %v299
        %496 = vmatpush.msra.mxu0 %v296
        %497 = vmatpush.msra.mxu0 %v293
        %498 = vmatpush.msra.mxu0 %v290
        %499 = vmatpush.msra.mxu0 %v287
        %500 = vmatpush.msra.mxu0 %v284
        %501 = vmatpush.msra.mxu0 %v281
        %502 = vmatmul.f32.gmra.mxu0 %v442
        %v503 = vpop.f32.mrf.mxu0
        %v504 = vadd.f32 0.0, %v503
        %505 = vdwg.mxu0
        %v506 = vadd.f32 %v445, %v464
        %v507 = vxor.u32 %v506, 2147483648
        %v508 = vmul.f32 %v507, 1.442695
        %v509 = vpow.pop %v508
        %v510 = vadd.f32 %v509, 1.0
        %v511 = vrcp.pop %v510
        %v512 = vmul.f32 %v510, %v511
        %v513 = vsub.f32 1.0, %v512
        %v514 = vmul.f32 %v511, %v513
        %v515 = vadd.f32 %v511, %v514
        %vm516 = vweird.f32 %v510
        %vm517 = vweird.f32 %v511
        %vm518 = vmor %vm516, %vm517
        %v519 = vsel %vm518, %v511, %v515
        %v520 = vand.u32 2147483647, %v510
        %vm521 = vcmp.eq.f32.partialorder %v520, 8.507059e+37
        %v522 = vand.u32 %v510, 2147483648
        %v523 = vor.u32 1.1754944e-38, %v522
        %v524 = vsel %vm521, %v523, %v519
        %v525 = vmul.f32 1.0, %v524
        %v527 = vrot.slane %v445, 1
        %v529 = vadd.f32 %v527, %v484
        %v530 = vxor.u32 %v529, 2147483648
        %v531 = vmul.f32 %v530, 1.442695
        %v532 = vpow.pop %v531
        %v533 = vadd.f32 %v532, 1.0
        %v534 = vrcp.pop %v533
        %v535 = vmul.f32 %v533, %v534
        %v536 = vsub.f32 1.0, %v535
        %v537 = vmul.f32 %v534, %v536
        %v538 = vadd.f32 %v534, %v537
        %vm539 = vweird.f32 %v533
        %vm540 = vweird.f32 %v534
        %vm541 = vmor %vm539, %vm540
        %v542 = vsel %vm541, %v534, %v538
        %v543 = vand.u32 2147483647, %v533
        %vm544 = vcmp.eq.f32.partialorder %v543, 8.507059e+37
        %v545 = vand.u32 %v533, 2147483648
        %v546 = vor.u32 1.1754944e-38, %v545
        %v547 = vsel %vm544, %v546, %v542
        %v548 = vmul.f32 1.0, %v547
        %v549 = vadd.f32 %v504, %v327
        %v550 = vmul.f32 %v525, %v549
        %v551 = vrot.slane %v445, 2
        %v553 = vadd.f32 %v551, %v550
        %v554 = vtanh.pop %v553
        %v555 = vsub.f32 1.0, %v548
        %v556 = vmul.f32 %v555, %v554
        %v557 = vmul.f32 %v548, %v442
        %v558 = vadd.f32 %v556, %v557
        %559 = vst [vmem:[%s270 + $0x1] sm:$0x1] %v558
        %s560 = scalar_lea.vmem %s235, 2 [#allocation2]
        %v561 = vld [vmem:[%s560] ss:$8 sm:$0x7]
        %562 = vmatpush.msra.mxu0 %v324
        %563 = vmatpush.msra.mxu0 %v321
        %564 = vmatpush.msra.mxu0 %v318
        %565 = vmatpush.msra.mxu0 %v315
        %566 = vmatpush.msra.mxu0 %v312
        %567 = vmatpush.msra.mxu0 %v309
        %568 = vmatpush.msra.mxu0 %v306
        %569 = vmatpush.msra.mxu0 %v303
        %570 = vmatpush.msra.mxu0 %v300
        %571 = vmatpush.msra.mxu0 %v297
        %572 = vmatpush.msra.mxu0 %v294
        %573 = vmatpush.msra.mxu0 %v291
        %574 = vmatpush.msra.mxu0 %v288
        %575 = vmatpush.msra.mxu0 %v285
        %576 = vmatpush.msra.mxu0 %v282
        %577 = vmatpush.msra.mxu0 %v279
        %578 = vmatmul.f32.gmra.mxu0 %v558
        %v579 = vpop.f32.mrf.mxu0
        %v580 = vadd.f32 0.0, %v579
        %581 = vdwg.mxu0
        %582 = vmatpush.msra.mxu0 %v325
        %583 = vmatpush.msra.mxu0 %v322
        %584 = vmatpush.msra.mxu0 %v319
        %585 = vmatpush.msra.mxu0 %v316
        %586 = vmatpush.msra.mxu0 %v313
        %587 = vmatpush.msra.mxu0 %v310
        %588 = vmatpush.msra.mxu0 %v307
        %589 = vmatpush.msra.mxu0 %v304
        %590 = vmatpush.msra.mxu0 %v301
        %591 = vmatpush.msra.mxu0 %v298
        %592 = vmatpush.msra.mxu0 %v295
        %593 = vmatpush.msra.mxu0 %v292
        %594 = vmatpush.msra.mxu0 %v289
        %595 = vmatpush.msra.mxu0 %v286
        %596 = vmatpush.msra.mxu0 %v283
        %597 = vmatpush.msra.mxu0 %v280
        %598 = vmatmul.f32.gmra.mxu0 %v558
        %v599 = vpop.f32.mrf.mxu0
        %v600 = vadd.f32 0.0, %v599
        %601 = vdwg.mxu0
        %602 = vmatpush.msra.mxu0 %v326
        %603 = vmatpush.msra.mxu0 %v323
        %604 = vmatpush.msra.mxu0 %v320
        %605 = vmatpush.msra.mxu0 %v317
        %606 = vmatpush.msra.mxu0 %v314
        %607 = vmatpush.msra.mxu0 %v311
        %608 = vmatpush.msra.mxu0 %v308
        %609 = vmatpush.msra.mxu0 %v305
        %610 = vmatpush.msra.mxu0 %v302
        %611 = vmatpush.msra.mxu0 %v299
        %612 = vmatpush.msra.mxu0 %v296
        %613 = vmatpush.msra.mxu0 %v293
        %614 = vmatpush.msra.mxu0 %v290
        %615 = vmatpush.msra.mxu0 %v287
        %616 = vmatpush.msra.mxu0 %v284
        %617 = vmatpush.msra.mxu0 %v281
        %618 = vmatmul.f32.gmra.mxu0 %v558
        %v619 = vpop.f32.mrf.mxu0
        %v620 = vadd.f32 0.0, %v619
        %621 = vdwg.mxu0
        %v622 = vadd.f32 %v561, %v580
        %v623 = vxor.u32 %v622, 2147483648
        %v624 = vmul.f32 %v623, 1.442695
        %v625 = vpow.pop %v624
        %v626 = vadd.f32 %v625, 1.0
        %v627 = vrcp.pop %v626
        %v628 = vmul.f32 %v626, %v627
        %v629 = vsub.f32 1.0, %v628
        %v630 = vmul.f32 %v627, %v629
        %v631 = vadd.f32 %v627, %v630
        %vm632 = vweird.f32 %v626
        %vm633 = vweird.f32 %v627
        %vm634 = vmor %vm632, %vm633
        %v635 = vsel %vm634, %v627, %v631
        %v636 = vand.u32 2147483647, %v626
        %vm637 = vcmp.eq.f32.partialorder %v636, 8.507059e+37
        %v638 = vand.u32 %v626, 2147483648
        %v639 = vor.u32 1.1754944e-38, %v638
        %v640 = vsel %vm637, %v639, %v635
        %v641 = vmul.f32 1.0, %v640
        %v643 = vrot.slane %v561, 1
        %v645 = vadd.f32 %v643, %v600
        %v646 = vxor.u32 %v645, 2147483648
        %v647 = vmul.f32 %v646, 1.442695
        %v648 = vpow.pop %v647
        %v649 = vadd.f32 %v648, 1.0
        %v650 = vrcp.pop %v649
        %v651 = vmul.f32 %v649, %v650
        %v652 = vsub.f32 1.0, %v651
        %v653 = vmul.f32 %v650, %v652
        %v654 = vadd.f32 %v650, %v653
        %vm655 = vweird.f32 %v649
        %vm656 = vweird.f32 %v650
        %vm657 = vmor %vm655, %vm656
        %v658 = vsel %vm657, %v650, %v654
        %v659 = vand.u32 2147483647, %v649
        %vm660 = vcmp.eq.f32.partialorder %v659, 8.507059e+37
        %v661 = vand.u32 %v649, 2147483648
        %v662 = vor.u32 1.1754944e-38, %v661
        %v663 = vsel %vm660, %v662, %v658
        %v664 = vmul.f32 1.0, %v663
        %v665 = vadd.f32 %v620, %v327
        %v666 = vmul.f32 %v641, %v665
        %v667 = vrot.slane %v561, 2
        %v669 = vadd.f32 %v667, %v666
        %v670 = vtanh.pop %v669
        %v671 = vsub.f32 1.0, %v664
        %v672 = vmul.f32 %v671, %v670
        %v673 = vmul.f32 %v664, %v558
        %v674 = vadd.f32 %v672, %v673
        %675 = vst [vmem:[%s270 + $0x2] sm:$0x1] %v674
        %s676 = scalar_lea.vmem %s235, 3 [#allocation2]
        %v677 = vld [vmem:[%s676] ss:$8 sm:$0x7]
        %678 = vmatpush.msra.mxu0 %v324
        %679 = vmatpush.msra.mxu0 %v321
        %680 = vmatpush.msra.mxu0 %v318
        %681 = vmatpush.msra.mxu0 %v315
        %682 = vmatpush.msra.mxu0 %v312
        %683 = vmatpush.msra.mxu0 %v309
        %684 = vmatpush.msra.mxu0 %v306
        %685 = vmatpush.msra.mxu0 %v303
        %686 = vmatpush.msra.mxu0 %v300
        %687 = vmatpush.msra.mxu0 %v297
        %688 = vmatpush.msra.mxu0 %v294
        %689 = vmatpush.msra.mxu0 %v291
        %690 = vmatpush.msra.mxu0 %v288
        %691 = vmatpush.msra.mxu0 %v285
        %692 = vmatpush.msra.mxu0 %v282
        %693 = vmatpush.msra.mxu0 %v279
        %694 = vmatmul.f32.gmra.mxu0 %v674
        %v695 = vpop.f32.mrf.mxu0
        %v696 = vadd.f32 0.0, %v695
        %697 = vdwg.mxu0
        %698 = vmatpush.msra.mxu0 %v325
        %699 = vmatpush.msra.mxu0 %v322
        %700 = vmatpush.msra.mxu0 %v319
        %701 = vmatpush.msra.mxu0 %v316
        %702 = vmatpush.msra.mxu0 %v313
        %703 = vmatpush.msra.mxu0 %v310
        %704 = vmatpush.msra.mxu0 %v307
        %705 = vmatpush.msra.mxu0 %v304
        %706 = vmatpush.msra.mxu0 %v301
        %707 = vmatpush.msra.mxu0 %v298
        %708 = vmatpush.msra.mxu0 %v295
        %709 = vmatpush.msra.mxu0 %v292
        %710 = vmatpush.msra.mxu0 %v289
        %711 = vmatpush.msra.mxu0 %v286
        %712 = vmatpush.msra.mxu0 %v283
        %713 = vmatpush.msra.mxu0 %v280
        %714 = vmatmul.f32.gmra.mxu0 %v674
        %v715 = vpop.f32.mrf.mxu0
        %v716 = vadd.f32 0.0, %v715
        %717 = vdwg.mxu0
        %718 = vmatpush.msra.mxu0 %v326
        %719 = vmatpush.msra.mxu0 %v323
        %720 = vmatpush.msra.mxu0 %v320
        %721 = vmatpush.msra.mxu0 %v317
        %722 = vmatpush.msra.mxu0 %v314
        %723 = vmatpush.msra.mxu0 %v311
        %724 = vmatpush.msra.mxu0 %v308
        %725 = vmatpush.msra.mxu0 %v305
        %726 = vmatpush.msra.mxu0 %v302
        %727 = vmatpush.msra.mxu0 %v299
        %728 = vmatpush.msra.mxu0 %v296
        %729 = vmatpush.msra.mxu0 %v293
        %730 = vmatpush.msra.mxu0 %v290
        %731 = vmatpush.msra.mxu0 %v287
        %732 = vmatpush.msra.mxu0 %v284
        %733 = vmatpush.msra.mxu0 %v281
        %734 = vmatmul.f32.gmra.mxu0 %v674
        %v735 = vpop.f32.mrf.mxu0
        %v736 = vadd.f32 0.0, %v735
        %737 = vdwg.mxu0
        %v738 = vadd.f32 %v677, %v696
        %v739 = vxor.u32 %v738, 2147483648
        %v740 = vmul.f32 %v739, 1.442695
        %v741 = vpow.pop %v740
        %v742 = vadd.f32 %v741, 1.0
        %v743 = vrcp.pop %v742
        %v744 = vmul.f32 %v742, %v743
        %v745 = vsub.f32 1.0, %v744
        %v746 = vmul.f32 %v743, %v745
        %v747 = vadd.f32 %v743, %v746
        %vm748 = vweird.f32 %v742
        %vm749 = vweird.f32 %v743
        %vm750 = vmor %vm748, %vm749
        %v751 = vsel %vm750, %v743, %v747
        %v752 = vand.u32 2147483647, %v742
        %vm753 = vcmp.eq.f32.partialorder %v752, 8.507059e+37
        %v754 = vand.u32 %v742, 2147483648
        %v755 = vor.u32 1.1754944e-38, %v754
        %v756 = vsel %vm753, %v755, %v751
        %v757 = vmul.f32 1.0, %v756
        %v759 = vrot.slane %v677, 1
        %v761 = vadd.f32 %v759, %v716
        %v762 = vxor.u32 %v761, 2147483648
        %v763 = vmul.f32 %v762, 1.442695
        %v764 = vpow.pop %v763
        %v765 = vadd.f32 %v764, 1.0
        %v766 = vrcp.pop %v765
        %v767 = vmul.f32 %v765, %v766
        %v768 = vsub.f32 1.0, %v767
        %v769 = vmul.f32 %v766, %v768
        %v770 = vadd.f32 %v766, %v769
        %vm771 = vweird.f32 %v765
        %vm772 = vweird.f32 %v766
        %vm773 = vmor %vm771, %vm772
        %v774 = vsel %vm773, %v766, %v770
        %v775 = vand.u32 2147483647, %v765
        %vm776 = vcmp.eq.f32.partialorder %v775, 8.507059e+37
        %v777 = vand.u32 %v765, 2147483648
        %v778 = vor.u32 1.1754944e-38, %v777
        %v779 = vsel %vm776, %v778, %v774
        %v780 = vmul.f32 1.0, %v779
        %v781 = vadd.f32 %v736, %v327
        %v782 = vmul.f32 %v757, %v781
        %v783 = vrot.slane %v677, 2
        %v785 = vadd.f32 %v783, %v782
        %v786 = vtanh.pop %v785
        %v787 = vsub.f32 1.0, %v780
        %v788 = vmul.f32 %v787, %v786
        %v789 = vmul.f32 %v780, %v674
        %v790 = vadd.f32 %v788, %v789
        %791 = vst [vmem:[%s270 + $0x3] sm:$0x1] %v790
        %s792 = scalar_lea.vmem %s235, 4 [#allocation2]
        %v793 = vld [vmem:[%s792] ss:$8 sm:$0x7]
        %794 = vmatpush.msra.mxu0 %v324
        %795 = vmatpush.msra.mxu0 %v321
        %796 = vmatpush.msra.mxu0 %v318
        %797 = vmatpush.msra.mxu0 %v315
        %798 = vmatpush.msra.mxu0 %v312
        %799 = vmatpush.msra.mxu0 %v309
        %800 = vmatpush.msra.mxu0 %v306
        %801 = vmatpush.msra.mxu0 %v303
        %802 = vmatpush.msra.mxu0 %v300
        %803 = vmatpush.msra.mxu0 %v297
        %804 = vmatpush.msra.mxu0 %v294
        %805 = vmatpush.msra.mxu0 %v291
        %806 = vmatpush.msra.mxu0 %v288
        %807 = vmatpush.msra.mxu0 %v285
        %808 = vmatpush.msra.mxu0 %v282
        %809 = vmatpush.msra.mxu0 %v279
        %810 = vmatmul.f32.gmra.mxu0 %v790
        %v811 = vpop.f32.mrf.mxu0
        %v812 = vadd.f32 0.0, %v811
        %813 = vdwg.mxu0
        %814 = vmatpush.msra.mxu0 %v325
        %815 = vmatpush.msra.mxu0 %v322
        %816 = vmatpush.msra.mxu0 %v319
        %817 = vmatpush.msra.mxu0 %v316
        %818 = vmatpush.msra.mxu0 %v313
        %819 = vmatpush.msra.mxu0 %v310
        %820 = vmatpush.msra.mxu0 %v307
        %821 = vmatpush.msra.mxu0 %v304
        %822 = vmatpush.msra.mxu0 %v301
        %823 = vmatpush.msra.mxu0 %v298
        %824 = vmatpush.msra.mxu0 %v295
        %825 = vmatpush.msra.mxu0 %v292
        %826 = vmatpush.msra.mxu0 %v289
        %827 = vmatpush.msra.mxu0 %v286
        %828 = vmatpush.msra.mxu0 %v283
        %829 = vmatpush.msra.mxu0 %v280
        %830 = vmatmul.f32.gmra.mxu0 %v790
        %v831 = vpop.f32.mrf.mxu0
        %v832 = vadd.f32 0.0, %v831
        %833 = vdwg.mxu0
        %834 = vmatpush.msra.mxu0 %v326
        %835 = vmatpush.msra.mxu0 %v323
        %836 = vmatpush.msra.mxu0 %v320
        %837 = vmatpush.msra.mxu0 %v317
        %838 = vmatpush.msra.mxu0 %v314
        %839 = vmatpush.msra.mxu0 %v311
        %840 = vmatpush.msra.mxu0 %v308
        %841 = vmatpush.msra.mxu0 %v305
        %842 = vmatpush.msra.mxu0 %v302
        %843 = vmatpush.msra.mxu0 %v299
        %844 = vmatpush.msra.mxu0 %v296
        %845 = vmatpush.msra.mxu0 %v293
        %846 = vmatpush.msra.mxu0 %v290
        %847 = vmatpush.msra.mxu0 %v287
        %848 = vmatpush.msra.mxu0 %v284
        %849 = vmatpush.msra.mxu0 %v281
        %850 = vmatmul.f32.gmra.mxu0 %v790
        %v851 = vpop.f32.mrf.mxu0
        %v852 = vadd.f32 0.0, %v851
        %853 = vdwg.mxu0
        %v854 = vadd.f32 %v793, %v812
        %v855 = vxor.u32 %v854, 2147483648
        %v856 = vmul.f32 %v855, 1.442695
        %v857 = vpow.pop %v856
        %v858 = vadd.f32 %v857, 1.0
        %v859 = vrcp.pop %v858
        %v860 = vmul.f32 %v858, %v859
        %v861 = vsub.f32 1.0, %v860
        %v862 = vmul.f32 %v859, %v861
        %v863 = vadd.f32 %v859, %v862
        %vm864 = vweird.f32 %v858
        %vm865 = vweird.f32 %v859
        %vm866 = vmor %vm864, %vm865
        %v867 = vsel %vm866, %v859, %v863
        %v868 = vand.u32 2147483647, %v858
        %vm869 = vcmp.eq.f32.partialorder %v868, 8.507059e+37
        %v870 = vand.u32 %v858, 2147483648
        %v871 = vor.u32 1.1754944e-38, %v870
        %v872 = vsel %vm869, %v871, %v867
        %v873 = vmul.f32 1.0, %v872
        %v875 = vrot.slane %v793, 1
        %v877 = vadd.f32 %v875, %v832
        %v878 = vxor.u32 %v877, 2147483648
        %v879 = vmul.f32 %v878, 1.442695
        %v880 = vpow.pop %v879
        %v881 = vadd.f32 %v880, 1.0
        %v882 = vrcp.pop %v881
        %v883 = vmul.f32 %v881, %v882
        %v884 = vsub.f32 1.0, %v883
        %v885 = vmul.f32 %v882, %v884
        %v886 = vadd.f32 %v882, %v885
        %vm887 = vweird.f32 %v881
        %vm888 = vweird.f32 %v882
        %vm889 = vmor %vm887, %vm888
        %v890 = vsel %vm889, %v882, %v886
        %v891 = vand.u32 2147483647, %v881
        %vm892 = vcmp.eq.f32.partialorder %v891, 8.507059e+37
        %v893 = vand.u32 %v881, 2147483648
        %v894 = vor.u32 1.1754944e-38, %v893
        %v895 = vsel %vm892, %v894, %v890
        %v896 = vmul.f32 1.0, %v895
        %v897 = vadd.f32 %v852, %v327
        %v898 = vmul.f32 %v873, %v897
        %v899 = vrot.slane %v793, 2
        %v901 = vadd.f32 %v899, %v898
        %v902 = vtanh.pop %v901
        %v903 = vsub.f32 1.0, %v896
        %v904 = vmul.f32 %v903, %v902
        %v905 = vmul.f32 %v896, %v790
        %v906 = vadd.f32 %v904, %v905
        %907 = vst [vmem:[%s270 + $0x4] sm:$0x1] %v906
        %s908 = scalar_lea.vmem %s235, 5 [#allocation2]
        %v909 = vld [vmem:[%s908] ss:$8 sm:$0x7]
        %910 = vmatpush.msra.mxu0 %v324
        %911 = vmatpush.msra.mxu0 %v321
        %912 = vmatpush.msra.mxu0 %v318
        %913 = vmatpush.msra.mxu0 %v315
        %914 = vmatpush.msra.mxu0 %v312
        %915 = vmatpush.msra.mxu0 %v309
        %916 = vmatpush.msra.mxu0 %v306
        %917 = vmatpush.msra.mxu0 %v303
        %918 = vmatpush.msra.mxu0 %v300
        %919 = vmatpush.msra.mxu0 %v297
        %920 = vmatpush.msra.mxu0 %v294
        %921 = vmatpush.msra.mxu0 %v291
        %922 = vmatpush.msra.mxu0 %v288
        %923 = vmatpush.msra.mxu0 %v285
        %924 = vmatpush.msra.mxu0 %v282
        %925 = vmatpush.msra.mxu0 %v279
        %926 = vmatmul.f32.gmra.mxu0 %v906
        %v927 = vpop.f32.mrf.mxu0
        %v928 = vadd.f32 0.0, %v927
        %929 = vdwg.mxu0
        %930 = vmatpush.msra.mxu0 %v325
        %931 = vmatpush.msra.mxu0 %v322
        %932 = vmatpush.msra.mxu0 %v319
        %933 = vmatpush.msra.mxu0 %v316
        %934 = vmatpush.msra.mxu0 %v313
        %935 = vmatpush.msra.mxu0 %v310
        %936 = vmatpush.msra.mxu0 %v307
        %937 = vmatpush.msra.mxu0 %v304
        %938 = vmatpush.msra.mxu0 %v301
        %939 = vmatpush.msra.mxu0 %v298
        %940 = vmatpush.msra.mxu0 %v295
        %941 = vmatpush.msra.mxu0 %v292
        %942 = vmatpush.msra.mxu0 %v289
        %943 = vmatpush.msra.mxu0 %v286
        %944 = vmatpush.msra.mxu0 %v283
        %945 = vmatpush.msra.mxu0 %v280
        %946 = vmatmul.f32.gmra.mxu0 %v906
        %v947 = vpop.f32.mrf.mxu0
        %v948 = vadd.f32 0.0, %v947
        %949 = vdwg.mxu0
        %950 = vmatpush.msra.mxu0 %v326
        %951 = vmatpush.msra.mxu0 %v323
        %952 = vmatpush.msra.mxu0 %v320
        %953 = vmatpush.msra.mxu0 %v317
        %954 = vmatpush.msra.mxu0 %v314
        %955 = vmatpush.msra.mxu0 %v311
        %956 = vmatpush.msra.mxu0 %v308
        %957 = vmatpush.msra.mxu0 %v305
        %958 = vmatpush.msra.mxu0 %v302
        %959 = vmatpush.msra.mxu0 %v299
        %960 = vmatpush.msra.mxu0 %v296
        %961 = vmatpush.msra.mxu0 %v293
        %962 = vmatpush.msra.mxu0 %v290
        %963 = vmatpush.msra.mxu0 %v287
        %964 = vmatpush.msra.mxu0 %v284
        %965 = vmatpush.msra.mxu0 %v281
        %966 = vmatmul.f32.gmra.mxu0 %v906
        %v967 = vpop.f32.mrf.mxu0
        %v968 = vadd.f32 0.0, %v967
        %969 = vdwg.mxu0
        %v970 = vadd.f32 %v909, %v928
        %v971 = vxor.u32 %v970, 2147483648
        %v972 = vmul.f32 %v971, 1.442695
        %v973 = vpow.pop %v972
        %v974 = vadd.f32 %v973, 1.0
        %v975 = vrcp.pop %v974
        %v976 = vmul.f32 %v974, %v975
        %v977 = vsub.f32 1.0, %v976
        %v978 = vmul.f32 %v975, %v977
        %v979 = vadd.f32 %v975, %v978
        %vm980 = vweird.f32 %v974
        %vm981 = vweird.f32 %v975
        %vm982 = vmor %vm980, %vm981
        %v983 = vsel %vm982, %v975, %v979
        %v984 = vand.u32 2147483647, %v974
        %vm985 = vcmp.eq.f32.partialorder %v984, 8.507059e+37
        %v986 = vand.u32 %v974, 2147483648
        %v987 = vor.u32 1.1754944e-38, %v986
        %v988 = vsel %vm985, %v987, %v983
        %v989 = vmul.f32 1.0, %v988
        %v991 = vrot.slane %v909, 1
        %v993 = vadd.f32 %v991, %v948
        %v994 = vxor.u32 %v993, 2147483648
        %v995 = vmul.f32 %v994, 1.442695
        %v996 = vpow.pop %v995
        %v997 = vadd.f32 %v996, 1.0
        %v998 = vrcp.pop %v997
        %v999 = vmul.f32 %v997, %v998
        %v1000 = vsub.f32 1.0, %v999
        %v1001 = vmul.f32 %v998, %v1000
        %v1002 = vadd.f32 %v998, %v1001
        %vm1003 = vweird.f32 %v997
        %vm1004 = vweird.f32 %v998
        %vm1005 = vmor %vm1003, %vm1004
        %v1006 = vsel %vm1005, %v998, %v1002
        %v1007 = vand.u32 2147483647, %v997
        %vm1008 = vcmp.eq.f32.partialorder %v1007, 8.507059e+37
        %v1009 = vand.u32 %v997, 2147483648
        %v1010 = vor.u32 1.1754944e-38, %v1009
        %v1011 = vsel %vm1008, %v1010, %v1006
        %v1012 = vmul.f32 1.0, %v1011
        %v1013 = vadd.f32 %v968, %v327
        %v1014 = vmul.f32 %v989, %v1013
        %v1015 = vrot.slane %v909, 2
        %v1017 = vadd.f32 %v1015, %v1014
        %v1018 = vtanh.pop %v1017
        %v1019 = vsub.f32 1.0, %v1012
        %v1020 = vmul.f32 %v1019, %v1018
        %v1021 = vmul.f32 %v1012, %v906
        %v1022 = vadd.f32 %v1020, %v1021
        %1023 = vst [vmem:[%s270 + $0x5] sm:$0x1] %v1022
        %s1024 = scalar_lea.vmem %s235, 6 [#allocation2]
        %v1025 = vld [vmem:[%s1024] ss:$8 sm:$0x7]
        %1026 = vmatpush.msra.mxu0 %v324
        %1027 = vmatpush.msra.mxu0 %v321
        %1028 = vmatpush.msra.mxu0 %v318
        %1029 = vmatpush.msra.mxu0 %v315
        %1030 = vmatpush.msra.mxu0 %v312
        %1031 = vmatpush.msra.mxu0 %v309
        %1032 = vmatpush.msra.mxu0 %v306
        %1033 = vmatpush.msra.mxu0 %v303
        %1034 = vmatpush.msra.mxu0 %v300
        %1035 = vmatpush.msra.mxu0 %v297
        %1036 = vmatpush.msra.mxu0 %v294
        %1037 = vmatpush.msra.mxu0 %v291
        %1038 = vmatpush.msra.mxu0 %v288
        %1039 = vmatpush.msra.mxu0 %v285
        %1040 = vmatpush.msra.mxu0 %v282
        %1041 = vmatpush.msra.mxu0 %v279
        %1042 = vmatmul.f32.gmra.mxu0 %v1022
        %v1043 = vpop.f32.mrf.mxu0
        %v1044 = vadd.f32 0.0, %v1043
        %1045 = vdwg.mxu0
        %1046 = vmatpush.msra.mxu0 %v325
        %1047 = vmatpush.msra.mxu0 %v322
        %1048 = vmatpush.msra.mxu0 %v319
        %1049 = vmatpush.msra.mxu0 %v316
        %1050 = vmatpush.msra.mxu0 %v313
        %1051 = vmatpush.msra.mxu0 %v310
        %1052 = vmatpush.msra.mxu0 %v307
        %1053 = vmatpush.msra.mxu0 %v304
        %1054 = vmatpush.msra.mxu0 %v301
        %1055 = vmatpush.msra.mxu0 %v298
        %1056 = vmatpush.msra.mxu0 %v295
        %1057 = vmatpush.msra.mxu0 %v292
        %1058 = vmatpush.msra.mxu0 %v289
        %1059 = vmatpush.msra.mxu0 %v286
        %1060 = vmatpush.msra.mxu0 %v283
        %1061 = vmatpush.msra.mxu0 %v280
        %1062 = vmatmul.f32.gmra.mxu0 %v1022
        %v1063 = vpop.f32.mrf.mxu0
        %v1064 = vadd.f32 0.0, %v1063
        %1065 = vdwg.mxu0
        %1066 = vmatpush.msra.mxu0 %v326
        %1067 = vmatpush.msra.mxu0 %v323
        %1068 = vmatpush.msra.mxu0 %v320
        %1069 = vmatpush.msra.mxu0 %v317
        %1070 = vmatpush.msra.mxu0 %v314
        %1071 = vmatpush.msra.mxu0 %v311
        %1072 = vmatpush.msra.mxu0 %v308
        %1073 = vmatpush.msra.mxu0 %v305
        %1074 = vmatpush.msra.mxu0 %v302
        %1075 = vmatpush.msra.mxu0 %v299
        %1076 = vmatpush.msra.mxu0 %v296
        %1077 = vmatpush.msra.mxu0 %v293
        %1078 = vmatpush.msra.mxu0 %v290
        %1079 = vmatpush.msra.mxu0 %v287
        %1080 = vmatpush.msra.mxu0 %v284
        %1081 = vmatpush.msra.mxu0 %v281
        %1082 = vmatmul.f32.gmra.mxu0 %v1022
        %v1083 = vpop.f32.mrf.mxu0
        %v1084 = vadd.f32 0.0, %v1083
        %1085 = vdwg.mxu0
        %v1086 = vadd.f32 %v1025, %v1044
        %v1087 = vxor.u32 %v1086, 2147483648
        %v1088 = vmul.f32 %v1087, 1.442695
        %v1089 = vpow.pop %v1088
        %v1090 = vadd.f32 %v1089, 1.0
        %v1091 = vrcp.pop %v1090
        %v1092 = vmul.f32 %v1090, %v1091
        %v1093 = vsub.f32 1.0, %v1092
        %v1094 = vmul.f32 %v1091, %v1093
        %v1095 = vadd.f32 %v1091, %v1094
        %vm1096 = vweird.f32 %v1090
        %vm1097 = vweird.f32 %v1091
        %vm1098 = vmor %vm1096, %vm1097
        %v1099 = vsel %vm1098, %v1091, %v1095
        %v1100 = vand.u32 2147483647, %v1090
        %vm1101 = vcmp.eq.f32.partialorder %v1100, 8.507059e+37
        %v1102 = vand.u32 %v1090, 2147483648
        %v1103 = vor.u32 1.1754944e-38, %v1102
        %v1104 = vsel %vm1101, %v1103, %v1099
        %v1105 = vmul.f32 1.0, %v1104
        %v1107 = vrot.slane %v1025, 1
        %v1109 = vadd.f32 %v1107, %v1064
        %v1110 = vxor.u32 %v1109, 2147483648
        %v1111 = vmul.f32 %v1110, 1.442695
        %v1112 = vpow.pop %v1111
        %v1113 = vadd.f32 %v1112, 1.0
        %v1114 = vrcp.pop %v1113
        %v1115 = vmul.f32 %v1113, %v1114
        %v1116 = vsub.f32 1.0, %v1115
        %v1117 = vmul.f32 %v1114, %v1116
        %v1118 = vadd.f32 %v1114, %v1117
        %vm1119 = vweird.f32 %v1113
        %vm1120 = vweird.f32 %v1114
        %vm1121 = vmor %vm1119, %vm1120
        %v1122 = vsel %vm1121, %v1114, %v1118
        %v1123 = vand.u32 2147483647, %v1113
        %vm1124 = vcmp.eq.f32.partialorder %v1123, 8.507059e+37
        %v1125 = vand.u32 %v1113, 2147483648
        %v1126 = vor.u32 1.1754944e-38, %v1125
        %v1127 = vsel %vm1124, %v1126, %v1122
        %v1128 = vmul.f32 1.0, %v1127
        %v1129 = vadd.f32 %v1084, %v327
        %v1130 = vmul.f32 %v1105, %v1129
        %v1131 = vrot.slane %v1025, 2
        %v1133 = vadd.f32 %v1131, %v1130
        %v1134 = vtanh.pop %v1133
        %v1135 = vsub.f32 1.0, %v1128
        %v1136 = vmul.f32 %v1135, %v1134
        %v1137 = vmul.f32 %v1128, %v1022
        %v1138 = vadd.f32 %v1136, %v1137
        %1139 = vst [vmem:[%s270 + $0x6] sm:$0x1] %v1138
        %s1140 = scalar_lea.vmem %s235, 7 [#allocation2]
        %v1141 = vld [vmem:[%s1140] ss:$8 sm:$0x7]
        %1142 = vmatpush.msra.mxu0 %v324
        %1143 = vmatpush.msra.mxu0 %v321
        %1144 = vmatpush.msra.mxu0 %v318
        %1145 = vmatpush.msra.mxu0 %v315
        %1146 = vmatpush.msra.mxu0 %v312
        %1147 = vmatpush.msra.mxu0 %v309
        %1148 = vmatpush.msra.mxu0 %v306
        %1149 = vmatpush.msra.mxu0 %v303
        %1150 = vmatpush.msra.mxu0 %v300
        %1151 = vmatpush.msra.mxu0 %v297
        %1152 = vmatpush.msra.mxu0 %v294
        %1153 = vmatpush.msra.mxu0 %v291
        %1154 = vmatpush.msra.mxu0 %v288
        %1155 = vmatpush.msra.mxu0 %v285
        %1156 = vmatpush.msra.mxu0 %v282
        %1157 = vmatpush.msra.mxu0 %v279
        %1158 = vmatmul.f32.gmra.mxu0 %v1138
        %v1159 = vpop.f32.mrf.mxu0
        %v1160 = vadd.f32 0.0, %v1159
        %1161 = vdwg.mxu0
        %1162 = vmatpush.msra.mxu0 %v325
        %1163 = vmatpush.msra.mxu0 %v322
        %1164 = vmatpush.msra.mxu0 %v319
        %1165 = vmatpush.msra.mxu0 %v316
        %1166 = vmatpush.msra.mxu0 %v313
        %1167 = vmatpush.msra.mxu0 %v310
        %1168 = vmatpush.msra.mxu0 %v307
        %1169 = vmatpush.msra.mxu0 %v304
        %1170 = vmatpush.msra.mxu0 %v301
        %1171 = vmatpush.msra.mxu0 %v298
        %1172 = vmatpush.msra.mxu0 %v295
        %1173 = vmatpush.msra.mxu0 %v292
        %1174 = vmatpush.msra.mxu0 %v289
        %1175 = vmatpush.msra.mxu0 %v286
        %1176 = vmatpush.msra.mxu0 %v283
        %1177 = vmatpush.msra.mxu0 %v280
        %1178 = vmatmul.f32.gmra.mxu0 %v1138
        %v1179 = vpop.f32.mrf.mxu0
        %v1180 = vadd.f32 0.0, %v1179
        %1181 = vdwg.mxu0
        %1182 = vmatpush.msra.mxu0 %v326
        %1183 = vmatpush.msra.mxu0 %v323
        %1184 = vmatpush.msra.mxu0 %v320
        %1185 = vmatpush.msra.mxu0 %v317
        %1186 = vmatpush.msra.mxu0 %v314
        %1187 = vmatpush.msra.mxu0 %v311
        %1188 = vmatpush.msra.mxu0 %v308
        %1189 = vmatpush.msra.mxu0 %v305
        %1190 = vmatpush.msra.mxu0 %v302
        %1191 = vmatpush.msra.mxu0 %v299
        %1192 = vmatpush.msra.mxu0 %v296
        %1193 = vmatpush.msra.mxu0 %v293
        %1194 = vmatpush.msra.mxu0 %v290
        %1195 = vmatpush.msra.mxu0 %v287
        %1196 = vmatpush.msra.mxu0 %v284
        %1197 = vmatpush.msra.mxu0 %v281
        %1198 = vmatmul.f32.gmra.mxu0 %v1138
        %v1199 = vpop.f32.mrf.mxu0
        %v1200 = vadd.f32 0.0, %v1199
        %1201 = vdwg.mxu0
        %v1202 = vadd.f32 %v1141, %v1160
        %v1203 = vxor.u32 %v1202, 2147483648
        %v1204 = vmul.f32 %v1203, 1.442695
        %v1205 = vpow.pop %v1204
        %v1206 = vadd.f32 %v1205, 1.0
        %v1207 = vrcp.pop %v1206
        %v1208 = vmul.f32 %v1206, %v1207
        %v1209 = vsub.f32 1.0, %v1208
        %v1210 = vmul.f32 %v1207, %v1209
        %v1211 = vadd.f32 %v1207, %v1210
        %vm1212 = vweird.f32 %v1206
        %vm1213 = vweird.f32 %v1207
        %vm1214 = vmor %vm1212, %vm1213
        %v1215 = vsel %vm1214, %v1207, %v1211
        %v1216 = vand.u32 2147483647, %v1206
        %vm1217 = vcmp.eq.f32.partialorder %v1216, 8.507059e+37
        %v1218 = vand.u32 %v1206, 2147483648
        %v1219 = vor.u32 1.1754944e-38, %v1218
        %v1220 = vsel %vm1217, %v1219, %v1215
        %v1221 = vmul.f32 1.0, %v1220
        %v1223 = vrot.slane %v1141, 1
        %v1225 = vadd.f32 %v1223, %v1180
        %v1226 = vxor.u32 %v1225, 2147483648
        %v1227 = vmul.f32 %v1226, 1.442695
        %v1228 = vpow.pop %v1227
        %v1229 = vadd.f32 %v1228, 1.0
        %v1230 = vrcp.pop %v1229
        %v1231 = vmul.f32 %v1229, %v1230
        %v1232 = vsub.f32 1.0, %v1231
        %v1233 = vmul.f32 %v1230, %v1232
        %v1234 = vadd.f32 %v1230, %v1233
        %vm1235 = vweird.f32 %v1229
        %vm1236 = vweird.f32 %v1230
        %vm1237 = vmor %vm1235, %vm1236
        %v1238 = vsel %vm1237, %v1230, %v1234
        %v1239 = vand.u32 2147483647, %v1229
        %vm1240 = vcmp.eq.f32.partialorder %v1239, 8.507059e+37
        %v1241 = vand.u32 %v1229, 2147483648
        %v1242 = vor.u32 1.1754944e-38, %v1241
        %v1243 = vsel %vm1240, %v1242, %v1238
        %v1244 = vmul.f32 1.0, %v1243
        %v1245 = vadd.f32 %v1200, %v327
        %v1246 = vmul.f32 %v1221, %v1245
        %v1247 = vrot.slane %v1141, 2
        %v1249 = vadd.f32 %v1247, %v1246
        %v1250 = vtanh.pop %v1249
        %v1251 = vsub.f32 1.0, %v1244
        %v1252 = vmul.f32 %v1251, %v1250
        %v1253 = vmul.f32 %v1244, %v1138
        %v1254 = vadd.f32 %v1252, %v1253
        %1255 = vst [vmem:[%s270 + $0x7] sm:$0x1] %v1254
        %1256 = vst [vmem:[#allocation9] sm:$0x1] %v1254
        %s1257 = sand.u32 %s122, 1
        %s1258 = scalar_lea.sflag [#allocation4], %s1257
        %s1259 = sand.u32 %s122, 1
        %s1260 = smul.addr %s1259, 8
        %s1261 = scalar_lea.vmem [#allocation8], %s1260
        // Predicated region
        $region53: #{tpu_custom_call.1} parent=35 // pred_check
          %p1262 = pneg %p132
        $region54: #{tpu_custom_call.1} parent=35 // pred_check_branch
          %1264 = sbr.rel (%p1262) target = $region56
        $region55: #{tpu_custom_call.1} parent=35 // pred_region
          %1266 = vsyncadd %s1258, 0
          %s1267 = smul.addr %s25, 8
          %s1268 = scalar_lea.hbm %s4, %s1267
          %s1270 = sshll.u32 %s1261, 4
          %s1271 = int_to_ptr.vmem [resolvable:$true] %s1270
          %s1272 = sshll.u32 %s1268, 4
          %s1273 = int_to_ptr.hbm [resolvable:$true] %s1272
          %1275 = dma.vmem_to_hbm [thread:$0]  %s1271, 128, %s1273, %s1258
        $region56: #{tpu_custom_call.1} parent=35 // pred_fallthru
          _
        // Predicated region
        $region57: #{tpu_custom_call.1} parent=35 // pred_check
          %p1276 = pneg %p153
        $region58: #{tpu_custom_call.1} parent=35 // pred_check_branch
          %1278 = sbr.rel (%p1276) target = $region60
        $region59: #{tpu_custom_call.1} parent=35 // pred_region
          %1280 = vsyncadd [#allocation10], 0
          %s1282 = sshll.u32 [#allocation9], 4
          %s1283 = int_to_ptr.vmem [resolvable:$true] %s1282
          %s1284 = sshll.u32 %s5, 4
          %s1285 = int_to_ptr.hbm [resolvable:$true] %s1284
          %1287 = dma.vmem_to_hbm [thread:$0]  %s1283, 16, %s1285, [#allocation10]
        $region60: #{tpu_custom_call.1} parent=35 // pred_fallthru
          _
        // Predicated region
        $region61: #{tpu_custom_call.1} parent=35 // pred_check
          %p1288 = pneg %p153
        $region62: #{tpu_custom_call.1} parent=35 // pred_check_branch
          %1290 = sbr.rel (%p1288) target = $region64
        $region63: #{tpu_custom_call.1} parent=35 // pred_region
          %1292 = dma.done [#allocation10], 16
        $region64: #{tpu_custom_call.1} parent=35 // pred_fallthru
          _
      $region36: #{tpu_custom_call.1} parent=5 // pred_fallthru
        _
      %p1293 = scmp.le.s32.totalorder 2, %s20
      // Predicated region
      $region65: #{tpu_custom_call.1} parent=5 // pred_check
        %p1294 = pneg %p1293
      $region66: #{tpu_custom_call.1} parent=5 // pred_check_branch
        %1296 = sbr.rel (%p1294) target = $region68
      $region67: #{tpu_custom_call.1} parent=5 // pred_region
        %s1297 = ssub.s32 %s20, 2
        // Predicated region
        $region69: #{tpu_custom_call.1} parent=67 // pred_check
          %p1298 = pneg %p138
        $region70: #{tpu_custom_call.1} parent=67 // pred_check_branch
          %1300 = sbr.rel (%p1298) target = $region72
        $region71: #{tpu_custom_call.1} parent=67 // pred_region
          %s1301 = sand.u32 %s123, 1
          %s1302 = scalar_lea.sflag [#allocation4], %s1301
          %s1303 = sand.u32 %s123, 1
          %s1304 = smul.addr %s1303, 8
          %s1305 = scalar_lea.vmem [#allocation8], %s1304
          %1307 = dma.done %s1302, 128
        $region72: #{tpu_custom_call.1} parent=67 // pred_fallthru
          _
      $region68: #{tpu_custom_call.1} parent=5 // pred_fallthru
        _
    $region6: #{tpu_custom_call.1} parent=1 // loop_footer
      %s24 = sadd.s32 1, %s20
    $region7: #{tpu_custom_call.1} parent=1 // loop_footer_branch
      %19 = sbr.rel target = $region3
    $region8: #{tpu_custom_call.1} parent=1 // loop_exit
      _
    %1308 = vsyncpa [#allocation3], 1
    %s1309 = scalar_lea.sflag [#allocation3], 1
    %1310 = vsyncpa %s1309, 1
    %1311 = vsyncpa [#allocation6], 1
    %1312 = vsyncpa [#allocation4], 1
    %s1313 = scalar_lea.sflag [#allocation4], 1
    %1314 = vsyncpa %s1313, 1
    %1315 = vsyncpa [#allocation10], 1

</llo_original>
